<compile_context>
chip_gen: v6e
topology: v6e:2x2x1
jax: 0.10.0
libtpu: 0.0.40
codegen_flags: <defaults>
</compile_context>

<pallas_src>
import functools
import math

import jax
import jax.numpy as jnp
from jax.experimental import pallas as pl
from jax.experimental.pallas import tpu as pltpu


def _layernorm(y, gamma, beta, eps):
    y = y.astype(jnp.float32)
    mu = jnp.mean(y, axis=-1, keepdims=True)
    var = jnp.mean(jnp.square(y - mu), axis=-1, keepdims=True)
    return gamma * (y - mu) * jax.lax.rsqrt(var + eps) + beta


def encoder_block_kernel(
    x_ref,
    wq_ref, bq_ref, wkv_ref, bkv_ref, wo_ref, bo_ref,
    g1_ref, be1_ref,
    w1_ref, b1_ref, w2_ref, b2_ref,
    g2_ref, be2_ref,
    o_ref,
    *, n_heads, d_feature, block_q, num_q_tiles, eps,
):
    f32 = jnp.float32
    cdt = wq_ref.dtype                       # compute dtype (weights pre-cast host-side)
    H, F = n_heads, d_feature
    HF = H * F
    tq = block_q

    # ---- full-sequence activations for this batch element (single resident block) ----
    x_full = x_ref[0]                        # (S, D), original dtype
    x_c = x_full.astype(cdt)

    # ---- fused packed K/V projection over the full sequence: (S, D) @ (D, 2*HF) ----
    kv = jnp.dot(x_c, wkv_ref[...], preferred_element_type=f32) + bkv_ref[...]
    kv = kv.astype(cdt)                      # (S, 2*HF)

    # ---- query tile (residual path kept in f32); scale folded into wq/bq host-side ----
    if num_q_tiles == 1:
        xq = x_full                          # (tq == S)
    else:
        q_start = pl.program_id(1) * tq
        xq = jax.lax.dynamic_slice_in_dim(x_full, q_start, tq, axis=0)
    xq_f32 = xq.astype(f32)
    q_full = jnp.dot(xq.astype(cdt), wq_ref[...], preferred_element_type=f32) + bq_ref[...]
    q_full = q_full.astype(cdt)              # (tq, HF)

    # ---- per-head attention: static 128-aligned lane slices, exact softmax in f32 ----
    ctx_parts = []
    for h in range(H):
        qh = q_full[:, h * F:(h + 1) * F]                     # (tq, F)
        kh = kv[:, h * F:(h + 1) * F]                         # (S, F)
        vh = kv[:, HF + h * F:HF + (h + 1) * F]               # (S, F)
        s = jnp.einsum("qf,kf->qk", qh, kh,
                       preferred_element_type=f32)            # (tq, S)
        m = jnp.max(s, axis=-1, keepdims=True)
        p = jnp.exp(s - m)
        p = p / jnp.sum(p, axis=-1, keepdims=True)
        ctx_parts.append(jnp.dot(p.astype(cdt), vh,
                                 preferred_element_type=f32)) # (tq, F)
    ctx = jnp.concatenate(ctx_parts, axis=-1).astype(cdt)     # (tq, HF), lane-aligned concat

    # ---- output projection: single HF-deep contraction (head sum inside the MXU) ----
    attn = jnp.dot(ctx, wo_ref[...], preferred_element_type=f32) + bo_ref[...]   # (tq, D)

    # ---- residual 1: x + LayerNorm1(attn) ----
    x1 = xq_f32 + _layernorm(attn, g1_ref[...], be1_ref[...], eps)

    # ---- position-wise feed-forward ----
    h1 = jnp.dot(x1.astype(cdt), w1_ref[...], preferred_element_type=f32) + b1_ref[...]
    h1 = jnp.maximum(h1, 0.0)
    pos = jnp.dot(h1.astype(cdt), w2_ref[...], preferred_element_type=f32) + b2_ref[...]

    # ---- residual 2: x1 + LayerNorm2(pos) ----
    out = x1 + _layernorm(pos, g2_ref[...], be2_ref[...], eps)
    o_ref[0] = out.astype(o_ref.dtype)


def encoder_block(x, params, *, n_heads, d_feature, block_q=256,
                  compute_dtype=jnp.bfloat16, eps=1e-6,
                  vmem_limit_bytes=64 * 1024 * 1024):
    # NOTE(perf): vmem_limit_bytes can be raised toward ~96-112 MiB on v5e/v6e for bigger tiles;
    # keep it <= ~56 MiB on v7x (64 MiB physical VMEM).
    B, S, D = x.shape
    H, F = n_heads, d_feature
    HF = H * F
    d_ff = params["w1"].shape[1]

    tq = min(block_q, S)
    assert S % tq == 0, "sequence length must be divisible by the query tile"
    n_q = S // tq

    f32 = jnp.float32
    cdt = compute_dtype
    scale = 1.0 / math.sqrt(F)

    # Host-side weight packing: fold the softmax scale into Q, fuse K/V into one matmul,
    # pre-cast all matmul weights to the compute dtype (biases / LN params stay f32).
    wq_s = (params["wq"] * scale).astype(cdt)                               # (D, HF)
    bq_s = (params["bq"] * scale).astype(f32)                               # (1, HF)
    wkv_s = jnp.concatenate([params["wk"], params["wv"]], axis=1).astype(cdt)   # (D, 2*HF)
    bkv_s = jnp.concatenate([params["bk"], params["bv"]], axis=1).astype(f32)   # (1, 2*HF)
    wo_s = params["wo"].astype(cdt)                                         # (HF, D)
    bo_s = params["bo"].astype(f32)
    w1_s = params["w1"].astype(cdt)
    b1_s = params["b1"].astype(f32)
    w2_s = params["w2"].astype(cdt)
    b2_s = params["b2"].astype(f32)

    weights = (
        wq_s, bq_s, wkv_s, bkv_s, wo_s, bo_s,
        params["g1"].astype(f32), params["be1"].astype(f32),
        w1_s, b1_s, w2_s, b2_s,
        params["g2"].astype(f32), params["be2"].astype(f32),
    )

    def const_spec(shape):
        zeros = (0,) * len(shape)
        return pl.BlockSpec(shape, lambda b, qi, _z=zeros: _z)

    in_specs = [
        pl.BlockSpec((1, S, D), lambda b, qi: (b, 0, 0)),     # x: full sequence per batch elem
    ] + [const_spec(w.shape) for w in weights]

    kernel = functools.partial(
        encoder_block_kernel,
        n_heads=H, d_feature=F, block_q=tq, num_q_tiles=n_q, eps=eps,
    )

    flops = 2 * B * S * (3 * D * HF + 2 * S * HF + HF * D + 2 * D * d_ff)
    bytes_accessed = (8 * B * S * D                                   # x in + out (f32)
                      + 2 * (3 * D * HF + HF * D + 2 * D * d_ff)      # bf16 weights
                      + 4 * (3 * HF + d_ff + 6 * D))                  # f32 biases + LN params
    cost = pl.CostEstimate(flops=int(flops), transcendentals=int(B * H * S * S),
                           bytes_accessed=int(bytes_accessed))

    return pl.pallas_call(
        kernel,
        out_shape=jax.ShapeDtypeStruct((B, S, D), x.dtype),
        grid_spec=pltpu.PrefetchScalarGridSpec(
            num_scalar_prefetch=0,
            grid=(B, n_q),
            in_specs=in_specs,
            out_specs=pl.BlockSpec((1, tq, D), lambda b, qi: (b, qi, 0)),
        ),
        compiler_params=pltpu.CompilerParams(
            # No cross-step state -> both axes are safely parallel (uses both TCs on v7x
            # even when B == 1).
            dimension_semantics=("parallel", "parallel"),
            vmem_limit_bytes=vmem_limit_bytes,
        ),
        cost_estimate=cost,
    )(x, *weights)


def init_params(key, d_model, d_feature, d_ff, n_heads):
    HF = n_heads * d_feature
    keys = jax.random.split(key, 12)

    def lin(k, fan_in, shape):
        bound = 1.0 / math.sqrt(fan_in)
        return jax.random.uniform(k, shape, jnp.float32, -bound, bound)

    return {
        # Q/K/V projections packed as (d_model, n_heads*d_feature)
        "wq": lin(keys[0], d_model, (d_model, HF)), "bq": lin(keys[1], d_model, (1, HF)),
        "wk": lin(keys[2], d_model, (d_model, HF)), "bk": lin(keys[3], d_model, (1, HF)),
        "wv": lin(keys[4], d_model, (d_model, HF)), "bv": lin(keys[5], d_model, (1, HF)),
        # output projection
        "wo": lin(keys[6], HF, (HF, d_model)), "bo": lin(keys[7], HF, (1, d_model)),
        # layer norms
        "g1": jnp.ones((1, d_model), jnp.float32), "be1": jnp.zeros((1, d_model), jnp.float32),
        "g2": jnp.ones((1, d_model), jnp.float32), "be2": jnp.zeros((1, d_model), jnp.float32),
        # feed-forward
        "w1": lin(keys[8], d_model, (d_model, d_ff)), "b1": lin(keys[9], d_model, (1, d_ff)),
        "w2": lin(keys[10], d_ff, (d_ff, d_model)), "b2": lin(keys[11], d_ff, (1, d_model)),
    }


def encoder_block_ref(x, p, *, n_heads, d_feature, compute_dtype=jnp.bfloat16, eps=1e-6):
    # Pure-JAX reference mirroring the kernel's bf16-operand / f32-accumulate casts
    # (including the host-side scale folding), exact softmax.
    cdt = compute_dtype
    f32 = jnp.float32
    B, S, D = x.shape
    H, F = n_heads, d_feature
    scale = 1.0 / math.sqrt(F)

    def mm(a, b):
        return jnp.dot(a.astype(cdt), b.astype(cdt), preferred_element_type=f32)

    q = mm(x, p["wq"] * scale) + p["bq"] * scale
    k = mm(x, p["wk"]) + p["bk"]
    v = mm(x, p["wv"]) + p["bv"]
    qh = q.reshape(B, S, H, F).transpose(0, 2, 1, 3).astype(cdt)
    kh = k.reshape(B, S, H, F).transpose(0, 2, 1, 3).astype(cdt)
    vh = v.reshape(B, S, H, F).transpose(0, 2, 1, 3).astype(cdt)
    s = jnp.einsum("bhqf,bhkf->bhqk", qh, kh, preferred_element_type=f32)
    pr = jax.nn.softmax(s, axis=-1).astype(cdt)
    ctx = jnp.einsum("bhqk,bhkf->bhqf", pr, vh, preferred_element_type=f32)
    ctx = ctx.transpose(0, 2, 1, 3).reshape(B, S, H * F)
    attn = mm(ctx, p["wo"]) + p["bo"]
    x1 = x.astype(f32) + _layernorm(attn, p["g1"], p["be1"], eps)
    h1 = jnp.maximum(mm(x1, p["w1"]) + p["b1"], 0.0)
    pos = mm(h1, p["w2"]) + p["b2"]
    return x1 + _layernorm(pos, p["g2"], p["be2"], eps)


if __name__ == "__main__":
    # small, 128-aligned shapes consistent with the module structure
    B, S = 2, 256
    d_model, d_feature, d_ff, n_heads = 128, 128, 256, 2

    key = jax.random.PRNGKey(0)
    kx, kp = jax.random.split(key)
    x = jax.random.normal(kx, (B, S, d_model), jnp.float32)
    params = init_params(kp, d_model, d_feature, d_ff, n_heads)

    ref = encoder_block_ref(x, params, n_heads=n_heads, d_feature=d_feature)
    ref = jax.block_until_ready(ref)

    # default path: block_q=256 -> single query tile per batch element
    out = encoder_block(x, params, n_heads=n_heads, d_feature=d_feature)
    out = jax.block_until_ready(out)
    assert out.shape == (B, S, d_model)
    assert jnp.allclose(out, ref, atol=2e-2, rtol=2e-2), "mismatch vs pure-JAX reference (block_q=256)"

    # tiled path: block_q=128 -> exercises the query-tile grid axis
    out_t = encoder_block(x, params, n_heads=n_heads, d_feature=d_feature, block_q=128)
    out_t = jax.block_until_ready(out_t)
    assert jnp.allclose(out_t, ref, atol=2e-2, rtol=2e-2), "mismatch vs pure-JAX reference (block_q=128)"

    print("KERNEL_OK")
</pallas_src>

<mosaic_0001>
module attributes {stable_mosaic.version = 11 : i64} {
  func.func @encoder_block_kernel(%arg0: i32, %arg1: i32, %arg2: memref<1x256x128xf32, #tpu.memory_space<vmem>>, %arg3: memref<128x256xbf16, #tpu.memory_space<vmem>>, %arg4: memref<1x256xf32, #tpu.memory_space<vmem>>, %arg5: memref<128x512xbf16, #tpu.memory_space<vmem>>, %arg6: memref<1x512xf32, #tpu.memory_space<vmem>>, %arg7: memref<256x128xbf16, #tpu.memory_space<vmem>>, %arg8: memref<1x128xf32, #tpu.memory_space<vmem>>, %arg9: memref<1x128xf32, #tpu.memory_space<vmem>>, %arg10: memref<1x128xf32, #tpu.memory_space<vmem>>, %arg11: memref<128x256xbf16, #tpu.memory_space<vmem>>, %arg12: memref<1x256xf32, #tpu.memory_space<vmem>>, %arg13: memref<256x128xbf16, #tpu.memory_space<vmem>>, %arg14: memref<1x128xf32, #tpu.memory_space<vmem>>, %arg15: memref<1x128xf32, #tpu.memory_space<vmem>>, %arg16: memref<1x128xf32, #tpu.memory_space<vmem>>, %arg17: memref<1x256x128xf32, #tpu.memory_space<vmem>>) attributes {dimension_semantics = [#tpu.dimension_semantics<parallel>, #tpu.dimension_semantics<parallel>], iteration_bounds = array<i64: 2, 1>, scalar_prefetch = 0 : i64, scratch_operands = 0 : i64, tpu.core_type = #tpu.core_type<tc>, window_params = [{transform_indices = @transform_0, window_bounds = array<i64: 1, 256, 128>}, {pipeline_mode = #tpu.pipeline_mode<synchronous>, transform_indices = @transform_1, window_bounds = array<i64: 128, 256>}, {pipeline_mode = #tpu.pipeline_mode<synchronous>, transform_indices = @transform_2, window_bounds = array<i64: 1, 256>}, {pipeline_mode = #tpu.pipeline_mode<synchronous>, transform_indices = @transform_3, window_bounds = array<i64: 128, 512>}, {pipeline_mode = #tpu.pipeline_mode<synchronous>, transform_indices = @transform_4, window_bounds = array<i64: 1, 512>}, {pipeline_mode = #tpu.pipeline_mode<synchronous>, transform_indices = @transform_5, window_bounds = array<i64: 256, 128>}, {pipeline_mode = #tpu.pipeline_mode<synchronous>, transform_indices = @transform_6, window_bounds = array<i64: 1, 128>}, {pipeline_mode = #tpu.pipeline_mode<synchronous>, transform_indices = @transform_7, window_bounds = array<i64: 1, 128>}, {pipeline_mode = #tpu.pipeline_mode<synchronous>, transform_indices = @transform_8, window_bounds = array<i64: 1, 128>}, {pipeline_mode = #tpu.pipeline_mode<synchronous>, transform_indices = @transform_9, window_bounds = array<i64: 128, 256>}, {pipeline_mode = #tpu.pipeline_mode<synchronous>, transform_indices = @transform_10, window_bounds = array<i64: 1, 256>}, {pipeline_mode = #tpu.pipeline_mode<synchronous>, transform_indices = @transform_11, window_bounds = array<i64: 256, 128>}, {pipeline_mode = #tpu.pipeline_mode<synchronous>, transform_indices = @transform_12, window_bounds = array<i64: 1, 128>}, {pipeline_mode = #tpu.pipeline_mode<synchronous>, transform_indices = @transform_13, window_bounds = array<i64: 1, 128>}, {pipeline_mode = #tpu.pipeline_mode<synchronous>, transform_indices = @transform_14, window_bounds = array<i64: 1, 128>}, {transform_indices = @transform_15, window_bounds = array<i64: 1, 256, 128>}]} {
    %c0 = arith.constant 0 : index
    %c0_0 = arith.constant 0 : index
    %c0_1 = arith.constant 0 : index
    %0 = vector.load %arg2[%c0, %c0_0, %c0_1] : memref<1x256x128xf32, #tpu.memory_space<vmem>>, vector<1x256x128xf32>
    %1 = vector.shape_cast %0 : vector<1x256x128xf32> to vector<256x128xf32>
    %2 = arith.truncf %1 : vector<256x128xf32> to vector<256x128xbf16>
    %c0_2 = arith.constant 0 : index
    %c0_3 = arith.constant 0 : index
    %3 = vector.load %arg5[%c0_2, %c0_3] : memref<128x512xbf16, #tpu.memory_space<vmem>>, vector<128x512xbf16>
    %cst = arith.constant dense<0.000000e+00> : vector<256x512xf32>
    %4 = tpu.matmul %2, %3, %cst {dimension_numbers = #tpu.dot_dimension_numbers<[1], [0], [0], [1], [0, 0, 1, 1], [], []>} : vector<256x128xbf16>, vector<128x512xbf16>, vector<256x512xf32> -> vector<256x512xf32>
    %c0_4 = arith.constant 0 : index
    %c0_5 = arith.constant 0 : index
    %5 = vector.load %arg6[%c0_4, %c0_5] : memref<1x512xf32, #tpu.memory_space<vmem>>, vector<1x512xf32>
    %6 = vector.broadcast %5 : vector<1x512xf32> to vector<256x512xf32>
    %7 = arith.addf %4, %6 : vector<256x512xf32>
    %8 = arith.truncf %7 : vector<256x512xf32> to vector<256x512xbf16>
    %9 = arith.truncf %1 : vector<256x128xf32> to vector<256x128xbf16>
    %c0_6 = arith.constant 0 : index
    %c0_7 = arith.constant 0 : index
    %10 = vector.load %arg3[%c0_6, %c0_7] : memref<128x256xbf16, #tpu.memory_space<vmem>>, vector<128x256xbf16>
    %cst_8 = arith.constant dense<0.000000e+00> : vector<256x256xf32>
    %11 = tpu.matmul %9, %10, %cst_8 {dimension_numbers = #tpu.dot_dimension_numbers<[1], [0], [0], [1], [0, 0, 1, 1], [], []>} : vector<256x128xbf16>, vector<128x256xbf16>, vector<256x256xf32> -> vector<256x256xf32>
    %c0_9 = arith.constant 0 : index
    %c0_10 = arith.constant 0 : index
    %12 = vector.load %arg4[%c0_9, %c0_10] : memref<1x256xf32, #tpu.memory_space<vmem>>, vector<1x256xf32>
    %13 = vector.broadcast %12 : vector<1x256xf32> to vector<256x256xf32>
    %14 = arith.addf %11, %13 : vector<256x256xf32>
    %15 = arith.truncf %14 : vector<256x256xf32> to vector<256x256xbf16>
    %16 = vector.extract_strided_slice %15 {offsets = [0, 0], sizes = [256, 128], strides = [1, 1]} : vector<256x256xbf16> to vector<256x128xbf16>
    %17 = vector.extract_strided_slice %8 {offsets = [0, 0], sizes = [256, 128], strides = [1, 1]} : vector<256x512xbf16> to vector<256x128xbf16>
    %18 = vector.extract_strided_slice %8 {offsets = [0, 256], sizes = [256, 128], strides = [1, 1]} : vector<256x512xbf16> to vector<256x128xbf16>
    "tpu.trace_start"() <{level = 10 : i32, message = "qf,kf->qk"}> : () -> ()
    %cst_11 = arith.constant dense<0.000000e+00> : vector<256x256xf32>
    %19 = tpu.matmul %16, %17, %cst_11 {dimension_numbers = #tpu.dot_dimension_numbers<[1], [1], [0], [0], [0, 0, 1, 0], [], []>} : vector<256x128xbf16>, vector<256x128xbf16>, vector<256x256xf32> -> vector<256x256xf32>
    "tpu.trace_stop"() : () -> ()
    %cst_12 = arith.constant dense<0xFF800000> : vector<256xf32>
    %20 = vector.multi_reduction <maximumf>, %19, %cst_12 [1] : vector<256x256xf32> to vector<256xf32>
    %21 = vector.shape_cast %20 : vector<256xf32> to vector<256x1xf32>
    %22 = vector.broadcast %21 : vector<256x1xf32> to vector<256x256xf32>
    %23 = arith.subf %19, %22 : vector<256x256xf32>
    %24 = math.exp %23 : vector<256x256xf32>
    %cst_13 = arith.constant dense<0.000000e+00> : vector<256xf32>
    %25 = vector.multi_reduction <add>, %24, %cst_13 [1] : vector<256x256xf32> to vector<256xf32>
    %26 = vector.shape_cast %25 : vector<256xf32> to vector<256x1xf32>
    %27 = vector.broadcast %26 : vector<256x1xf32> to vector<256x256xf32>
    %28 = arith.divf %24, %27 : vector<256x256xf32>
    %29 = arith.truncf %28 : vector<256x256xf32> to vector<256x256xbf16>
    %cst_14 = arith.constant dense<0.000000e+00> : vector<256x128xf32>
    %30 = tpu.matmul %29, %18, %cst_14 {dimension_numbers = #tpu.dot_dimension_numbers<[1], [0], [0], [1], [0, 0, 1, 1], [], []>} : vector<256x256xbf16>, vector<256x128xbf16>, vector<256x128xf32> -> vector<256x128xf32>
    %31 = vector.extract_strided_slice %15 {offsets = [0, 128], sizes = [256, 128], strides = [1, 1]} : vector<256x256xbf16> to vector<256x128xbf16>
    %32 = vector.extract_strided_slice %8 {offsets = [0, 128], sizes = [256, 128], strides = [1, 1]} : vector<256x512xbf16> to vector<256x128xbf16>
    %33 = vector.extract_strided_slice %8 {offsets = [0, 384], sizes = [256, 128], strides = [1, 1]} : vector<256x512xbf16> to vector<256x128xbf16>
    "tpu.trace_start"() <{level = 10 : i32, message = "qf,kf->qk"}> : () -> ()
    %cst_15 = arith.constant dense<0.000000e+00> : vector<256x256xf32>
    %34 = tpu.matmul %31, %32, %cst_15 {dimension_numbers = #tpu.dot_dimension_numbers<[1], [1], [0], [0], [0, 0, 1, 0], [], []>} : vector<256x128xbf16>, vector<256x128xbf16>, vector<256x256xf32> -> vector<256x256xf32>
    "tpu.trace_stop"() : () -> ()
    %cst_16 = arith.constant dense<0xFF800000> : vector<256xf32>
    %35 = vector.multi_reduction <maximumf>, %34, %cst_16 [1] : vector<256x256xf32> to vector<256xf32>
    %36 = vector.shape_cast %35 : vector<256xf32> to vector<256x1xf32>
    %37 = vector.broadcast %36 : vector<256x1xf32> to vector<256x256xf32>
    %38 = arith.subf %34, %37 : vector<256x256xf32>
    %39 = math.exp %38 : vector<256x256xf32>
    %cst_17 = arith.constant dense<0.000000e+00> : vector<256xf32>
    %40 = vector.multi_reduction <add>, %39, %cst_17 [1] : vector<256x256xf32> to vector<256xf32>
    %41 = vector.shape_cast %40 : vector<256xf32> to vector<256x1xf32>
    %42 = vector.broadcast %41 : vector<256x1xf32> to vector<256x256xf32>
    %43 = arith.divf %39, %42 : vector<256x256xf32>
    %44 = arith.truncf %43 : vector<256x256xf32> to vector<256x256xbf16>
    %cst_18 = arith.constant dense<0.000000e+00> : vector<256x128xf32>
    %45 = tpu.matmul %44, %33, %cst_18 {dimension_numbers = #tpu.dot_dimension_numbers<[1], [0], [0], [1], [0, 0, 1, 1], [], []>} : vector<256x256xbf16>, vector<256x128xbf16>, vector<256x128xf32> -> vector<256x128xf32>
    %46 = tpu.concatenate %30, %45 in 1 : vector<256x128xf32>, vector<256x128xf32> -> vector<256x256xf32>
    %47 = arith.truncf %46 : vector<256x256xf32> to vector<256x256xbf16>
    %c0_19 = arith.constant 0 : index
    %c0_20 = arith.constant 0 : index
    %48 = vector.load %arg7[%c0_19, %c0_20] : memref<256x128xbf16, #tpu.memory_space<vmem>>, vector<256x128xbf16>
    %cst_21 = arith.constant dense<0.000000e+00> : vector<256x128xf32>
    %49 = tpu.matmul %47, %48, %cst_21 {dimension_numbers = #tpu.dot_dimension_numbers<[1], [0], [0], [1], [0, 0, 1, 1], [], []>} : vector<256x256xbf16>, vector<256x128xbf16>, vector<256x128xf32> -> vector<256x128xf32>
    %c0_22 = arith.constant 0 : index
    %c0_23 = arith.constant 0 : index
    %50 = vector.load %arg8[%c0_22, %c0_23] : memref<1x128xf32, #tpu.memory_space<vmem>>, vector<1x128xf32>
    %51 = vector.broadcast %50 : vector<1x128xf32> to vector<256x128xf32>
    %52 = arith.addf %49, %51 : vector<256x128xf32>
    %c0_24 = arith.constant 0 : index
    %c0_25 = arith.constant 0 : index
    %53 = vector.load %arg9[%c0_24, %c0_25] : memref<1x128xf32, #tpu.memory_space<vmem>>, vector<1x128xf32>
    %c0_26 = arith.constant 0 : index
    %c0_27 = arith.constant 0 : index
    %54 = vector.load %arg10[%c0_26, %c0_27] : memref<1x128xf32, #tpu.memory_space<vmem>>, vector<1x128xf32>
    %cst_28 = arith.constant dense<0.000000e+00> : vector<256xf32>
    %55 = vector.multi_reduction <add>, %52, %cst_28 [1] : vector<256x128xf32> to vector<256xf32>
    %56 = vector.shape_cast %55 : vector<256xf32> to vector<256x1xf32>
    %cst_29 = arith.constant 1.280000e+02 : f32
    %57 = vector.broadcast %cst_29 : f32 to vector<256x1xf32>
    %58 = arith.divf %56, %57 : vector<256x1xf32>
    %59 = vector.broadcast %58 : vector<256x1xf32> to vector<256x128xf32>
    %60 = arith.subf %52, %59 : vector<256x128xf32>
    %61 = arith.mulf %60, %60 : vector<256x128xf32>
    %cst_30 = arith.constant dense<0.000000e+00> : vector<256xf32>
    %62 = vector.multi_reduction <add>, %61, %cst_30 [1] : vector<256x128xf32> to vector<256xf32>
    %63 = vector.shape_cast %62 : vector<256xf32> to vector<256x1xf32>
    %cst_31 = arith.constant 1.280000e+02 : f32
    %64 = vector.broadcast %cst_31 : f32 to vector<256x1xf32>
    %65 = arith.divf %63, %64 : vector<256x1xf32>
    %66 = vector.broadcast %58 : vector<256x1xf32> to vector<256x128xf32>
    %67 = arith.subf %52, %66 : vector<256x128xf32>
    %68 = vector.broadcast %53 : vector<1x128xf32> to vector<256x128xf32>
    %69 = arith.mulf %68, %67 : vector<256x128xf32>
    %cst_32 = arith.constant 9.99999997E-7 : f32
    %70 = vector.broadcast %cst_32 : f32 to vector<256x1xf32>
    %71 = arith.addf %65, %70 : vector<256x1xf32>
    %72 = math.rsqrt %71 : vector<256x1xf32>
    %73 = vector.broadcast %72 : vector<256x1xf32> to vector<256x128xf32>
    %74 = arith.mulf %69, %73 : vector<256x128xf32>
    %75 = vector.broadcast %54 : vector<1x128xf32> to vector<256x128xf32>
    %76 = arith.addf %74, %75 : vector<256x128xf32>
    %77 = arith.addf %1, %76 : vector<256x128xf32>
    %78 = arith.truncf %77 : vector<256x128xf32> to vector<256x128xbf16>
    %c0_33 = arith.constant 0 : index
    %c0_34 = arith.constant 0 : index
    %79 = vector.load %arg11[%c0_33, %c0_34] : memref<128x256xbf16, #tpu.memory_space<vmem>>, vector<128x256xbf16>
    %cst_35 = arith.constant dense<0.000000e+00> : vector<256x256xf32>
    %80 = tpu.matmul %78, %79, %cst_35 {dimension_numbers = #tpu.dot_dimension_numbers<[1], [0], [0], [1], [0, 0, 1, 1], [], []>} : vector<256x128xbf16>, vector<128x256xbf16>, vector<256x256xf32> -> vector<256x256xf32>
    %c0_36 = arith.constant 0 : index
    %c0_37 = arith.constant 0 : index
    %81 = vector.load %arg12[%c0_36, %c0_37] : memref<1x256xf32, #tpu.memory_space<vmem>>, vector<1x256xf32>
    %82 = vector.broadcast %81 : vector<1x256xf32> to vector<256x256xf32>
    %83 = arith.addf %80, %82 : vector<256x256xf32>
    %cst_38 = arith.constant 0.000000e+00 : f32
    %84 = vector.broadcast %cst_38 : f32 to vector<256x256xf32>
    %85 = arith.maximumf %83, %84 : vector<256x256xf32>
    %86 = arith.truncf %85 : vector<256x256xf32> to vector<256x256xbf16>
    %c0_39 = arith.constant 0 : index
    %c0_40 = arith.constant 0 : index
    %87 = vector.load %arg13[%c0_39, %c0_40] : memref<256x128xbf16, #tpu.memory_space<vmem>>, vector<256x128xbf16>
    %cst_41 = arith.constant dense<0.000000e+00> : vector<256x128xf32>
    %88 = tpu.matmul %86, %87, %cst_41 {dimension_numbers = #tpu.dot_dimension_numbers<[1], [0], [0], [1], [0, 0, 1, 1], [], []>} : vector<256x256xbf16>, vector<256x128xbf16>, vector<256x128xf32> -> vector<256x128xf32>
    %c0_42 = arith.constant 0 : index
    %c0_43 = arith.constant 0 : index
    %89 = vector.load %arg14[%c0_42, %c0_43] : memref<1x128xf32, #tpu.memory_space<vmem>>, vector<1x128xf32>
    %90 = vector.broadcast %89 : vector<1x128xf32> to vector<256x128xf32>
    %91 = arith.addf %88, %90 : vector<256x128xf32>
    %c0_44 = arith.constant 0 : index
    %c0_45 = arith.constant 0 : index
    %92 = vector.load %arg15[%c0_44, %c0_45] : memref<1x128xf32, #tpu.memory_space<vmem>>, vector<1x128xf32>
    %c0_46 = arith.constant 0 : index
    %c0_47 = arith.constant 0 : index
    %93 = vector.load %arg16[%c0_46, %c0_47] : memref<1x128xf32, #tpu.memory_space<vmem>>, vector<1x128xf32>
    %cst_48 = arith.constant dense<0.000000e+00> : vector<256xf32>
    %94 = vector.multi_reduction <add>, %91, %cst_48 [1] : vector<256x128xf32> to vector<256xf32>
    %95 = vector.shape_cast %94 : vector<256xf32> to vector<256x1xf32>
    %cst_49 = arith.constant 1.280000e+02 : f32
    %96 = vector.broadcast %cst_49 : f32 to vector<256x1xf32>
    %97 = arith.divf %95, %96 : vector<256x1xf32>
    %98 = vector.broadcast %97 : vector<256x1xf32> to vector<256x128xf32>
    %99 = arith.subf %91, %98 : vector<256x128xf32>
    %100 = arith.mulf %99, %99 : vector<256x128xf32>
    %cst_50 = arith.constant dense<0.000000e+00> : vector<256xf32>
    %101 = vector.multi_reduction <add>, %100, %cst_50 [1] : vector<256x128xf32> to vector<256xf32>
    %102 = vector.shape_cast %101 : vector<256xf32> to vector<256x1xf32>
    %cst_51 = arith.constant 1.280000e+02 : f32
    %103 = vector.broadcast %cst_51 : f32 to vector<256x1xf32>
    %104 = arith.divf %102, %103 : vector<256x1xf32>
    %105 = vector.broadcast %97 : vector<256x1xf32> to vector<256x128xf32>
    %106 = arith.subf %91, %105 : vector<256x128xf32>
    %107 = vector.broadcast %92 : vector<1x128xf32> to vector<256x128xf32>
    %108 = arith.mulf %107, %106 : vector<256x128xf32>
    %cst_52 = arith.constant 9.99999997E-7 : f32
    %109 = vector.broadcast %cst_52 : f32 to vector<256x1xf32>
    %110 = arith.addf %104, %109 : vector<256x1xf32>
    %111 = math.rsqrt %110 : vector<256x1xf32>
    %112 = vector.broadcast %111 : vector<256x1xf32> to vector<256x128xf32>
    %113 = arith.mulf %108, %112 : vector<256x128xf32>
    %114 = vector.broadcast %93 : vector<1x128xf32> to vector<256x128xf32>
    %115 = arith.addf %113, %114 : vector<256x128xf32>
    %116 = arith.addf %77, %115 : vector<256x128xf32>
    %c0_53 = arith.constant 0 : index
    %c0_54 = arith.constant 0 : index
    %c0_55 = arith.constant 0 : index
    %117 = vector.load %arg17[%c0_53, %c0_54, %c0_55] : memref<1x256x128xf32, #tpu.memory_space<vmem>>, vector<1x256x128xf32>
    %118 = vector.shape_cast %117 : vector<1x256x128xf32> to vector<256x128xf32>
    %119 = vector.shape_cast %116 : vector<256x128xf32> to vector<1x256x128xf32>
    tpu.vector_store %arg17[%c0_53, %c0_54, %c0_55], %119 {strides = array<i32>} : memref<1x256x128xf32, #tpu.memory_space<vmem>>, vector<1x256x128xf32>,
    return
  }
  func.func @transform_0(%arg0: i32, %arg1: i32) -> (i32, i32, i32) {
    %c0_i32 = arith.constant 0 : i32
    %c0_i32_0 = arith.constant 0 : i32
    %c0_i32_1 = arith.constant 0 : i32
    return %arg0, %c0_i32, %c0_i32_0 : i32, i32, i32
  }
  func.func @transform_1(%arg0: i32, %arg1: i32) -> (i32, i32) {
    %c0_i32 = arith.constant 0 : i32
    %c0_i32_0 = arith.constant 0 : i32
    %c0_i32_1 = arith.constant 0 : i32
    return %c0_i32, %c0_i32_0 : i32, i32
  }
  func.func @transform_2(%arg0: i32, %arg1: i32) -> (i32, i32) {
    %c0_i32 = arith.constant 0 : i32
    %c0_i32_0 = arith.constant 0 : i32
    %c0_i32_1 = arith.constant 0 : i32
    return %c0_i32, %c0_i32_0 : i32, i32
  }
  func.func @transform_3(%arg0: i32, %arg1: i32) -> (i32, i32) {
    %c0_i32 = arith.constant 0 : i32
    %c0_i32_0 = arith.constant 0 : i32
    %c0_i32_1 = arith.constant 0 : i32
    return %c0_i32, %c0_i32_0 : i32, i32
  }
  func.func @transform_4(%arg0: i32, %arg1: i32) -> (i32, i32) {
    %c0_i32 = arith.constant 0 : i32
    %c0_i32_0 = arith.constant 0 : i32
    %c0_i32_1 = arith.constant 0 : i32
    return %c0_i32, %c0_i32_0 : i32, i32
  }
  func.func @transform_5(%arg0: i32, %arg1: i32) -> (i32, i32) {
    %c0_i32 = arith.constant 0 : i32
    %c0_i32_0 = arith.constant 0 : i32
    %c0_i32_1 = arith.constant 0 : i32
    return %c0_i32, %c0_i32_0 : i32, i32
  }
  func.func @transform_6(%arg0: i32, %arg1: i32) -> (i32, i32) {
    %c0_i32 = arith.constant 0 : i32
    %c0_i32_0 = arith.constant 0 : i32
    %c0_i32_1 = arith.constant 0 : i32
    return %c0_i32, %c0_i32_0 : i32, i32
  }
  func.func @transform_7(%arg0: i32, %arg1: i32) -> (i32, i32) {
    %c0_i32 = arith.constant 0 : i32
    %c0_i32_0 = arith.constant 0 : i32
    %c0_i32_1 = arith.constant 0 : i32
    return %c0_i32, %c0_i32_0 : i32, i32
  }
  func.func @transform_8(%arg0: i32, %arg1: i32) -> (i32, i32) {
    %c0_i32 = arith.constant 0 : i32
    %c0_i32_0 = arith.constant 0 : i32
    %c0_i32_1 = arith.constant 0 : i32
    return %c0_i32, %c0_i32_0 : i32, i32
  }
  func.func @transform_9(%arg0: i32, %arg1: i32) -> (i32, i32) {
    %c0_i32 = arith.constant 0 : i32
    %c0_i32_0 = arith.constant 0 : i32
    %c0_i32_1 = arith.constant 0 : i32
    return %c0_i32, %c0_i32_0 : i32, i32
  }
  func.func @transform_10(%arg0: i32, %arg1: i32) -> (i32, i32) {
    %c0_i32 = arith.constant 0 : i32
    %c0_i32_0 = arith.constant 0 : i32
    %c0_i32_1 = arith.constant 0 : i32
    return %c0_i32, %c0_i32_0 : i32, i32
  }
  func.func @transform_11(%arg0: i32, %arg1: i32) -> (i32, i32) {
    %c0_i32 = arith.constant 0 : i32
    %c0_i32_0 = arith.constant 0 : i32
    %c0_i32_1 = arith.constant 0 : i32
    return %c0_i32, %c0_i32_0 : i32, i32
  }
  func.func @transform_12(%arg0: i32, %arg1: i32) -> (i32, i32) {
    %c0_i32 = arith.constant 0 : i32
    %c0_i32_0 = arith.constant 0 : i32
    %c0_i32_1 = arith.constant 0 : i32
    return %c0_i32, %c0_i32_0 : i32, i32
  }
  func.func @transform_13(%arg0: i32, %arg1: i32) -> (i32, i32) {
    %c0_i32 = arith.constant 0 : i32
    %c0_i32_0 = arith.constant 0 : i32
    %c0_i32_1 = arith.constant 0 : i32
    return %c0_i32, %c0_i32_0 : i32, i32
  }
  func.func @transform_14(%arg0: i32, %arg1: i32) -> (i32, i32) {
    %c0_i32 = arith.constant 0 : i32
    %c0_i32_0 = arith.constant 0 : i32
    %c0_i32_1 = arith.constant 0 : i32
    return %c0_i32, %c0_i32_0 : i32, i32
  }
  func.func @transform_15(%arg0: i32, %arg1: i32) -> (i32, i32, i32) {
    %c0_i32 = arith.constant 0 : i32
    %c0_i32_0 = arith.constant 0 : i32
    return %arg0, %arg1, %c0_i32 : i32, i32, i32
  }
}

</mosaic_0001>

<llo_original>
// kernel: tpu_custom_call.1
$region0: #{tpu_custom_call.1}
  #allocation0 [shape = 'u32[]', space=smem, size = 0x4, offset = 0x4, fixed_abs, tag = 'smem constant byte address 0x4 - core index']
  #allocation1 [shape = 'u32[144,128]{1,0:T(1,128)}', space=vmem, size = 0x12000, scoped, tag = 'internal scratch']
  %s0 = inlined_call_operand.hbm [shape: f32[2,256,128], index: 0, kind: input, shape index: {}]
  %s1 = inlined_call_operand.hbm [shape: bf16[128,256], index: 1, kind: input, shape index: {}]
  %s2 = inlined_call_operand.vmem [shape: f32[1,256], index: 2, kind: input, shape index: {}]
  %s3 = inlined_call_operand.hbm [shape: bf16[128,512], index: 3, kind: input, shape index: {}]
  %s4 = inlined_call_operand.vmem [shape: f32[1,512], index: 4, kind: input, shape index: {}]
  %s5 = inlined_call_operand.hbm [shape: bf16[256,128], index: 5, kind: input, shape index: {}]
  %s6 = inlined_call_operand.vmem [shape: f32[1,128], index: 6, kind: input, shape index: {}]
  %s7 = inlined_call_operand.vmem [shape: f32[1,128], index: 7, kind: input, shape index: {}]
  %s8 = inlined_call_operand.vmem [shape: f32[1,128], index: 8, kind: input, shape index: {}]
  %s9 = inlined_call_operand.hbm [shape: bf16[128,256], index: 9, kind: input, shape index: {}]
  %s10 = inlined_call_operand.vmem [shape: f32[1,256], index: 10, kind: input, shape index: {}]
  %s11 = inlined_call_operand.hbm [shape: bf16[256,128], index: 11, kind: input, shape index: {}]
  %s12 = inlined_call_operand.vmem [shape: f32[1,128], index: 12, kind: input, shape index: {}]
  %s13 = inlined_call_operand.vmem [shape: f32[1,128], index: 13, kind: input, shape index: {}]
  %s14 = inlined_call_operand.vmem [shape: f32[1,128], index: 14, kind: input, shape index: {}]
  %s15 = inlined_call_operand.hbm [shape: f32[2,256,128], index: 15, kind: output, shape index: {}]
  %s16 = sld [smem:[#allocation0]]
  $region117: #{tpu_custom_call.1} parent=0
    _
  %s18 = ssub.s32 1, %s16
  %s19 = scalar_select 0, %s18, %s16
  $region1: #{tpu_custom_call.1} parent=0
    #allocation2 [shape = 'u8[262144]{0}', space=vmem, size = 0x40000, scoped, tag = 'input window, operand 0']
    #allocation3 [shape = 's32[2]{0}', space=sflag, size = 0x8, scoped, tag = 'scoped memory for tpu_custom_call.1']
    #allocation4 [shape = 's32[2]{0}', space=sflag, size = 0x8, scoped, tag = 'scoped memory for tpu_custom_call.1']
    #allocation5 [shape = 'u8[65536]{0}', space=vmem, size = 0x10000, scoped, tag = 'input window, operand 1, single buffered']
    #allocation6 [shape = 's32[1]{0}', space=sflag, size = 0x4, scoped, tag = 'scoped memory for tpu_custom_call.1']
    #allocation7 [shape = 'u8[131072]{0}', space=vmem, size = 0x20000, scoped, tag = 'input window, operand 3, single buffered']
    #allocation8 [shape = 'u8[65536]{0}', space=vmem, size = 0x10000, scoped, tag = 'input window, operand 5, single buffered']
    #allocation9 [shape = 's32[1]{0}', space=sflag, size = 0x4, scoped, tag = 'scoped memory for tpu_custom_call.1']
    #allocation10 [shape = 'u8[65536]{0}', space=vmem, size = 0x10000, scoped, tag = 'input window, operand 9, single buffered']
    #allocation11 [shape = 'u8[65536]{0}', space=vmem, size = 0x10000, scoped, tag = 'input window, operand 11, single buffered']
    #allocation12 [shape = 's32[1]{0}', space=sflag, size = 0x4, scoped, tag = 'scoped memory for tpu_custom_call.1']
    #allocation13 [shape = 'u8[262144]{0}', space=vmem, size = 0x40000, scoped, tag = 'output window, operand 0']
    %20 = vsyncpa [#allocation3], 0
    %s21 = scalar_lea.sflag [#allocation3], 1
    %22 = vsyncpa %s21, 0
    %23 = vsyncpa [#allocation6], 0
    %24 = vsyncpa [#allocation9], 0
    %25 = vsyncpa [#allocation12], 0
    %26 = vsyncpa [#allocation4], 0
    %s27 = scalar_lea.sflag [#allocation4], 1
    %28 = vsyncpa %s27, 0
    loop: start=0, step=1, limit=4
    $region2: #{tpu_custom_call.1} parent=1 // loop_pre_header
      _
    $region3: #{tpu_custom_call.1} parent=1 // loop_header
      %s30 = sphi 0, %s34
      %p31 = scmp.ge.s32.totalorder %s30, 4
      %s37 = sphi 0, %s49
      %s38 = sphi 0, %s45
      %s39 = sphi 0, %s37
      %s40 = sphi 0, %s38
      %s41 = sphi 0, %s39
      %s42 = sphi 0, %s40
      %s52 = sphi 0, %s54
      %s55 = sphi 0, %s52
      %s56 = sphi 0, %s55
      %s72 = sphi 0, %s56
      %s76 = sphi 0, %s76
      %s78 = sphi 0, %s76
      %s79 = sphi 0, %s78
      %s93 = sphi 0, %s79
      %s97 = sphi 0, %s97
      %s99 = sphi 0, %s97
      %s100 = sphi 0, %s99
      %s114 = sphi 0, %s100
      %s118 = sphi 0, %s118
      %s120 = sphi 0, %s118
      %s121 = sphi 0, %s120
      %s135 = sphi 0, %s121
      %s139 = sphi 0, %s139
      %s141 = sphi 0, %s139
      %s142 = sphi 0, %s141
      %s156 = sphi 0, %s142
      %s160 = sphi 0, %s160
      %s162 = sphi 0, %s160
      %s163 = sphi 0, %s162
      %s177 = sphi 0, %s163
      %s181 = sphi 0, %s181
      %s183 = sphi 0, %s181
      %s184 = sphi 0, %s183
      %s198 = sphi 0, %s184
      %s202 = sphi 0, %s202
      %s204 = sphi 0, %s202
      %s205 = sphi 0, %s204
      %s219 = sphi 0, %s205
      %s223 = sphi 0, %s223
      %s225 = sphi 0, %s223
      %s226 = sphi 0, %s225
      %s240 = sphi 0, %s226
      %s244 = sphi 0, %s244
      %s246 = sphi 0, %s244
      %s247 = sphi 0, %s246
      %s261 = sphi 0, %s247
      %s265 = sphi 0, %s265
      %s267 = sphi 0, %s265
      %s268 = sphi 0, %s267
      %s282 = sphi 0, %s268
      %s286 = sphi 0, %s286
      %s288 = sphi 0, %s286
      %s289 = sphi 0, %s288
      %s303 = sphi 0, %s289
      %s307 = sphi 0, %s307
      %s309 = sphi 0, %s307
      %s310 = sphi 0, %s309
      %s324 = sphi 0, %s310
      %s328 = sphi 0, %s328
      %s330 = sphi 0, %s328
      %s331 = sphi 0, %s330
      %s345 = sphi 0, %s331
      %s349 = sphi 0, %s349
      %s351 = sphi 0, %s349
      %s352 = sphi 0, %s351
      %s366 = sphi 0, %s352
      %s374 = sphi 0, %s376
      %s377 = sphi 0, %s374
      %s378 = sphi 0, %s377
      %s394 = sphi 0, %s378
    $region4: #{tpu_custom_call.1} parent=1 // loop_header_branch
      %33 = sbr.rel (%p31) target = $region8
    $region5: #{tpu_custom_call.1} parent=1 // loop_body
      %s35 = ssub.s32 %s30, 1
      %s36 = ssub.s32 %s30, 2
      %s43 = sadd.s32 1, %s38
      %p44 = scmp.ge.s32.totalorder %s43, 1
      %s45 = scalar_select %p44, 0, %s43
      %s46 = sadd.s32 1, %s37
      %s47 = scalar_select %p44, %s46, %s37
      %p48 = scmp.ge.s32.totalorder %s47, 2
      %s49 = scalar_select %p48, 0, %s47
      %s50 = ssub.s32 %s37, %s49
      %p51 = scmp.eq.s32.totalorder %s50, 0
      %s53 = sadd.s32 %s52, 1
      %s54 = scalar_select %p51, %s52, %s53
      %p57 = pneg %p51
      %p58 = scmp.eq.s32.totalorder %s30, 1
      %p59 = por %p57, %p58
      %p60 = scmp.ne.s32.totalorder %s52, %s55
      %p61 = scmp.eq.s32.totalorder %s30, 0
      %p62 = por %p60, %p61
      %p63 = scmp.ne.s32.totalorder %s52, %s55
      %p64 = scmp.eq.s32.totalorder %s35, 1
      %p65 = por %p63, %p64
      %p66 = scmp.ne.s32.totalorder %s55, %s56
      %p67 = scmp.eq.s32.totalorder %s35, 0
      %p68 = por %p66, %p67
      %p69 = scmp.ne.s32.totalorder %s55, %s56
      %p70 = scmp.eq.s32.totalorder %s36, 1
      %p71 = por %p69, %p70
      %p73 = scmp.ne.s32.totalorder %s56, %s72
      %p74 = scmp.eq.s32.totalorder %s36, 0
      %p75 = por %p73, %p74
      %s77 = sadd.s32 %s76, 1
      %p80 = scmp.eq.s32.totalorder %s30, 1
      %p81 = scmp.ne.s32.totalorder %s76, %s78
      %p82 = scmp.eq.s32.totalorder %s30, 0
      %p83 = por %p81, %p82
      %p84 = scmp.ne.s32.totalorder %s76, %s78
      %p85 = scmp.eq.s32.totalorder %s35, 1
      %p86 = por %p84, %p85
      %p87 = scmp.ne.s32.totalorder %s78, %s79
      %p88 = scmp.eq.s32.totalorder %s35, 0
      %p89 = por %p87, %p88
      %p90 = scmp.ne.s32.totalorder %s78, %s79
      %p91 = scmp.eq.s32.totalorder %s36, 1
      %p92 = por %p90, %p91
      %p94 = scmp.ne.s32.totalorder %s79, %s93
      %p95 = scmp.eq.s32.totalorder %s36, 0
      %p96 = por %p94, %p95
      %s98 = sadd.s32 %s97, 1
      %p101 = scmp.eq.s32.totalorder %s30, 1
      %p102 = scmp.ne.s32.totalorder %s97, %s99
      %p103 = scmp.eq.s32.totalorder %s30, 0
      %p104 = por %p102, %p103
      %p105 = scmp.ne.s32.totalorder %s97, %s99
      %p106 = scmp.eq.s32.totalorder %s35, 1
      %p107 = por %p105, %p106
      %p108 = scmp.ne.s32.totalorder %s99, %s100
      %p109 = scmp.eq.s32.totalorder %s35, 0
      %p110 = por %p108, %p109
      %p111 = scmp.ne.s32.totalorder %s99, %s100
      %p112 = scmp.eq.s32.totalorder %s36, 1
      %p113 = por %p111, %p112
      %p115 = scmp.ne.s32.totalorder %s100, %s114
      %p116 = scmp.eq.s32.totalorder %s36, 0
      %p117 = por %p115, %p116
      %s119 = sadd.s32 %s118, 1
      %p122 = scmp.eq.s32.totalorder %s30, 1
      %p123 = scmp.ne.s32.totalorder %s118, %s120
      %p124 = scmp.eq.s32.totalorder %s30, 0
      %p125 = por %p123, %p124
      %p126 = scmp.ne.s32.totalorder %s118, %s120
      %p127 = scmp.eq.s32.totalorder %s35, 1
      %p128 = por %p126, %p127
      %p129 = scmp.ne.s32.totalorder %s120, %s121
      %p130 = scmp.eq.s32.totalorder %s35, 0
      %p131 = por %p129, %p130
      %p132 = scmp.ne.s32.totalorder %s120, %s121
      %p133 = scmp.eq.s32.totalorder %s36, 1
      %p134 = por %p132, %p133
      %p136 = scmp.ne.s32.totalorder %s121, %s135
      %p137 = scmp.eq.s32.totalorder %s36, 0
      %p138 = por %p136, %p137
      %s140 = sadd.s32 %s139, 1
      %p143 = scmp.eq.s32.totalorder %s30, 1
      %p144 = scmp.ne.s32.totalorder %s139, %s141
      %p145 = scmp.eq.s32.totalorder %s30, 0
      %p146 = por %p144, %p145
      %p147 = scmp.ne.s32.totalorder %s139, %s141
      %p148 = scmp.eq.s32.totalorder %s35, 1
      %p149 = por %p147, %p148
      %p150 = scmp.ne.s32.totalorder %s141, %s142
      %p151 = scmp.eq.s32.totalorder %s35, 0
      %p152 = por %p150, %p151
      %p153 = scmp.ne.s32.totalorder %s141, %s142
      %p154 = scmp.eq.s32.totalorder %s36, 1
      %p155 = por %p153, %p154
      %p157 = scmp.ne.s32.totalorder %s142, %s156
      %p158 = scmp.eq.s32.totalorder %s36, 0
      %p159 = por %p157, %p158
      %s161 = sadd.s32 %s160, 1
      %p164 = scmp.eq.s32.totalorder %s30, 1
      %p165 = scmp.ne.s32.totalorder %s160, %s162
      %p166 = scmp.eq.s32.totalorder %s30, 0
      %p167 = por %p165, %p166
      %p168 = scmp.ne.s32.totalorder %s160, %s162
      %p169 = scmp.eq.s32.totalorder %s35, 1
      %p170 = por %p168, %p169
      %p171 = scmp.ne.s32.totalorder %s162, %s163
      %p172 = scmp.eq.s32.totalorder %s35, 0
      %p173 = por %p171, %p172
      %p174 = scmp.ne.s32.totalorder %s162, %s163
      %p175 = scmp.eq.s32.totalorder %s36, 1
      %p176 = por %p174, %p175
      %p178 = scmp.ne.s32.totalorder %s163, %s177
      %p179 = scmp.eq.s32.totalorder %s36, 0
      %p180 = por %p178, %p179
      %s182 = sadd.s32 %s181, 1
      %p185 = scmp.eq.s32.totalorder %s30, 1
      %p186 = scmp.ne.s32.totalorder %s181, %s183
      %p187 = scmp.eq.s32.totalorder %s30, 0
      %p188 = por %p186, %p187
      %p189 = scmp.ne.s32.totalorder %s181, %s183
      %p190 = scmp.eq.s32.totalorder %s35, 1
      %p191 = por %p189, %p190
      %p192 = scmp.ne.s32.totalorder %s183, %s184
      %p193 = scmp.eq.s32.totalorder %s35, 0
      %p194 = por %p192, %p193
      %p195 = scmp.ne.s32.totalorder %s183, %s184
      %p196 = scmp.eq.s32.totalorder %s36, 1
      %p197 = por %p195, %p196
      %p199 = scmp.ne.s32.totalorder %s184, %s198
      %p200 = scmp.eq.s32.totalorder %s36, 0
      %p201 = por %p199, %p200
      %s203 = sadd.s32 %s202, 1
      %p206 = scmp.eq.s32.totalorder %s30, 1
      %p207 = scmp.ne.s32.totalorder %s202, %s204
      %p208 = scmp.eq.s32.totalorder %s30, 0
      %p209 = por %p207, %p208
      %p210 = scmp.ne.s32.totalorder %s202, %s204
      %p211 = scmp.eq.s32.totalorder %s35, 1
      %p212 = por %p210, %p211
      %p213 = scmp.ne.s32.totalorder %s204, %s205
      %p214 = scmp.eq.s32.totalorder %s35, 0
      %p215 = por %p213, %p214
      %p216 = scmp.ne.s32.totalorder %s204, %s205
      %p217 = scmp.eq.s32.totalorder %s36, 1
      %p218 = por %p216, %p217
      %p220 = scmp.ne.s32.totalorder %s205, %s219
      %p221 = scmp.eq.s32.totalorder %s36, 0
      %p222 = por %p220, %p221
      %s224 = sadd.s32 %s223, 1
      %p227 = scmp.eq.s32.totalorder %s30, 1
      %p228 = scmp.ne.s32.totalorder %s223, %s225
      %p229 = scmp.eq.s32.totalorder %s30, 0
      %p230 = por %p228, %p229
      %p231 = scmp.ne.s32.totalorder %s223, %s225
      %p232 = scmp.eq.s32.totalorder %s35, 1
      %p233 = por %p231, %p232
      %p234 = scmp.ne.s32.totalorder %s225, %s226
      %p235 = scmp.eq.s32.totalorder %s35, 0
      %p236 = por %p234, %p235
      %p237 = scmp.ne.s32.totalorder %s225, %s226
      %p238 = scmp.eq.s32.totalorder %s36, 1
      %p239 = por %p237, %p238
      %p241 = scmp.ne.s32.totalorder %s226, %s240
      %p242 = scmp.eq.s32.totalorder %s36, 0
      %p243 = por %p241, %p242
      %s245 = sadd.s32 %s244, 1
      %p248 = scmp.eq.s32.totalorder %s30, 1
      %p249 = scmp.ne.s32.totalorder %s244, %s246
      %p250 = scmp.eq.s32.totalorder %s30, 0
      %p251 = por %p249, %p250
      %p252 = scmp.ne.s32.totalorder %s244, %s246
      %p253 = scmp.eq.s32.totalorder %s35, 1
      %p254 = por %p252, %p253
      %p255 = scmp.ne.s32.totalorder %s246, %s247
      %p256 = scmp.eq.s32.totalorder %s35, 0
      %p257 = por %p255, %p256
      %p258 = scmp.ne.s32.totalorder %s246, %s247
      %p259 = scmp.eq.s32.totalorder %s36, 1
      %p260 = por %p258, %p259
      %p262 = scmp.ne.s32.totalorder %s247, %s261
      %p263 = scmp.eq.s32.totalorder %s36, 0
      %p264 = por %p262, %p263
      %s266 = sadd.s32 %s265, 1
      %p269 = scmp.eq.s32.totalorder %s30, 1
      %p270 = scmp.ne.s32.totalorder %s265, %s267
      %p271 = scmp.eq.s32.totalorder %s30, 0
      %p272 = por %p270, %p271
      %p273 = scmp.ne.s32.totalorder %s265, %s267
      %p274 = scmp.eq.s32.totalorder %s35, 1
      %p275 = por %p273, %p274
      %p276 = scmp.ne.s32.totalorder %s267, %s268
      %p277 = scmp.eq.s32.totalorder %s35, 0
      %p278 = por %p276, %p277
      %p279 = scmp.ne.s32.totalorder %s267, %s268
      %p280 = scmp.eq.s32.totalorder %s36, 1
      %p281 = por %p279, %p280
      %p283 = scmp.ne.s32.totalorder %s268, %s282
      %p284 = scmp.eq.s32.totalorder %s36, 0
      %p285 = por %p283, %p284
      %s287 = sadd.s32 %s286, 1
      %p290 = scmp.eq.s32.totalorder %s30, 1
      %p291 = scmp.ne.s32.totalorder %s286, %s288
      %p292 = scmp.eq.s32.totalorder %s30, 0
      %p293 = por %p291, %p292
      %p294 = scmp.ne.s32.totalorder %s286, %s288
      %p295 = scmp.eq.s32.totalorder %s35, 1
      %p296 = por %p294, %p295
      %p297 = scmp.ne.s32.totalorder %s288, %s289
      %p298 = scmp.eq.s32.totalorder %s35, 0
      %p299 = por %p297, %p298
      %p300 = scmp.ne.s32.totalorder %s288, %s289
      %p301 = scmp.eq.s32.totalorder %s36, 1
      %p302 = por %p300, %p301
      %p304 = scmp.ne.s32.totalorder %s289, %s303
      %p305 = scmp.eq.s32.totalorder %s36, 0
      %p306 = por %p304, %p305
      %s308 = sadd.s32 %s307, 1
      %p311 = scmp.eq.s32.totalorder %s30, 1
      %p312 = scmp.ne.s32.totalorder %s307, %s309
      %p313 = scmp.eq.s32.totalorder %s30, 0
      %p314 = por %p312, %p313
      %p315 = scmp.ne.s32.totalorder %s307, %s309
      %p316 = scmp.eq.s32.totalorder %s35, 1
      %p317 = por %p315, %p316
      %p318 = scmp.ne.s32.totalorder %s309, %s310
      %p319 = scmp.eq.s32.totalorder %s35, 0
      %p320 = por %p318, %p319
      %p321 = scmp.ne.s32.totalorder %s309, %s310
      %p322 = scmp.eq.s32.totalorder %s36, 1
      %p323 = por %p321, %p322
      %p325 = scmp.ne.s32.totalorder %s310, %s324
      %p326 = scmp.eq.s32.totalorder %s36, 0
      %p327 = por %p325, %p326
      %s329 = sadd.s32 %s328, 1
      %p332 = scmp.eq.s32.totalorder %s30, 1
      %p333 = scmp.ne.s32.totalorder %s328, %s330
      %p334 = scmp.eq.s32.totalorder %s30, 0
      %p335 = por %p333, %p334
      %p336 = scmp.ne.s32.totalorder %s328, %s330
      %p337 = scmp.eq.s32.totalorder %s35, 1
      %p338 = por %p336, %p337
      %p339 = scmp.ne.s32.totalorder %s330, %s331
      %p340 = scmp.eq.s32.totalorder %s35, 0
      %p341 = por %p339, %p340
      %p342 = scmp.ne.s32.totalorder %s330, %s331
      %p343 = scmp.eq.s32.totalorder %s36, 1
      %p344 = por %p342, %p343
      %p346 = scmp.ne.s32.totalorder %s331, %s345
      %p347 = scmp.eq.s32.totalorder %s36, 0
      %p348 = por %p346, %p347
      %s350 = sadd.s32 %s349, 1
      %p353 = scmp.eq.s32.totalorder %s30, 1
      %p354 = scmp.ne.s32.totalorder %s349, %s351
      %p355 = scmp.eq.s32.totalorder %s30, 0
      %p356 = por %p354, %p355
      %p357 = scmp.ne.s32.totalorder %s349, %s351
      %p358 = scmp.eq.s32.totalorder %s35, 1
      %p359 = por %p357, %p358
      %p360 = scmp.ne.s32.totalorder %s351, %s352
      %p361 = scmp.eq.s32.totalorder %s35, 0
      %p362 = por %p360, %p361
      %p363 = scmp.ne.s32.totalorder %s351, %s352
      %p364 = scmp.eq.s32.totalorder %s36, 1
      %p365 = por %p363, %p364
      %p367 = scmp.ne.s32.totalorder %s352, %s366
      %p368 = scmp.eq.s32.totalorder %s36, 0
      %p369 = por %p367, %p368
      %s370 = ssub.s32 %s37, %s49
      %s371 = ssub.s32 %s38, %s45
      %s372 = sor.u32 %s370, %s371
      %p373 = scmp.eq.s32.totalorder %s372, 0
      %s375 = sadd.s32 %s374, 1
      %s376 = scalar_select %p373, %s374, %s375
      %p379 = pneg %p373
      %p380 = scmp.eq.s32.totalorder %s30, 1
      %p381 = por %p379, %p380
      %p382 = scmp.ne.s32.totalorder %s374, %s377
      %p383 = scmp.eq.s32.totalorder %s30, 0
      %p384 = por %p382, %p383
      %p385 = scmp.ne.s32.totalorder %s374, %s377
      %p386 = scmp.eq.s32.totalorder %s35, 1
      %p387 = por %p385, %p386
      %p388 = scmp.ne.s32.totalorder %s377, %s378
      %p389 = scmp.eq.s32.totalorder %s35, 0
      %p390 = por %p388, %p389
      %p391 = scmp.ne.s32.totalorder %s377, %s378
      %p392 = scmp.eq.s32.totalorder %s36, 1
      %p393 = por %p391, %p392
      %p395 = scmp.ne.s32.totalorder %s378, %s394
      %p396 = scmp.eq.s32.totalorder %s36, 0
      %p397 = por %p395, %p396
      %p398 = scmp.le.s32.totalorder 1, %s30
      %p399 = scmp.lt.s32.totalorder %s30, 3
      %p400 = pnand %p398, %p399
      %p401 = pneg %p400
      // Predicated region
      $region9: #{tpu_custom_call.1} parent=5 // pred_check
        _
      $region10: #{tpu_custom_call.1} parent=5 // pred_check_branch
        %403 = sbr.rel (%p400) target = $region12
      $region11: #{tpu_custom_call.1} parent=5 // pred_region
        %s404 = ssub.s32 %s30, 1
        // Predicated region
        $region13: #{tpu_custom_call.1} parent=11 // pred_check
          %p405 = pneg %p89
        $region14: #{tpu_custom_call.1} parent=11 // pred_check_branch
          %407 = sbr.rel (%p405) target = $region16
        $region15: #{tpu_custom_call.1} parent=11 // pred_region
          %s409 = ssub.s32 2048, 2048
          %410 = vsyncadd [#allocation6], %s409
          %s411 = sshll.u32 [#allocation5], 4
          %s412 = int_to_ptr.vmem [resolvable:$true] %s411
          %417 = dma.hbm_to_vmem [thread:$0]  %s1, 2048, %s412, [#allocation6], 128, 128, 8
        $region16: #{tpu_custom_call.1} parent=11 // pred_fallthru
          _
        // Predicated region
        $region17: #{tpu_custom_call.1} parent=11 // pred_check
          %p418 = pneg %p110
        $region18: #{tpu_custom_call.1} parent=11 // pred_check_branch
          %420 = sbr.rel (%p418) target = $region20
        $region19: #{tpu_custom_call.1} parent=11 // pred_region
          _
        $region20: #{tpu_custom_call.1} parent=11 // pred_fallthru
          _
        // Predicated region
        $region21: #{tpu_custom_call.1} parent=11 // pred_check
          %p421 = pneg %p131
        $region22: #{tpu_custom_call.1} parent=11 // pred_check_branch
          %423 = sbr.rel (%p421) target = $region24
        $region23: #{tpu_custom_call.1} parent=11 // pred_region
          %s425 = ssub.s32 4096, 4096
          %426 = vsyncadd [#allocation6], %s425
          %s427 = sshll.u32 [#allocation7], 4
          %s428 = int_to_ptr.vmem [resolvable:$true] %s427
          %433 = dma.hbm_to_vmem [thread:$0]  %s3, 4096, %s428, [#allocation6], 256, 256, 16
        $region24: #{tpu_custom_call.1} parent=11 // pred_fallthru
          _
        // Predicated region
        $region25: #{tpu_custom_call.1} parent=11 // pred_check
          %p434 = pneg %p152
        $region26: #{tpu_custom_call.1} parent=11 // pred_check_branch
          %436 = sbr.rel (%p434) target = $region28
        $region27: #{tpu_custom_call.1} parent=11 // pred_region
          _
        $region28: #{tpu_custom_call.1} parent=11 // pred_fallthru
          _
        // Predicated region
        $region29: #{tpu_custom_call.1} parent=11 // pred_check
          %p437 = pneg %p173
        $region30: #{tpu_custom_call.1} parent=11 // pred_check_branch
          %439 = sbr.rel (%p437) target = $region32
        $region31: #{tpu_custom_call.1} parent=11 // pred_region
          %s441 = ssub.s32 2048, 2048
          %442 = vsyncadd [#allocation9], %s441
          %s443 = sshll.u32 [#allocation8], 4
          %s444 = int_to_ptr.vmem [resolvable:$true] %s443
          %449 = dma.hbm_to_vmem [thread:$0]  %s5, 2048, %s444, [#allocation9], 64, 64, 4
        $region32: #{tpu_custom_call.1} parent=11 // pred_fallthru
          _
        // Predicated region
        $region33: #{tpu_custom_call.1} parent=11 // pred_check
          %p450 = pneg %p194
        $region34: #{tpu_custom_call.1} parent=11 // pred_check_branch
          %452 = sbr.rel (%p450) target = $region36
        $region35: #{tpu_custom_call.1} parent=11 // pred_region
          _
        $region36: #{tpu_custom_call.1} parent=11 // pred_fallthru
          _
        // Predicated region
        $region37: #{tpu_custom_call.1} parent=11 // pred_check
          %p453 = pneg %p215
        $region38: #{tpu_custom_call.1} parent=11 // pred_check_branch
          %455 = sbr.rel (%p453) target = $region40
        $region39: #{tpu_custom_call.1} parent=11 // pred_region
          _
        $region40: #{tpu_custom_call.1} parent=11 // pred_fallthru
          _
        // Predicated region
        $region41: #{tpu_custom_call.1} parent=11 // pred_check
          %p456 = pneg %p236
        $region42: #{tpu_custom_call.1} parent=11 // pred_check_branch
          %458 = sbr.rel (%p456) target = $region44
        $region43: #{tpu_custom_call.1} parent=11 // pred_region
          _
        $region44: #{tpu_custom_call.1} parent=11 // pred_fallthru
          _
        // Predicated region
        $region45: #{tpu_custom_call.1} parent=11 // pred_check
          %p459 = pneg %p257
        $region46: #{tpu_custom_call.1} parent=11 // pred_check_branch
          %461 = sbr.rel (%p459) target = $region48
        $region47: #{tpu_custom_call.1} parent=11 // pred_region
          %s463 = ssub.s32 2048, 2048
          %464 = vsyncadd [#allocation9], %s463
          %s465 = sshll.u32 [#allocation10], 4
          %s466 = int_to_ptr.vmem [resolvable:$true] %s465
          %471 = dma.hbm_to_vmem [thread:$0]  %s9, 2048, %s466, [#allocation9], 128, 128, 8
        $region48: #{tpu_custom_call.1} parent=11 // pred_fallthru
          _
        // Predicated region
        $region49: #{tpu_custom_call.1} parent=11 // pred_check
          %p472 = pneg %p278
        $region50: #{tpu_custom_call.1} parent=11 // pred_check_branch
          %474 = sbr.rel (%p472) target = $region52
        $region51: #{tpu_custom_call.1} parent=11 // pred_region
          _
        $region52: #{tpu_custom_call.1} parent=11 // pred_fallthru
          _
        // Predicated region
        $region53: #{tpu_custom_call.1} parent=11 // pred_check
          %p475 = pneg %p299
        $region54: #{tpu_custom_call.1} parent=11 // pred_check_branch
          %477 = sbr.rel (%p475) target = $region56
        $region55: #{tpu_custom_call.1} parent=11 // pred_region
          %s479 = ssub.s32 2048, 2048
          %480 = vsyncadd [#allocation12], %s479
          %s481 = sshll.u32 [#allocation11], 4
          %s482 = int_to_ptr.vmem [resolvable:$true] %s481
          %487 = dma.hbm_to_vmem [thread:$0]  %s11, 2048, %s482, [#allocation12], 64, 64, 4
        $region56: #{tpu_custom_call.1} parent=11 // pred_fallthru
          _
        // Predicated region
        $region57: #{tpu_custom_call.1} parent=11 // pred_check
          %p488 = pneg %p320
        $region58: #{tpu_custom_call.1} parent=11 // pred_check_branch
          %490 = sbr.rel (%p488) target = $region60
        $region59: #{tpu_custom_call.1} parent=11 // pred_region
          _
        $region60: #{tpu_custom_call.1} parent=11 // pred_fallthru
          _
        // Predicated region
        $region61: #{tpu_custom_call.1} parent=11 // pred_check
          %p491 = pneg %p341
        $region62: #{tpu_custom_call.1} parent=11 // pred_check_branch
          %493 = sbr.rel (%p491) target = $region64
        $region63: #{tpu_custom_call.1} parent=11 // pred_region
          _
        $region64: #{tpu_custom_call.1} parent=11 // pred_fallthru
          _
        // Predicated region
        $region65: #{tpu_custom_call.1} parent=11 // pred_check
          %p494 = pneg %p362
        $region66: #{tpu_custom_call.1} parent=11 // pred_check_branch
          %496 = sbr.rel (%p494) target = $region68
        $region67: #{tpu_custom_call.1} parent=11 // pred_region
          _
        $region68: #{tpu_custom_call.1} parent=11 // pred_fallthru
          _
      $region12: #{tpu_custom_call.1} parent=5 // pred_fallthru
        _
      %p497 = scmp.lt.s32.totalorder %s30, 2
      // Predicated region
      $region69: #{tpu_custom_call.1} parent=5 // pred_check
        %p498 = pneg %p497
      $region70: #{tpu_custom_call.1} parent=5 // pred_check_branch
        %500 = sbr.rel (%p498) target = $region72
      $region71: #{tpu_custom_call.1} parent=5 // pred_region
        // Predicated region
        $region73: #{tpu_custom_call.1} parent=71 // pred_check
          %p501 = pneg %p62
        $region74: #{tpu_custom_call.1} parent=71 // pred_check_branch
          %503 = sbr.rel (%p501) target = $region76
        $region75: #{tpu_custom_call.1} parent=71 // pred_region
          %s504 = sand.u32 %s52, 1
          %s505 = scalar_lea.sflag [#allocation3], %s504
          %s506 = sand.u32 %s52, 1
          %s507 = smul.addr %s506, 256
          %s508 = scalar_lea.vmem [#allocation2], %s507
          %s510 = ssub.s32 4096, 4096
          %511 = vsyncadd %s505, %s510
          %s512 = smul.addr %s37, 32
          %s513 = smul.addr %s512, 128
          %s514 = scalar_lea.hbm %s0, %s513
          %s515 = sshll.u32 %s508, 4
          %s516 = int_to_ptr.vmem [resolvable:$true] %s515
          %521 = dma.hbm_to_vmem [thread:$0]  %s514, 4096, %s516, %s505, 128, 128, 8
        $region76: #{tpu_custom_call.1} parent=71 // pred_fallthru
          _
      $region72: #{tpu_custom_call.1} parent=5 // pred_fallthru
        _
      %p522 = scmp.le.s32.totalorder 1, %s30
      %p523 = scmp.lt.s32.totalorder %s30, 3
      %p524 = pnand %p522, %p523
      %p525 = pneg %p524
      // Predicated region
      $region77: #{tpu_custom_call.1} parent=5 // pred_check
        _
      $region78: #{tpu_custom_call.1} parent=5 // pred_check_branch
        %527 = sbr.rel (%p524) target = $region80
      $region79: #{tpu_custom_call.1} parent=5 // pred_region
        %s528 = ssub.s32 %s30, 1
        %s529 = sand.u32 %s55, 1
        %s530 = scalar_lea.sflag [#allocation3], %s529
        %s531 = sand.u32 %s55, 1
        %s532 = smul.addr %s531, 256
        %s533 = scalar_lea.vmem [#allocation2], %s532
        // Predicated region
        $region81: #{tpu_custom_call.1} parent=79 // pred_check
          %p534 = pneg %p68
        $region82: #{tpu_custom_call.1} parent=79 // pred_check_branch
          %536 = sbr.rel (%p534) target = $region84
        $region83: #{tpu_custom_call.1} parent=79 // pred_region
          %537 = dma.done %s530, 4096
        $region84: #{tpu_custom_call.1} parent=79 // pred_fallthru
          _
        // Predicated region
        $region85: #{tpu_custom_call.1} parent=79 // pred_check
          %p538 = pneg %p89
        $region86: #{tpu_custom_call.1} parent=79 // pred_check_branch
          %540 = sbr.rel (%p538) target = $region88
        $region87: #{tpu_custom_call.1} parent=79 // pred_region
          %541 = dma.done [#allocation6], 2048
        $region88: #{tpu_custom_call.1} parent=79 // pred_fallthru
          _
        // Predicated region
        $region89: #{tpu_custom_call.1} parent=79 // pred_check
          %p542 = pneg %p131
        $region90: #{tpu_custom_call.1} parent=79 // pred_check_branch
          %544 = sbr.rel (%p542) target = $region92
        $region91: #{tpu_custom_call.1} parent=79 // pred_region
          %545 = dma.done [#allocation6], 4096
        $region92: #{tpu_custom_call.1} parent=79 // pred_fallthru
          _
        // Predicated region
        $region93: #{tpu_custom_call.1} parent=79 // pred_check
          %p546 = pneg %p173
        $region94: #{tpu_custom_call.1} parent=79 // pred_check_branch
          %548 = sbr.rel (%p546) target = $region96
        $region95: #{tpu_custom_call.1} parent=79 // pred_region
          %549 = dma.done [#allocation9], 2048
        $region96: #{tpu_custom_call.1} parent=79 // pred_fallthru
          _
        // Predicated region
        $region97: #{tpu_custom_call.1} parent=79 // pred_check
          %p550 = pneg %p257
        $region98: #{tpu_custom_call.1} parent=79 // pred_check_branch
          %552 = sbr.rel (%p550) target = $region100
        $region99: #{tpu_custom_call.1} parent=79 // pred_region
          %553 = dma.done [#allocation9], 2048
        $region100: #{tpu_custom_call.1} parent=79 // pred_fallthru
          _
        // Predicated region
        $region101: #{tpu_custom_call.1} parent=79 // pred_check
          %p554 = pneg %p299
        $region102: #{tpu_custom_call.1} parent=79 // pred_check_branch
          %556 = sbr.rel (%p554) target = $region104
        $region103: #{tpu_custom_call.1} parent=79 // pred_region
          %557 = dma.done [#allocation12], 2048
        $region104: #{tpu_custom_call.1} parent=79 // pred_fallthru
          _
        %s558 = sand.u32 %s55, 1
        %s559 = scalar_lea.sflag [#allocation3], %s558
        %s560 = sand.u32 %s55, 1
        %s561 = smul.addr %s560, 256
        %s562 = scalar_lea.vmem [#allocation2], %s561
        %p563 = pneg %p68
        %p564 = pneg %p65
        %p565 = pneg %p89
        %p566 = pneg %p86
        %p567 = pneg %p110
        %p568 = pneg %p107
        %p569 = pneg %p131
        %p570 = pneg %p128
        %p571 = pneg %p152
        %p572 = pneg %p149
        %p573 = pneg %p173
        %p574 = pneg %p170
        %p575 = pneg %p194
        %p576 = pneg %p191
        %p577 = pneg %p215
        %p578 = pneg %p212
        %p579 = pneg %p236
        %p580 = pneg %p233
        %p581 = pneg %p257
        %p582 = pneg %p254
        %p583 = pneg %p278
        %p584 = pneg %p275
        %p585 = pneg %p299
        %p586 = pneg %p296
        %p587 = pneg %p320
        %p588 = pneg %p317
        %p589 = pneg %p341
        %p590 = pneg %p338
        %p591 = pneg %p362
        %p592 = pneg %p359
        %p593 = pneg %p390
        %p594 = pneg %p387
        %s595 = sand.u32 %s377, 1
        %s596 = scalar_lea.sflag [#allocation4], %s595
        %s597 = sand.u32 %s377, 1
        %s598 = smul.addr %s597, 256
        %s599 = scalar_lea.vmem [#allocation13], %s598
        %s600 = smul.u32 32, %s40
        %v602 = vld [vmem:[%s533] sm:$0xff]
        %v603 = vld [vmem:[%s533 + $0x8] sm:$0xff]
        %v604 = vld [vmem:[%s533 + $0x10] sm:$0xff]
        %v605 = vld [vmem:[%s533 + $0x18] sm:$0xff]
        %v606 = vld [vmem:[%s533 + $0x20] sm:$0xff]
        %v607 = vld [vmem:[%s533 + $0x28] sm:$0xff]
        %v608 = vld [vmem:[%s533 + $0x30] sm:$0xff]
        %v609 = vld [vmem:[%s533 + $0x38] sm:$0xff]
        %v610 = vld [vmem:[%s533 + $0x40] sm:$0xff]
        %v611 = vld [vmem:[%s533 + $0x48] sm:$0xff]
        %v612 = vld [vmem:[%s533 + $0x50] sm:$0xff]
        %v613 = vld [vmem:[%s533 + $0x58] sm:$0xff]
        %v614 = vld [vmem:[%s533 + $0x60] sm:$0xff]
        %v615 = vld [vmem:[%s533 + $0x68] sm:$0xff]
        %v616 = vld [vmem:[%s533 + $0x70] sm:$0xff]
        %v617 = vld [vmem:[%s533 + $0x78] sm:$0xff]
        %v618 = vld [vmem:[%s533 + $0x80] sm:$0xff]
        %v619 = vld [vmem:[%s533 + $0x88] sm:$0xff]
        %v620 = vld [vmem:[%s533 + $0x90] sm:$0xff]
        %v621 = vld [vmem:[%s533 + $0x98] sm:$0xff]
        %v622 = vld [vmem:[%s533 + $0xa0] sm:$0xff]
        %v623 = vld [vmem:[%s533 + $0xa8] sm:$0xff]
        %v624 = vld [vmem:[%s533 + $0xb0] sm:$0xff]
        %v625 = vld [vmem:[%s533 + $0xb8] sm:$0xff]
        %v626 = vld [vmem:[%s533 + $0xc0] sm:$0xff]
        %v627 = vld [vmem:[%s533 + $0xc8] sm:$0xff]
        %v628 = vld [vmem:[%s533 + $0xd0] sm:$0xff]
        %v629 = vld [vmem:[%s533 + $0xd8] sm:$0xff]
        %v630 = vld [vmem:[%s533 + $0xe0] sm:$0xff]
        %v631 = vld [vmem:[%s533 + $0xe8] sm:$0xff]
        %v632 = vld [vmem:[%s533 + $0xf0] sm:$0xff]
        %v633 = vld [vmem:[%s533 + $0xf8] sm:$0xff]
        %v634 = vpack.c.bf16 %v603, %v602
        %v635 = vpack.c.bf16 %v605, %v604
        %v636 = vpack.c.bf16 %v607, %v606
        %v637 = vpack.c.bf16 %v609, %v608
        %v638 = vpack.c.bf16 %v611, %v610
        %v639 = vpack.c.bf16 %v613, %v612
        %v640 = vpack.c.bf16 %v615, %v614
        %v641 = vpack.c.bf16 %v617, %v616
        %v642 = vpack.c.bf16 %v619, %v618
        %v643 = vpack.c.bf16 %v621, %v620
        %v644 = vpack.c.bf16 %v623, %v622
        %v645 = vpack.c.bf16 %v625, %v624
        %v646 = vpack.c.bf16 %v627, %v626
        %v647 = vpack.c.bf16 %v629, %v628
        %v648 = vpack.c.bf16 %v631, %v630
        %v649 = vpack.c.bf16 %v633, %v632
        %v650 = vld [vmem:[#allocation7] sm:$0xff]
        %v651 = vld [vmem:[#allocation7 + $0x8] sm:$0xff]
        %v652 = vld [vmem:[#allocation7 + $0x10] sm:$0xff]
        %v653 = vld [vmem:[#allocation7 + $0x18] sm:$0xff]
        %v654 = vld [vmem:[#allocation7 + $0x20] sm:$0xff]
        %v655 = vld [vmem:[#allocation7 + $0x28] sm:$0xff]
        %v656 = vld [vmem:[#allocation7 + $0x30] sm:$0xff]
        %v657 = vld [vmem:[#allocation7 + $0x38] sm:$0xff]
        %v658 = vld [vmem:[#allocation7 + $0x40] sm:$0xff]
        %v659 = vld [vmem:[#allocation7 + $0x48] sm:$0xff]
        %v660 = vld [vmem:[#allocation7 + $0x50] sm:$0xff]
        %v661 = vld [vmem:[#allocation7 + $0x58] sm:$0xff]
        %v662 = vld [vmem:[#allocation7 + $0x60] sm:$0xff]
        %v663 = vld [vmem:[#allocation7 + $0x68] sm:$0xff]
        %v664 = vld [vmem:[#allocation7 + $0x70] sm:$0xff]
        %v665 = vld [vmem:[#allocation7 + $0x78] sm:$0xff]
        %v666 = vld [vmem:[#allocation7 + $0x80] sm:$0xff]
        %v667 = vld [vmem:[#allocation7 + $0x88] sm:$0xff]
        %v668 = vld [vmem:[#allocation7 + $0x90] sm:$0xff]
        %v669 = vld [vmem:[#allocation7 + $0x98] sm:$0xff]
        %v670 = vld [vmem:[#allocation7 + $0xa0] sm:$0xff]
        %v671 = vld [vmem:[#allocation7 + $0xa8] sm:$0xff]
        %v672 = vld [vmem:[#allocation7 + $0xb0] sm:$0xff]
        %v673 = vld [vmem:[#allocation7 + $0xb8] sm:$0xff]
        %v674 = vld [vmem:[#allocation7 + $0xc0] sm:$0xff]
        %v675 = vld [vmem:[#allocation7 + $0xc8] sm:$0xff]
        %v676 = vld [vmem:[#allocation7 + $0xd0] sm:$0xff]
        %v677 = vld [vmem:[#allocation7 + $0xd8] sm:$0xff]
        %v678 = vld [vmem:[#allocation7 + $0xe0] sm:$0xff]
        %v679 = vld [vmem:[#allocation7 + $0xe8] sm:$0xff]
        %v680 = vld [vmem:[#allocation7 + $0xf0] sm:$0xff]
        %v681 = vld [vmem:[#allocation7 + $0xf8] sm:$0xff]
        %v682 = vld [vmem:[%s4] sm:$0xf]
        %v684 = vlaneseq
        %v685 = vshrl.u32 %v684, 7
        %v686 = vsub.s32 0, %v685
        %v687 = vrot.slane %v682, %v686
        %v688 = vlaneseq
        %v689 = vshrl.u32 %v688, 7
        %v690 = vsub.s32 1, %v689
        %v691 = vrot.slane %v682, %v690
        %v692 = vlaneseq
        %v693 = vshrl.u32 %v692, 7
        %v694 = vsub.s32 2, %v693
        %v695 = vrot.slane %v682, %v694
        %v696 = vlaneseq
        %v697 = vshrl.u32 %v696, 7
        %v698 = vsub.s32 3, %v697
        %v699 = vrot.slane %v682, %v698
        %v736 = vunpack.c.l.b16 %v650
        %v737 = vunpack.c.h.b16 %v650
        %v738 = vunpack.c.l.b16 %v651
        %v739 = vunpack.c.h.b16 %v651
        %v740 = vunpack.c.l.b16 %v652
        %v741 = vunpack.c.h.b16 %v652
        %v742 = vunpack.c.l.b16 %v653
        %v743 = vunpack.c.h.b16 %v653
        %v744 = vunpack.c.l.b16 %v654
        %v745 = vunpack.c.h.b16 %v654
        %v746 = vunpack.c.l.b16 %v655
        %v747 = vunpack.c.h.b16 %v655
        %v748 = vunpack.c.l.b16 %v656
        %v749 = vunpack.c.h.b16 %v656
        %v750 = vunpack.c.l.b16 %v657
        %v751 = vunpack.c.h.b16 %v657
        %v752 = vunpack.c.l.b16 %v658
        %v753 = vunpack.c.h.b16 %v658
        %v754 = vunpack.c.l.b16 %v659
        %v755 = vunpack.c.h.b16 %v659
        %v756 = vunpack.c.l.b16 %v660
        %v757 = vunpack.c.h.b16 %v660
        %v758 = vunpack.c.l.b16 %v661
        %v759 = vunpack.c.h.b16 %v661
        %v760 = vunpack.c.l.b16 %v662
        %v761 = vunpack.c.h.b16 %v662
        %v762 = vunpack.c.l.b16 %v663
        %v763 = vunpack.c.h.b16 %v663
        %v764 = vunpack.c.l.b16 %v664
        %v765 = vunpack.c.h.b16 %v664
        %v766 = vunpack.c.l.b16 %v665
        %v767 = vunpack.c.h.b16 %v665
        %v768 = vunpack.c.l.b16 %v666
        %v769 = vunpack.c.h.b16 %v666
        %v770 = vunpack.c.l.b16 %v667
        %v771 = vunpack.c.h.b16 %v667
        %v772 = vunpack.c.l.b16 %v668
        %v773 = vunpack.c.h.b16 %v668
        %v774 = vunpack.c.l.b16 %v669
        %v775 = vunpack.c.h.b16 %v669
        %v776 = vunpack.c.l.b16 %v670
        %v777 = vunpack.c.h.b16 %v670
        %v778 = vunpack.c.l.b16 %v671
        %v779 = vunpack.c.h.b16 %v671
        %v780 = vunpack.c.l.b16 %v672
        %v781 = vunpack.c.h.b16 %v672
        %v782 = vunpack.c.l.b16 %v673
        %v783 = vunpack.c.h.b16 %v673
        %v784 = vunpack.c.l.b16 %v674
        %v785 = vunpack.c.h.b16 %v674
        %v786 = vunpack.c.l.b16 %v675
        %v787 = vunpack.c.h.b16 %v675
        %v788 = vunpack.c.l.b16 %v676
        %v789 = vunpack.c.h.b16 %v676
        %v790 = vunpack.c.l.b16 %v677
        %v791 = vunpack.c.h.b16 %v677
        %v792 = vunpack.c.l.b16 %v678
        %v793 = vunpack.c.h.b16 %v678
        %v794 = vunpack.c.l.b16 %v679
        %v795 = vunpack.c.h.b16 %v679
        %v796 = vunpack.c.l.b16 %v680
        %v797 = vunpack.c.h.b16 %v680
        %v798 = vunpack.c.l.b16 %v681
        %v799 = vunpack.c.h.b16 %v681
        %v800 = vpack.c.b16 %v740, %v736
        %v801 = vpack.c.b16 %v741, %v737
        %v802 = vpack.c.b16 %v742, %v738
        %v803 = vpack.c.b16 %v743, %v739
        %v804 = vpack.c.b16 %v748, %v744
        %v805 = vpack.c.b16 %v749, %v745
        %v806 = vpack.c.b16 %v750, %v746
        %v807 = vpack.c.b16 %v751, %v747
        %v808 = vpack.c.b16 %v756, %v752
        %v809 = vpack.c.b16 %v757, %v753
        %v810 = vpack.c.b16 %v758, %v754
        %v811 = vpack.c.b16 %v759, %v755
        %v812 = vpack.c.b16 %v764, %v760
        %v813 = vpack.c.b16 %v765, %v761
        %v814 = vpack.c.b16 %v766, %v762
        %v815 = vpack.c.b16 %v767, %v763
        %v816 = vpack.c.b16 %v772, %v768
        %v817 = vpack.c.b16 %v773, %v769
        %v818 = vpack.c.b16 %v774, %v770
        %v819 = vpack.c.b16 %v775, %v771
        %v820 = vpack.c.b16 %v780, %v776
        %v821 = vpack.c.b16 %v781, %v777
        %v822 = vpack.c.b16 %v782, %v778
        %v823 = vpack.c.b16 %v783, %v779
        %v824 = vpack.c.b16 %v788, %v784
        %v825 = vpack.c.b16 %v789, %v785
        %v826 = vpack.c.b16 %v790, %v786
        %v827 = vpack.c.b16 %v791, %v787
        %v828 = vpack.c.b16 %v796, %v792
        %v829 = vpack.c.b16 %v797, %v793
        %v830 = vpack.c.b16 %v798, %v794
        %v831 = vpack.c.b16 %v799, %v795
        %864 = vmatprep.subr.bf16.mxu0 %v829
        %865 = vmatpush1.bf16.msra.mxu0 %v828
        %866 = vmatprep.subr.bf16.mxu0 %v825
        %867 = vmatpush1.bf16.msra.mxu0 %v824
        %868 = vmatprep.subr.bf16.mxu0 %v821
        %869 = vmatpush1.bf16.msra.mxu0 %v820
        %870 = vmatprep.subr.bf16.mxu0 %v817
        %871 = vmatpush1.bf16.msra.mxu0 %v816
        %872 = vmatprep.subr.bf16.mxu0 %v813
        %873 = vmatpush1.bf16.msra.mxu0 %v812
        %874 = vmatprep.subr.bf16.mxu0 %v809
        %875 = vmatpush1.bf16.msra.mxu0 %v808
        %876 = vmatprep.subr.bf16.mxu0 %v805
        %877 = vmatpush1.bf16.msra.mxu0 %v804
        %878 = vmatprep.subr.bf16.mxu0 %v801
        %879 = vmatpush1.bf16.msra.mxu0 %v800
        %880 = vmatprep.subr.bf16.mxu0 0
        %881 = vmatpush2.bf16.msra.mxu0 0
        %882 = vmatprep.subr.bf16.mxu0 0
        %883 = vmatpush2.bf16.msra.mxu0 0
        %884 = vmatprep.subr.bf16.mxu0 0
        %885 = vmatpush2.bf16.msra.mxu0 0
        %886 = vmatprep.subr.bf16.mxu0 0
        %887 = vmatpush2.bf16.msra.mxu0 0
        %888 = vmatprep.subr.bf16.mxu0 0
        %889 = vmatpush2.bf16.msra.mxu0 0
        %890 = vmatprep.subr.bf16.mxu0 0
        %891 = vmatpush2.bf16.msra.mxu0 0
        %892 = vmatprep.subr.bf16.mxu0 0
        %893 = vmatpush2.bf16.msra.mxu0 0
        %894 = vmatprep.subr.bf16.mxu0 0
        %895 = vmatpush2.bf16.msra.mxu0 0
        %896 = vmatprep.mubr.bf16.mxu0 0
        %897 = vmatmul.mubr.bf16.gmra.mxu0 %v634
        %v898 = vpop.f32.mrf.mxu0
        %v899 = vadd.f32 %v687, %v898
        %v900 = vpop.f32.mrf.mxu0
        %v901 = vadd.f32 %v691, %v900
        %v902 = vpop.f32.mrf.mxu0
        %v903 = vadd.f32 %v687, %v902
        %v904 = vpop.f32.mrf.mxu0
        %v905 = vadd.f32 %v691, %v904
        %906 = vmatprep.mubr.bf16.mxu0 0
        %907 = vmatmul.mubr.bf16.gmra.mxu0 %v635
        %v908 = vpop.f32.mrf.mxu0
        %v909 = vadd.f32 %v687, %v908
        %v910 = vpop.f32.mrf.mxu0
        %v911 = vadd.f32 %v691, %v910
        %v912 = vpop.f32.mrf.mxu0
        %v913 = vadd.f32 %v687, %v912
        %v914 = vpop.f32.mrf.mxu0
        %v915 = vadd.f32 %v691, %v914
        %916 = vmatprep.mubr.bf16.mxu0 0
        %917 = vmatmul.mubr.bf16.gmra.mxu0 %v636
        %v918 = vpop.f32.mrf.mxu0
        %v919 = vadd.f32 %v687, %v918
        %v920 = vpop.f32.mrf.mxu0
        %v921 = vadd.f32 %v691, %v920
        %v922 = vpop.f32.mrf.mxu0
        %v923 = vadd.f32 %v687, %v922
        %v924 = vpop.f32.mrf.mxu0
        %v925 = vadd.f32 %v691, %v924
        %926 = vmatprep.mubr.bf16.mxu0 0
        %927 = vmatmul.mubr.bf16.gmra.mxu0 %v637
        %v928 = vpop.f32.mrf.mxu0
        %v929 = vadd.f32 %v687, %v928
        %v930 = vpop.f32.mrf.mxu0
        %v931 = vadd.f32 %v691, %v930
        %v932 = vpop.f32.mrf.mxu0
        %v933 = vadd.f32 %v687, %v932
        %v934 = vpop.f32.mrf.mxu0
        %v935 = vadd.f32 %v691, %v934
        %936 = vmatprep.mubr.bf16.mxu0 0
        %937 = vmatmul.mubr.bf16.gmra.mxu0 %v638
        %v938 = vpop.f32.mrf.mxu0
        %v939 = vadd.f32 %v687, %v938
        %v940 = vpop.f32.mrf.mxu0
        %v941 = vadd.f32 %v691, %v940
        %v942 = vpop.f32.mrf.mxu0
        %v943 = vadd.f32 %v687, %v942
        %v944 = vpop.f32.mrf.mxu0
        %v945 = vadd.f32 %v691, %v944
        %946 = vmatprep.mubr.bf16.mxu0 0
        %947 = vmatmul.mubr.bf16.gmra.mxu0 %v639
        %v948 = vpop.f32.mrf.mxu0
        %v949 = vadd.f32 %v687, %v948
        %v950 = vpop.f32.mrf.mxu0
        %v951 = vadd.f32 %v691, %v950
        %v952 = vpop.f32.mrf.mxu0
        %v953 = vadd.f32 %v687, %v952
        %v954 = vpop.f32.mrf.mxu0
        %v955 = vadd.f32 %v691, %v954
        %956 = vmatprep.mubr.bf16.mxu0 0
        %957 = vmatmul.mubr.bf16.gmra.mxu0 %v640
        %v958 = vpop.f32.mrf.mxu0
        %v959 = vadd.f32 %v687, %v958
        %v960 = vpop.f32.mrf.mxu0
        %v961 = vadd.f32 %v691, %v960
        %v962 = vpop.f32.mrf.mxu0
        %v963 = vadd.f32 %v687, %v962
        %v964 = vpop.f32.mrf.mxu0
        %v965 = vadd.f32 %v691, %v964
        %966 = vmatprep.mubr.bf16.mxu0 0
        %967 = vmatmul.mubr.bf16.gmra.mxu0 %v641
        %v968 = vpop.f32.mrf.mxu0
        %v969 = vadd.f32 %v687, %v968
        %v970 = vpop.f32.mrf.mxu0
        %v971 = vadd.f32 %v691, %v970
        %v972 = vpop.f32.mrf.mxu0
        %v973 = vadd.f32 %v687, %v972
        %v974 = vpop.f32.mrf.mxu0
        %v975 = vadd.f32 %v691, %v974
        %976 = vmatprep.mubr.bf16.mxu0 0
        %977 = vmatmul.mubr.bf16.gmra.mxu0 %v642
        %v978 = vpop.f32.mrf.mxu0
        %v979 = vadd.f32 %v687, %v978
        %v980 = vpop.f32.mrf.mxu0
        %v981 = vadd.f32 %v691, %v980
        %v982 = vpop.f32.mrf.mxu0
        %v983 = vadd.f32 %v687, %v982
        %v984 = vpop.f32.mrf.mxu0
        %v985 = vadd.f32 %v691, %v984
        %986 = vmatprep.mubr.bf16.mxu0 0
        %987 = vmatmul.mubr.bf16.gmra.mxu0 %v643
        %v988 = vpop.f32.mrf.mxu0
        %v989 = vadd.f32 %v687, %v988
        %v990 = vpop.f32.mrf.mxu0
        %v991 = vadd.f32 %v691, %v990
        %v992 = vpop.f32.mrf.mxu0
        %v993 = vadd.f32 %v687, %v992
        %v994 = vpop.f32.mrf.mxu0
        %v995 = vadd.f32 %v691, %v994
        %996 = vmatprep.mubr.bf16.mxu0 0
        %997 = vmatmul.mubr.bf16.gmra.mxu0 %v644
        %v998 = vpop.f32.mrf.mxu0
        %v999 = vadd.f32 %v687, %v998
        %v1000 = vpop.f32.mrf.mxu0
        %v1001 = vadd.f32 %v691, %v1000
        %v1002 = vpop.f32.mrf.mxu0
        %v1003 = vadd.f32 %v687, %v1002
        %v1004 = vpop.f32.mrf.mxu0
        %v1005 = vadd.f32 %v691, %v1004
        %1006 = vmatprep.mubr.bf16.mxu0 0
        %1007 = vmatmul.mubr.bf16.gmra.mxu0 %v645
        %v1008 = vpop.f32.mrf.mxu0
        %v1009 = vadd.f32 %v687, %v1008
        %v1010 = vpop.f32.mrf.mxu0
        %v1011 = vadd.f32 %v691, %v1010
        %v1012 = vpop.f32.mrf.mxu0
        %v1013 = vadd.f32 %v687, %v1012
        %v1014 = vpop.f32.mrf.mxu0
        %v1015 = vadd.f32 %v691, %v1014
        %1016 = vmatprep.mubr.bf16.mxu0 0
        %1017 = vmatmul.mubr.bf16.gmra.mxu0 %v646
        %v1018 = vpop.f32.mrf.mxu0
        %v1019 = vadd.f32 %v687, %v1018
        %v1020 = vpop.f32.mrf.mxu0
        %v1021 = vadd.f32 %v691, %v1020
        %v1022 = vpop.f32.mrf.mxu0
        %v1023 = vadd.f32 %v687, %v1022
        %v1024 = vpop.f32.mrf.mxu0
        %v1025 = vadd.f32 %v691, %v1024
        %1026 = vmatprep.mubr.bf16.mxu0 0
        %1027 = vmatmul.mubr.bf16.gmra.mxu0 %v647
        %v1028 = vpop.f32.mrf.mxu0
        %v1029 = vadd.f32 %v687, %v1028
        %v1030 = vpop.f32.mrf.mxu0
        %v1031 = vadd.f32 %v691, %v1030
        %v1032 = vpop.f32.mrf.mxu0
        %v1033 = vadd.f32 %v687, %v1032
        %v1034 = vpop.f32.mrf.mxu0
        %v1035 = vadd.f32 %v691, %v1034
        %1036 = vmatprep.mubr.bf16.mxu0 0
        %1037 = vmatmul.mubr.bf16.gmra.mxu0 %v648
        %v1038 = vpop.f32.mrf.mxu0
        %v1039 = vadd.f32 %v687, %v1038
        %v1040 = vpop.f32.mrf.mxu0
        %v1041 = vadd.f32 %v691, %v1040
        %v1042 = vpop.f32.mrf.mxu0
        %v1043 = vadd.f32 %v687, %v1042
        %v1044 = vpop.f32.mrf.mxu0
        %v1045 = vadd.f32 %v691, %v1044
        %1046 = vmatprep.mubr.bf16.mxu0 0
        %1047 = vmatmul.mubr.bf16.gmra.mxu0 %v649
        %v1048 = vpop.f32.mrf.mxu0
        %v1049 = vadd.f32 %v687, %v1048
        %v1050 = vpop.f32.mrf.mxu0
        %v1051 = vadd.f32 %v691, %v1050
        %v1052 = vpop.f32.mrf.mxu0
        %v1053 = vadd.f32 %v687, %v1052
        %v1054 = vpop.f32.mrf.mxu0
        %v1055 = vadd.f32 %v691, %v1054
        %1056 = vdwg.mxu0
        %1057 = vmatprep.subr.bf16.mxu0 %v831
        %1058 = vmatpush1.bf16.msra.mxu0 %v830
        %1059 = vmatprep.subr.bf16.mxu0 %v827
        %1060 = vmatpush1.bf16.msra.mxu0 %v826
        %1061 = vmatprep.subr.bf16.mxu0 %v823
        %1062 = vmatpush1.bf16.msra.mxu0 %v822
        %1063 = vmatprep.subr.bf16.mxu0 %v819
        %1064 = vmatpush1.bf16.msra.mxu0 %v818
        %1065 = vmatprep.subr.bf16.mxu0 %v815
        %1066 = vmatpush1.bf16.msra.mxu0 %v814
        %1067 = vmatprep.subr.bf16.mxu0 %v811
        %1068 = vmatpush1.bf16.msra.mxu0 %v810
        %1069 = vmatprep.subr.bf16.mxu0 %v807
        %1070 = vmatpush1.bf16.msra.mxu0 %v806
        %1071 = vmatprep.subr.bf16.mxu0 %v803
        %1072 = vmatpush1.bf16.msra.mxu0 %v802
        %1073 = vmatprep.subr.bf16.mxu0 0
        %1074 = vmatpush2.bf16.msra.mxu0 0
        %1075 = vmatprep.subr.bf16.mxu0 0
        %1076 = vmatpush2.bf16.msra.mxu0 0
        %1077 = vmatprep.subr.bf16.mxu0 0
        %1078 = vmatpush2.bf16.msra.mxu0 0
        %1079 = vmatprep.subr.bf16.mxu0 0
        %1080 = vmatpush2.bf16.msra.mxu0 0
        %1081 = vmatprep.subr.bf16.mxu0 0
        %1082 = vmatpush2.bf16.msra.mxu0 0
        %1083 = vmatprep.subr.bf16.mxu0 0
        %1084 = vmatpush2.bf16.msra.mxu0 0
        %1085 = vmatprep.subr.bf16.mxu0 0
        %1086 = vmatpush2.bf16.msra.mxu0 0
        %1087 = vmatprep.subr.bf16.mxu0 0
        %1088 = vmatpush2.bf16.msra.mxu0 0
        %1089 = vmatprep.mubr.bf16.mxu0 0
        %1090 = vmatmul.mubr.bf16.gmra.mxu0 %v634
        %v1091 = vpop.f32.mrf.mxu0
        %v1092 = vadd.f32 %v695, %v1091
        %v1093 = vpop.f32.mrf.mxu0
        %v1094 = vadd.f32 %v699, %v1093
        %v1095 = vpop.f32.mrf.mxu0
        %v1096 = vadd.f32 %v695, %v1095
        %v1097 = vpop.f32.mrf.mxu0
        %v1098 = vadd.f32 %v699, %v1097
        %1099 = vmatprep.mubr.bf16.mxu0 0
        %1100 = vmatmul.mubr.bf16.gmra.mxu0 %v635
        %v1101 = vpop.f32.mrf.mxu0
        %v1102 = vadd.f32 %v695, %v1101
        %v1103 = vpop.f32.mrf.mxu0
        %v1104 = vadd.f32 %v699, %v1103
        %v1105 = vpop.f32.mrf.mxu0
        %v1106 = vadd.f32 %v695, %v1105
        %v1107 = vpop.f32.mrf.mxu0
        %v1108 = vadd.f32 %v699, %v1107
        %1109 = vmatprep.mubr.bf16.mxu0 0
        %1110 = vmatmul.mubr.bf16.gmra.mxu0 %v636
        %v1111 = vpop.f32.mrf.mxu0
        %v1112 = vadd.f32 %v695, %v1111
        %v1113 = vpop.f32.mrf.mxu0
        %v1114 = vadd.f32 %v699, %v1113
        %v1115 = vpop.f32.mrf.mxu0
        %v1116 = vadd.f32 %v695, %v1115
        %v1117 = vpop.f32.mrf.mxu0
        %v1118 = vadd.f32 %v699, %v1117
        %1119 = vmatprep.mubr.bf16.mxu0 0
        %1120 = vmatmul.mubr.bf16.gmra.mxu0 %v637
        %v1121 = vpop.f32.mrf.mxu0
        %v1122 = vadd.f32 %v695, %v1121
        %v1123 = vpop.f32.mrf.mxu0
        %v1124 = vadd.f32 %v699, %v1123
        %v1125 = vpop.f32.mrf.mxu0
        %v1126 = vadd.f32 %v695, %v1125
        %v1127 = vpop.f32.mrf.mxu0
        %v1128 = vadd.f32 %v699, %v1127
        %1129 = vmatprep.mubr.bf16.mxu0 0
        %1130 = vmatmul.mubr.bf16.gmra.mxu0 %v638
        %v1131 = vpop.f32.mrf.mxu0
        %v1132 = vadd.f32 %v695, %v1131
        %v1133 = vpop.f32.mrf.mxu0
        %v1134 = vadd.f32 %v699, %v1133
        %v1135 = vpop.f32.mrf.mxu0
        %v1136 = vadd.f32 %v695, %v1135
        %v1137 = vpop.f32.mrf.mxu0
        %v1138 = vadd.f32 %v699, %v1137
        %1139 = vmatprep.mubr.bf16.mxu0 0
        %1140 = vmatmul.mubr.bf16.gmra.mxu0 %v639
        %v1141 = vpop.f32.mrf.mxu0
        %v1142 = vadd.f32 %v695, %v1141
        %v1143 = vpop.f32.mrf.mxu0
        %v1144 = vadd.f32 %v699, %v1143
        %v1145 = vpop.f32.mrf.mxu0
        %v1146 = vadd.f32 %v695, %v1145
        %v1147 = vpop.f32.mrf.mxu0
        %v1148 = vadd.f32 %v699, %v1147
        %1149 = vmatprep.mubr.bf16.mxu0 0
        %1150 = vmatmul.mubr.bf16.gmra.mxu0 %v640
        %v1151 = vpop.f32.mrf.mxu0
        %v1152 = vadd.f32 %v695, %v1151
        %v1153 = vpop.f32.mrf.mxu0
        %v1154 = vadd.f32 %v699, %v1153
        %v1155 = vpop.f32.mrf.mxu0
        %v1156 = vadd.f32 %v695, %v1155
        %v1157 = vpop.f32.mrf.mxu0
        %v1158 = vadd.f32 %v699, %v1157
        %1159 = vmatprep.mubr.bf16.mxu0 0
        %1160 = vmatmul.mubr.bf16.gmra.mxu0 %v641
        %v1161 = vpop.f32.mrf.mxu0
        %v1162 = vadd.f32 %v695, %v1161
        %v1163 = vpop.f32.mrf.mxu0
        %v1164 = vadd.f32 %v699, %v1163
        %v1165 = vpop.f32.mrf.mxu0
        %v1166 = vadd.f32 %v695, %v1165
        %v1167 = vpop.f32.mrf.mxu0
        %v1168 = vadd.f32 %v699, %v1167
        %1169 = vmatprep.mubr.bf16.mxu0 0
        %1170 = vmatmul.mubr.bf16.gmra.mxu0 %v642
        %v1171 = vpop.f32.mrf.mxu0
        %v1172 = vadd.f32 %v695, %v1171
        %v1173 = vpop.f32.mrf.mxu0
        %v1174 = vadd.f32 %v699, %v1173
        %v1175 = vpop.f32.mrf.mxu0
        %v1176 = vadd.f32 %v695, %v1175
        %v1177 = vpop.f32.mrf.mxu0
        %v1178 = vadd.f32 %v699, %v1177
        %1179 = vmatprep.mubr.bf16.mxu0 0
        %1180 = vmatmul.mubr.bf16.gmra.mxu0 %v643
        %v1181 = vpop.f32.mrf.mxu0
        %v1182 = vadd.f32 %v695, %v1181
        %v1183 = vpop.f32.mrf.mxu0
        %v1184 = vadd.f32 %v699, %v1183
        %v1185 = vpop.f32.mrf.mxu0
        %v1186 = vadd.f32 %v695, %v1185
        %v1187 = vpop.f32.mrf.mxu0
        %v1188 = vadd.f32 %v699, %v1187
        %1189 = vmatprep.mubr.bf16.mxu0 0
        %1190 = vmatmul.mubr.bf16.gmra.mxu0 %v644
        %v1191 = vpop.f32.mrf.mxu0
        %v1192 = vadd.f32 %v695, %v1191
        %v1193 = vpop.f32.mrf.mxu0
        %v1194 = vadd.f32 %v699, %v1193
        %v1195 = vpop.f32.mrf.mxu0
        %v1196 = vadd.f32 %v695, %v1195
        %v1197 = vpop.f32.mrf.mxu0
        %v1198 = vadd.f32 %v699, %v1197
        %1199 = vmatprep.mubr.bf16.mxu0 0
        %1200 = vmatmul.mubr.bf16.gmra.mxu0 %v645
        %v1201 = vpop.f32.mrf.mxu0
        %v1202 = vadd.f32 %v695, %v1201
        %v1203 = vpop.f32.mrf.mxu0
        %v1204 = vadd.f32 %v699, %v1203
        %v1205 = vpop.f32.mrf.mxu0
        %v1206 = vadd.f32 %v695, %v1205
        %v1207 = vpop.f32.mrf.mxu0
        %v1208 = vadd.f32 %v699, %v1207
        %1209 = vmatprep.mubr.bf16.mxu0 0
        %1210 = vmatmul.mubr.bf16.gmra.mxu0 %v646
        %v1211 = vpop.f32.mrf.mxu0
        %v1212 = vadd.f32 %v695, %v1211
        %v1213 = vpop.f32.mrf.mxu0
        %v1214 = vadd.f32 %v699, %v1213
        %v1215 = vpop.f32.mrf.mxu0
        %v1216 = vadd.f32 %v695, %v1215
        %v1217 = vpop.f32.mrf.mxu0
        %v1218 = vadd.f32 %v699, %v1217
        %1219 = vmatprep.mubr.bf16.mxu0 0
        %1220 = vmatmul.mubr.bf16.gmra.mxu0 %v647
        %v1221 = vpop.f32.mrf.mxu0
        %v1222 = vadd.f32 %v695, %v1221
        %v1223 = vpop.f32.mrf.mxu0
        %v1224 = vadd.f32 %v699, %v1223
        %v1225 = vpop.f32.mrf.mxu0
        %v1226 = vadd.f32 %v695, %v1225
        %v1227 = vpop.f32.mrf.mxu0
        %v1228 = vadd.f32 %v699, %v1227
        %1229 = vmatprep.mubr.bf16.mxu0 0
        %1230 = vmatmul.mubr.bf16.gmra.mxu0 %v648
        %v1231 = vpop.f32.mrf.mxu0
        %v1232 = vadd.f32 %v695, %v1231
        %v1233 = vpop.f32.mrf.mxu0
        %v1234 = vadd.f32 %v699, %v1233
        %v1235 = vpop.f32.mrf.mxu0
        %v1236 = vadd.f32 %v695, %v1235
        %v1237 = vpop.f32.mrf.mxu0
        %v1238 = vadd.f32 %v699, %v1237
        %1239 = vmatprep.mubr.bf16.mxu0 0
        %1240 = vmatmul.mubr.bf16.gmra.mxu0 %v649
        %v1241 = vpop.f32.mrf.mxu0
        %v1242 = vadd.f32 %v695, %v1241
        %v1243 = vpop.f32.mrf.mxu0
        %v1244 = vadd.f32 %v699, %v1243
        %v1245 = vpop.f32.mrf.mxu0
        %v1246 = vadd.f32 %v695, %v1245
        %v1247 = vpop.f32.mrf.mxu0
        %v1248 = vadd.f32 %v699, %v1247
        %1249 = vdwg.mxu0
        %v1250 = vpack.c.bf16 %v903, %v899
        %v1251 = vpack.c.bf16 %v905, %v901
        %v1252 = vpack.c.bf16 %v1096, %v1092
        %v1253 = vpack.c.bf16 %v1098, %v1094
        %v1254 = vpack.c.bf16 %v913, %v909
        %v1255 = vpack.c.bf16 %v915, %v911
        %v1256 = vpack.c.bf16 %v1106, %v1102
        %v1257 = vpack.c.bf16 %v1108, %v1104
        %v1258 = vpack.c.bf16 %v923, %v919
        %v1259 = vpack.c.bf16 %v925, %v921
        %v1260 = vpack.c.bf16 %v1116, %v1112
        %v1261 = vpack.c.bf16 %v1118, %v1114
        %v1262 = vpack.c.bf16 %v933, %v929
        %v1263 = vpack.c.bf16 %v935, %v931
        %v1264 = vpack.c.bf16 %v1126, %v1122
        %v1265 = vpack.c.bf16 %v1128, %v1124
        %v1266 = vpack.c.bf16 %v943, %v939
        %v1267 = vpack.c.bf16 %v945, %v941
        %v1268 = vpack.c.bf16 %v1136, %v1132
        %v1269 = vpack.c.bf16 %v1138, %v1134
        %v1270 = vpack.c.bf16 %v953, %v949
        %v1271 = vpack.c.bf16 %v955, %v951
        %v1272 = vpack.c.bf16 %v1146, %v1142
        %v1273 = vpack.c.bf16 %v1148, %v1144
        %v1274 = vpack.c.bf16 %v963, %v959
        %v1275 = vpack.c.bf16 %v965, %v961
        %v1276 = vpack.c.bf16 %v1156, %v1152
        %v1277 = vpack.c.bf16 %v1158, %v1154
        %v1278 = vpack.c.bf16 %v973, %v969
        %v1279 = vpack.c.bf16 %v975, %v971
        %v1280 = vpack.c.bf16 %v1166, %v1162
        %v1281 = vpack.c.bf16 %v1168, %v1164
        %v1282 = vpack.c.bf16 %v983, %v979
        %v1283 = vpack.c.bf16 %v985, %v981
        %v1284 = vpack.c.bf16 %v1176, %v1172
        %v1285 = vpack.c.bf16 %v1178, %v1174
        %v1286 = vpack.c.bf16 %v993, %v989
        %v1287 = vpack.c.bf16 %v995, %v991
        %v1288 = vpack.c.bf16 %v1186, %v1182
        %v1289 = vpack.c.bf16 %v1188, %v1184
        %v1290 = vpack.c.bf16 %v1003, %v999
        %v1291 = vpack.c.bf16 %v1005, %v1001
        %v1292 = vpack.c.bf16 %v1196, %v1192
        %v1293 = vpack.c.bf16 %v1198, %v1194
        %v1294 = vpack.c.bf16 %v1013, %v1009
        %v1295 = vpack.c.bf16 %v1015, %v1011
        %v1296 = vpack.c.bf16 %v1206, %v1202
        %v1297 = vpack.c.bf16 %v1208, %v1204
        %v1298 = vpack.c.bf16 %v1023, %v1019
        %v1299 = vpack.c.bf16 %v1025, %v1021
        %v1300 = vpack.c.bf16 %v1216, %v1212
        %v1301 = vpack.c.bf16 %v1218, %v1214
        %v1302 = vpack.c.bf16 %v1033, %v1029
        %v1303 = vpack.c.bf16 %v1035, %v1031
        %v1304 = vpack.c.bf16 %v1226, %v1222
        %v1305 = vpack.c.bf16 %v1228, %v1224
        %v1306 = vpack.c.bf16 %v1043, %v1039
        %v1307 = vpack.c.bf16 %v1045, %v1041
        %v1308 = vpack.c.bf16 %v1236, %v1232
        %v1309 = vpack.c.bf16 %v1238, %v1234
        %v1310 = vpack.c.bf16 %v1053, %v1049
        %v1311 = vpack.c.bf16 %v1055, %v1051
        %v1312 = vpack.c.bf16 %v1246, %v1242
        %v1313 = vpack.c.bf16 %v1248, %v1244
        %v1314 = vld [vmem:[#allocation5] sm:$0xff]
        %v1315 = vld [vmem:[#allocation5 + $0x8] sm:$0xff]
        %v1316 = vld [vmem:[#allocation5 + $0x10] sm:$0xff]
        %v1317 = vld [vmem:[#allocation5 + $0x18] sm:$0xff]
        %v1318 = vld [vmem:[#allocation5 + $0x20] sm:$0xff]
        %v1319 = vld [vmem:[#allocation5 + $0x28] sm:$0xff]
        %v1320 = vld [vmem:[#allocation5 + $0x30] sm:$0xff]
        %v1321 = vld [vmem:[#allocation5 + $0x38] sm:$0xff]
        %v1322 = vld [vmem:[#allocation5 + $0x40] sm:$0xff]
        %v1323 = vld [vmem:[#allocation5 + $0x48] sm:$0xff]
        %v1324 = vld [vmem:[#allocation5 + $0x50] sm:$0xff]
        %v1325 = vld [vmem:[#allocation5 + $0x58] sm:$0xff]
        %v1326 = vld [vmem:[#allocation5 + $0x60] sm:$0xff]
        %v1327 = vld [vmem:[#allocation5 + $0x68] sm:$0xff]
        %v1328 = vld [vmem:[#allocation5 + $0x70] sm:$0xff]
        %v1329 = vld [vmem:[#allocation5 + $0x78] sm:$0xff]
        %v1330 = vld [vmem:[%s2] sm:$0x3]
        %v1332 = vlaneseq
        %v1333 = vshrl.u32 %v1332, 7
        %v1334 = vsub.s32 0, %v1333
        %v1335 = vrot.slane %v1330, %v1334
        %v1336 = vlaneseq
        %v1337 = vshrl.u32 %v1336, 7
        %v1338 = vsub.s32 1, %v1337
        %v1339 = vrot.slane %v1330, %v1338
        %v1358 = vunpack.c.l.b16 %v1314
        %v1359 = vunpack.c.h.b16 %v1314
        %v1360 = vunpack.c.l.b16 %v1315
        %v1361 = vunpack.c.h.b16 %v1315
        %v1362 = vunpack.c.l.b16 %v1316
        %v1363 = vunpack.c.h.b16 %v1316
        %v1364 = vunpack.c.l.b16 %v1317
        %v1365 = vunpack.c.h.b16 %v1317
        %v1366 = vunpack.c.l.b16 %v1318
        %v1367 = vunpack.c.h.b16 %v1318
        %v1368 = vunpack.c.l.b16 %v1319
        %v1369 = vunpack.c.h.b16 %v1319
        %v1370 = vunpack.c.l.b16 %v1320
        %v1371 = vunpack.c.h.b16 %v1320
        %v1372 = vunpack.c.l.b16 %v1321
        %v1373 = vunpack.c.h.b16 %v1321
        %v1374 = vunpack.c.l.b16 %v1322
        %v1375 = vunpack.c.h.b16 %v1322
        %v1376 = vunpack.c.l.b16 %v1323
        %v1377 = vunpack.c.h.b16 %v1323
        %v1378 = vunpack.c.l.b16 %v1324
        %v1379 = vunpack.c.h.b16 %v1324
        %v1380 = vunpack.c.l.b16 %v1325
        %v1381 = vunpack.c.h.b16 %v1325
        %v1382 = vunpack.c.l.b16 %v1326
        %v1383 = vunpack.c.h.b16 %v1326
        %v1384 = vunpack.c.l.b16 %v1327
        %v1385 = vunpack.c.h.b16 %v1327
        %v1386 = vunpack.c.l.b16 %v1328
        %v1387 = vunpack.c.h.b16 %v1328
        %v1388 = vunpack.c.l.b16 %v1329
        %v1389 = vunpack.c.h.b16 %v1329
        %v1390 = vpack.c.b16 %v1360, %v1358
        %v1391 = vpack.c.b16 %v1361, %v1359
        %v1392 = vpack.c.b16 %v1364, %v1362
        %v1393 = vpack.c.b16 %v1365, %v1363
        %v1394 = vpack.c.b16 %v1368, %v1366
        %v1395 = vpack.c.b16 %v1369, %v1367
        %v1396 = vpack.c.b16 %v1372, %v1370
        %v1397 = vpack.c.b16 %v1373, %v1371
        %v1398 = vpack.c.b16 %v1376, %v1374
        %v1399 = vpack.c.b16 %v1377, %v1375
        %v1400 = vpack.c.b16 %v1380, %v1378
        %v1401 = vpack.c.b16 %v1381, %v1379
        %v1402 = vpack.c.b16 %v1384, %v1382
        %v1403 = vpack.c.b16 %v1385, %v1383
        %v1404 = vpack.c.b16 %v1388, %v1386
        %v1405 = vpack.c.b16 %v1389, %v1387
        %1422 = vmatprep.subr.bf16.mxu0 %v1405
        %1423 = vmatpush1.bf16.msra.mxu0 %v1404
        %1424 = vmatprep.subr.bf16.mxu0 %v1403
        %1425 = vmatpush1.bf16.msra.mxu0 %v1402
        %1426 = vmatprep.subr.bf16.mxu0 %v1401
        %1427 = vmatpush1.bf16.msra.mxu0 %v1400
        %1428 = vmatprep.subr.bf16.mxu0 %v1399
        %1429 = vmatpush1.bf16.msra.mxu0 %v1398
        %1430 = vmatprep.subr.bf16.mxu0 %v1397
        %1431 = vmatpush1.bf16.msra.mxu0 %v1396
        %1432 = vmatprep.subr.bf16.mxu0 %v1395
        %1433 = vmatpush1.bf16.msra.mxu0 %v1394
        %1434 = vmatprep.subr.bf16.mxu0 %v1393
        %1435 = vmatpush1.bf16.msra.mxu0 %v1392
        %1436 = vmatprep.subr.bf16.mxu0 %v1391
        %1437 = vmatpush1.bf16.msra.mxu0 %v1390
        %1438 = vmatprep.subr.bf16.mxu0 0
        %1439 = vmatpush2.bf16.msra.mxu0 0
        %1440 = vmatprep.subr.bf16.mxu0 0
        %1441 = vmatpush2.bf16.msra.mxu0 0
        %1442 = vmatprep.subr.bf16.mxu0 0
        %1443 = vmatpush2.bf16.msra.mxu0 0
        %1444 = vmatprep.subr.bf16.mxu0 0
        %1445 = vmatpush2.bf16.msra.mxu0 0
        %1446 = vmatprep.subr.bf16.mxu0 0
        %1447 = vmatpush2.bf16.msra.mxu0 0
        %1448 = vmatprep.subr.bf16.mxu0 0
        %1449 = vmatpush2.bf16.msra.mxu0 0
        %1450 = vmatprep.subr.bf16.mxu0 0
        %1451 = vmatpush2.bf16.msra.mxu0 0
        %1452 = vmatprep.subr.bf16.mxu0 0
        %1453 = vmatpush2.bf16.msra.mxu0 0
        %1454 = vmatprep.mubr.bf16.mxu0 0
        %1455 = vmatmul.mubr.bf16.gmra.mxu0 %v634
        %v1456 = vpop.f32.mrf.mxu0
        %v1457 = vadd.f32 %v1335, %v1456
        %v1458 = vpop.f32.mrf.mxu0
        %v1459 = vadd.f32 %v1339, %v1458
        %v1460 = vpop.f32.mrf.mxu0
        %v1461 = vadd.f32 %v1335, %v1460
        %v1462 = vpop.f32.mrf.mxu0
        %v1463 = vadd.f32 %v1339, %v1462
        %1464 = vmatprep.mubr.bf16.mxu0 0
        %1465 = vmatmul.mubr.bf16.gmra.mxu0 %v635
        %v1466 = vpop.f32.mrf.mxu0
        %v1467 = vadd.f32 %v1335, %v1466
        %v1468 = vpop.f32.mrf.mxu0
        %v1469 = vadd.f32 %v1339, %v1468
        %v1470 = vpop.f32.mrf.mxu0
        %v1471 = vadd.f32 %v1335, %v1470
        %v1472 = vpop.f32.mrf.mxu0
        %v1473 = vadd.f32 %v1339, %v1472
        %1474 = vmatprep.mubr.bf16.mxu0 0
        %1475 = vmatmul.mubr.bf16.gmra.mxu0 %v636
        %v1476 = vpop.f32.mrf.mxu0
        %v1477 = vadd.f32 %v1335, %v1476
        %v1478 = vpop.f32.mrf.mxu0
        %v1479 = vadd.f32 %v1339, %v1478
        %v1480 = vpop.f32.mrf.mxu0
        %v1481 = vadd.f32 %v1335, %v1480
        %v1482 = vpop.f32.mrf.mxu0
        %v1483 = vadd.f32 %v1339, %v1482
        %1484 = vmatprep.mubr.bf16.mxu0 0
        %1485 = vmatmul.mubr.bf16.gmra.mxu0 %v637
        %v1486 = vpop.f32.mrf.mxu0
        %v1487 = vadd.f32 %v1335, %v1486
        %v1488 = vpop.f32.mrf.mxu0
        %v1489 = vadd.f32 %v1339, %v1488
        %v1490 = vpop.f32.mrf.mxu0
        %v1491 = vadd.f32 %v1335, %v1490
        %v1492 = vpop.f32.mrf.mxu0
        %v1493 = vadd.f32 %v1339, %v1492
        %1494 = vmatprep.mubr.bf16.mxu0 0
        %1495 = vmatmul.mubr.bf16.gmra.mxu0 %v638
        %v1496 = vpop.f32.mrf.mxu0
        %v1497 = vadd.f32 %v1335, %v1496
        %v1498 = vpop.f32.mrf.mxu0
        %v1499 = vadd.f32 %v1339, %v1498
        %v1500 = vpop.f32.mrf.mxu0
        %v1501 = vadd.f32 %v1335, %v1500
        %v1502 = vpop.f32.mrf.mxu0
        %v1503 = vadd.f32 %v1339, %v1502
        %1504 = vmatprep.mubr.bf16.mxu0 0
        %1505 = vmatmul.mubr.bf16.gmra.mxu0 %v639
        %v1506 = vpop.f32.mrf.mxu0
        %v1507 = vadd.f32 %v1335, %v1506
        %v1508 = vpop.f32.mrf.mxu0
        %v1509 = vadd.f32 %v1339, %v1508
        %v1510 = vpop.f32.mrf.mxu0
        %v1511 = vadd.f32 %v1335, %v1510
        %v1512 = vpop.f32.mrf.mxu0
        %v1513 = vadd.f32 %v1339, %v1512
        %1514 = vmatprep.mubr.bf16.mxu0 0
        %1515 = vmatmul.mubr.bf16.gmra.mxu0 %v640
        %v1516 = vpop.f32.mrf.mxu0
        %v1517 = vadd.f32 %v1335, %v1516
        %v1518 = vpop.f32.mrf.mxu0
        %v1519 = vadd.f32 %v1339, %v1518
        %v1520 = vpop.f32.mrf.mxu0
        %v1521 = vadd.f32 %v1335, %v1520
        %v1522 = vpop.f32.mrf.mxu0
        %v1523 = vadd.f32 %v1339, %v1522
        %1524 = vmatprep.mubr.bf16.mxu0 0
        %1525 = vmatmul.mubr.bf16.gmra.mxu0 %v641
        %v1526 = vpop.f32.mrf.mxu0
        %v1527 = vadd.f32 %v1335, %v1526
        %v1528 = vpop.f32.mrf.mxu0
        %v1529 = vadd.f32 %v1339, %v1528
        %v1530 = vpop.f32.mrf.mxu0
        %v1531 = vadd.f32 %v1335, %v1530
        %v1532 = vpop.f32.mrf.mxu0
        %v1533 = vadd.f32 %v1339, %v1532
        %1534 = vmatprep.mubr.bf16.mxu0 0
        %1535 = vmatmul.mubr.bf16.gmra.mxu0 %v642
        %v1536 = vpop.f32.mrf.mxu0
        %v1537 = vadd.f32 %v1335, %v1536
        %v1538 = vpop.f32.mrf.mxu0
        %v1539 = vadd.f32 %v1339, %v1538
        %v1540 = vpop.f32.mrf.mxu0
        %v1541 = vadd.f32 %v1335, %v1540
        %v1542 = vpop.f32.mrf.mxu0
        %v1543 = vadd.f32 %v1339, %v1542
        %1544 = vmatprep.mubr.bf16.mxu0 0
        %1545 = vmatmul.mubr.bf16.gmra.mxu0 %v643
        %v1546 = vpop.f32.mrf.mxu0
        %v1547 = vadd.f32 %v1335, %v1546
        %v1548 = vpop.f32.mrf.mxu0
        %v1549 = vadd.f32 %v1339, %v1548
        %v1550 = vpop.f32.mrf.mxu0
        %v1551 = vadd.f32 %v1335, %v1550
        %v1552 = vpop.f32.mrf.mxu0
        %v1553 = vadd.f32 %v1339, %v1552
        %1554 = vmatprep.mubr.bf16.mxu0 0
        %1555 = vmatmul.mubr.bf16.gmra.mxu0 %v644
        %v1556 = vpop.f32.mrf.mxu0
        %v1557 = vadd.f32 %v1335, %v1556
        %v1558 = vpop.f32.mrf.mxu0
        %v1559 = vadd.f32 %v1339, %v1558
        %v1560 = vpop.f32.mrf.mxu0
        %v1561 = vadd.f32 %v1335, %v1560
        %v1562 = vpop.f32.mrf.mxu0
        %v1563 = vadd.f32 %v1339, %v1562
        %1564 = vmatprep.mubr.bf16.mxu0 0
        %1565 = vmatmul.mubr.bf16.gmra.mxu0 %v645
        %v1566 = vpop.f32.mrf.mxu0
        %v1567 = vadd.f32 %v1335, %v1566
        %v1568 = vpop.f32.mrf.mxu0
        %v1569 = vadd.f32 %v1339, %v1568
        %v1570 = vpop.f32.mrf.mxu0
        %v1571 = vadd.f32 %v1335, %v1570
        %v1572 = vpop.f32.mrf.mxu0
        %v1573 = vadd.f32 %v1339, %v1572
        %1574 = vmatprep.mubr.bf16.mxu0 0
        %1575 = vmatmul.mubr.bf16.gmra.mxu0 %v646
        %v1576 = vpop.f32.mrf.mxu0
        %v1577 = vadd.f32 %v1335, %v1576
        %v1578 = vpop.f32.mrf.mxu0
        %v1579 = vadd.f32 %v1339, %v1578
        %v1580 = vpop.f32.mrf.mxu0
        %v1581 = vadd.f32 %v1335, %v1580
        %v1582 = vpop.f32.mrf.mxu0
        %v1583 = vadd.f32 %v1339, %v1582
        %1584 = vmatprep.mubr.bf16.mxu0 0
        %1585 = vmatmul.mubr.bf16.gmra.mxu0 %v647
        %v1586 = vpop.f32.mrf.mxu0
        %v1587 = vadd.f32 %v1335, %v1586
        %v1588 = vpop.f32.mrf.mxu0
        %v1589 = vadd.f32 %v1339, %v1588
        %v1590 = vpop.f32.mrf.mxu0
        %v1591 = vadd.f32 %v1335, %v1590
        %v1592 = vpop.f32.mrf.mxu0
        %v1593 = vadd.f32 %v1339, %v1592
        %1594 = vmatprep.mubr.bf16.mxu0 0
        %1595 = vmatmul.mubr.bf16.gmra.mxu0 %v648
        %v1596 = vpop.f32.mrf.mxu0
        %v1597 = vadd.f32 %v1335, %v1596
        %v1598 = vpop.f32.mrf.mxu0
        %v1599 = vadd.f32 %v1339, %v1598
        %v1600 = vpop.f32.mrf.mxu0
        %v1601 = vadd.f32 %v1335, %v1600
        %v1602 = vpop.f32.mrf.mxu0
        %v1603 = vadd.f32 %v1339, %v1602
        %1604 = vmatprep.mubr.bf16.mxu0 0
        %1605 = vmatmul.mubr.bf16.gmra.mxu0 %v649
        %v1606 = vpop.f32.mrf.mxu0
        %v1607 = vadd.f32 %v1335, %v1606
        %v1608 = vpop.f32.mrf.mxu0
        %v1609 = vadd.f32 %v1339, %v1608
        %v1610 = vpop.f32.mrf.mxu0
        %v1611 = vadd.f32 %v1335, %v1610
        %v1612 = vpop.f32.mrf.mxu0
        %v1613 = vadd.f32 %v1339, %v1612
        %1614 = vdwg.mxu0
        %v1615 = vpack.c.bf16 %v1461, %v1457
        %v1616 = vpack.c.bf16 %v1463, %v1459
        %v1617 = vpack.c.bf16 %v1471, %v1467
        %v1618 = vpack.c.bf16 %v1473, %v1469
        %v1619 = vpack.c.bf16 %v1481, %v1477
        %v1620 = vpack.c.bf16 %v1483, %v1479
        %v1621 = vpack.c.bf16 %v1491, %v1487
        %v1622 = vpack.c.bf16 %v1493, %v1489
        %v1623 = vpack.c.bf16 %v1501, %v1497
        %v1624 = vpack.c.bf16 %v1503, %v1499
        %v1625 = vpack.c.bf16 %v1511, %v1507
        %v1626 = vpack.c.bf16 %v1513, %v1509
        %v1627 = vpack.c.bf16 %v1521, %v1517
        %v1628 = vpack.c.bf16 %v1523, %v1519
        %v1629 = vpack.c.bf16 %v1531, %v1527
        %v1630 = vpack.c.bf16 %v1533, %v1529
        %v1631 = vpack.c.bf16 %v1541, %v1537
        %v1632 = vpack.c.bf16 %v1543, %v1539
        %v1633 = vpack.c.bf16 %v1551, %v1547
        %v1634 = vpack.c.bf16 %v1553, %v1549
        %v1635 = vpack.c.bf16 %v1561, %v1557
        %v1636 = vpack.c.bf16 %v1563, %v1559
        %v1637 = vpack.c.bf16 %v1571, %v1567
        %v1638 = vpack.c.bf16 %v1573, %v1569
        %v1639 = vpack.c.bf16 %v1581, %v1577
        %v1640 = vpack.c.bf16 %v1583, %v1579
        %v1641 = vpack.c.bf16 %v1591, %v1587
        %v1642 = vpack.c.bf16 %v1593, %v1589
        %v1643 = vpack.c.bf16 %v1601, %v1597
        %v1644 = vpack.c.bf16 %v1603, %v1599
        %v1645 = vpack.c.bf16 %v1611, %v1607
        %v1646 = vpack.c.bf16 %v1613, %v1609
        %1647 = vmatprep.subr.bf16.mxu0 0
        %1648 = vmatpush1.bf16.xpose.msra.mxu0 %v1278
        %1649 = vmatprep.subr.bf16.mxu0 0
        %1650 = vmatpush1.bf16.xpose.msra.mxu0 %v1274
        %1651 = vmatprep.subr.bf16.mxu0 0
        %1652 = vmatpush1.bf16.xpose.msra.mxu0 %v1270
        %1653 = vmatprep.subr.bf16.mxu0 0
        %1654 = vmatpush1.bf16.xpose.msra.mxu0 %v1266
        %1655 = vmatprep.subr.bf16.mxu0 0
        %1656 = vmatpush1.bf16.xpose.msra.mxu0 %v1262
        %1657 = vmatprep.subr.bf16.mxu0 0
        %1658 = vmatpush1.bf16.xpose.msra.mxu0 %v1258
        %1659 = vmatprep.subr.bf16.mxu0 0
        %1660 = vmatpush1.bf16.xpose.msra.mxu0 %v1254
        %1661 = vmatprep.subr.bf16.mxu0 0
        %1662 = vmatpush1.bf16.xpose.msra.mxu0 %v1250
        %1663 = vmatprep.subr.bf16.mxu0 0
        %1664 = vmatpush2.bf16.xpose.msra.mxu0 %v1310
        %1665 = vmatprep.subr.bf16.mxu0 0
        %1666 = vmatpush2.bf16.xpose.msra.mxu0 %v1306
        %1667 = vmatprep.subr.bf16.mxu0 0
        %1668 = vmatpush2.bf16.xpose.msra.mxu0 %v1302
        %1669 = vmatprep.subr.bf16.mxu0 0
        %1670 = vmatpush2.bf16.xpose.msra.mxu0 %v1298
        %1671 = vmatprep.subr.bf16.mxu0 0
        %1672 = vmatpush2.bf16.xpose.msra.mxu0 %v1294
        %1673 = vmatprep.subr.bf16.mxu0 0
        %1674 = vmatpush2.bf16.xpose.msra.mxu0 %v1290
        %1675 = vmatprep.subr.bf16.mxu0 0
        %1676 = vmatpush2.bf16.xpose.msra.mxu0 %v1286
        %1677 = vmatprep.subr.bf16.mxu0 0
        %1678 = vmatpush2.bf16.xpose.msra.mxu0 %v1282
        %1679 = vmatprep.mubr.bf16.mxu0 0
        %1680 = vmatmul.mubr.bf16.gmra.mxu0 %v1615
        %v1681 = vpop.f32.mrf.mxu0
        %v1682 = vadd.f32 0.0, %v1681
        %v1683 = vpop.f32.mrf.mxu0
        %v1684 = vadd.f32 0.0, %v1683
        %v1685 = vpop.f32.mrf.mxu0
        %v1686 = vadd.f32 0.0, %v1685
        %v1687 = vpop.f32.mrf.mxu0
        %v1688 = vadd.f32 0.0, %v1687
        %1689 = vmatprep.mubr.bf16.mxu0 0
        %1690 = vmatmul.mubr.bf16.gmra.mxu0 %v1617
        %v1691 = vpop.f32.mrf.mxu0
        %v1692 = vadd.f32 0.0, %v1691
        %v1693 = vpop.f32.mrf.mxu0
        %v1694 = vadd.f32 0.0, %v1693
        %v1695 = vpop.f32.mrf.mxu0
        %v1696 = vadd.f32 0.0, %v1695
        %v1697 = vpop.f32.mrf.mxu0
        %v1698 = vadd.f32 0.0, %v1697
        %1699 = vmatprep.mubr.bf16.mxu0 0
        %1700 = vmatmul.mubr.bf16.gmra.mxu0 %v1619
        %v1701 = vpop.f32.mrf.mxu0
        %v1702 = vadd.f32 0.0, %v1701
        %v1703 = vpop.f32.mrf.mxu0
        %v1704 = vadd.f32 0.0, %v1703
        %v1705 = vpop.f32.mrf.mxu0
        %v1706 = vadd.f32 0.0, %v1705
        %v1707 = vpop.f32.mrf.mxu0
        %v1708 = vadd.f32 0.0, %v1707
        %1709 = vmatprep.mubr.bf16.mxu0 0
        %1710 = vmatmul.mubr.bf16.gmra.mxu0 %v1621
        %v1711 = vpop.f32.mrf.mxu0
        %v1712 = vadd.f32 0.0, %v1711
        %v1713 = vpop.f32.mrf.mxu0
        %v1714 = vadd.f32 0.0, %v1713
        %v1715 = vpop.f32.mrf.mxu0
        %v1716 = vadd.f32 0.0, %v1715
        %v1717 = vpop.f32.mrf.mxu0
        %v1718 = vadd.f32 0.0, %v1717
        %1719 = vmatprep.mubr.bf16.mxu0 0
        %1720 = vmatmul.mubr.bf16.gmra.mxu0 %v1623
        %v1721 = vpop.f32.mrf.mxu0
        %v1722 = vadd.f32 0.0, %v1721
        %v1723 = vpop.f32.mrf.mxu0
        %v1724 = vadd.f32 0.0, %v1723
        %v1725 = vpop.f32.mrf.mxu0
        %v1726 = vadd.f32 0.0, %v1725
        %v1727 = vpop.f32.mrf.mxu0
        %v1728 = vadd.f32 0.0, %v1727
        %1729 = vmatprep.mubr.bf16.mxu0 0
        %1730 = vmatmul.mubr.bf16.gmra.mxu0 %v1625
        %v1731 = vpop.f32.mrf.mxu0
        %v1732 = vadd.f32 0.0, %v1731
        %v1733 = vpop.f32.mrf.mxu0
        %v1734 = vadd.f32 0.0, %v1733
        %v1735 = vpop.f32.mrf.mxu0
        %v1736 = vadd.f32 0.0, %v1735
        %v1737 = vpop.f32.mrf.mxu0
        %v1738 = vadd.f32 0.0, %v1737
        %1739 = vmatprep.mubr.bf16.mxu0 0
        %1740 = vmatmul.mubr.bf16.gmra.mxu0 %v1627
        %v1741 = vpop.f32.mrf.mxu0
        %v1742 = vadd.f32 0.0, %v1741
        %v1743 = vpop.f32.mrf.mxu0
        %v1744 = vadd.f32 0.0, %v1743
        %v1745 = vpop.f32.mrf.mxu0
        %v1746 = vadd.f32 0.0, %v1745
        %v1747 = vpop.f32.mrf.mxu0
        %v1748 = vadd.f32 0.0, %v1747
        %1749 = vmatprep.mubr.bf16.mxu0 0
        %1750 = vmatmul.mubr.bf16.gmra.mxu0 %v1629
        %v1751 = vpop.f32.mrf.mxu0
        %v1752 = vadd.f32 0.0, %v1751
        %v1753 = vpop.f32.mrf.mxu0
        %v1754 = vadd.f32 0.0, %v1753
        %v1755 = vpop.f32.mrf.mxu0
        %v1756 = vadd.f32 0.0, %v1755
        %v1757 = vpop.f32.mrf.mxu0
        %v1758 = vadd.f32 0.0, %v1757
        %1759 = vmatprep.mubr.bf16.mxu0 0
        %1760 = vmatmul.mubr.bf16.gmra.mxu0 %v1631
        %v1761 = vpop.f32.mrf.mxu0
        %v1762 = vadd.f32 0.0, %v1761
        %v1763 = vpop.f32.mrf.mxu0
        %v1764 = vadd.f32 0.0, %v1763
        %v1765 = vpop.f32.mrf.mxu0
        %v1766 = vadd.f32 0.0, %v1765
        %v1767 = vpop.f32.mrf.mxu0
        %v1768 = vadd.f32 0.0, %v1767
        %1769 = vmatprep.mubr.bf16.mxu0 0
        %1770 = vmatmul.mubr.bf16.gmra.mxu0 %v1633
        %v1771 = vpop.f32.mrf.mxu0
        %v1772 = vadd.f32 0.0, %v1771
        %v1773 = vpop.f32.mrf.mxu0
        %v1774 = vadd.f32 0.0, %v1773
        %v1775 = vpop.f32.mrf.mxu0
        %v1776 = vadd.f32 0.0, %v1775
        %v1777 = vpop.f32.mrf.mxu0
        %v1778 = vadd.f32 0.0, %v1777
        %1779 = vmatprep.mubr.bf16.mxu0 0
        %1780 = vmatmul.mubr.bf16.gmra.mxu0 %v1635
        %v1781 = vpop.f32.mrf.mxu0
        %v1782 = vadd.f32 0.0, %v1781
        %v1783 = vpop.f32.mrf.mxu0
        %v1784 = vadd.f32 0.0, %v1783
        %v1785 = vpop.f32.mrf.mxu0
        %v1786 = vadd.f32 0.0, %v1785
        %v1787 = vpop.f32.mrf.mxu0
        %v1788 = vadd.f32 0.0, %v1787
        %1789 = vmatprep.mubr.bf16.mxu0 0
        %1790 = vmatmul.mubr.bf16.gmra.mxu0 %v1637
        %v1791 = vpop.f32.mrf.mxu0
        %v1792 = vadd.f32 0.0, %v1791
        %v1793 = vpop.f32.mrf.mxu0
        %v1794 = vadd.f32 0.0, %v1793
        %v1795 = vpop.f32.mrf.mxu0
        %v1796 = vadd.f32 0.0, %v1795
        %v1797 = vpop.f32.mrf.mxu0
        %v1798 = vadd.f32 0.0, %v1797
        %1799 = vmatprep.mubr.bf16.mxu0 0
        %1800 = vmatmul.mubr.bf16.gmra.mxu0 %v1639
        %v1801 = vpop.f32.mrf.mxu0
        %v1802 = vadd.f32 0.0, %v1801
        %v1803 = vpop.f32.mrf.mxu0
        %v1804 = vadd.f32 0.0, %v1803
        %v1805 = vpop.f32.mrf.mxu0
        %v1806 = vadd.f32 0.0, %v1805
        %v1807 = vpop.f32.mrf.mxu0
        %v1808 = vadd.f32 0.0, %v1807
        %1809 = vmatprep.mubr.bf16.mxu0 0
        %1810 = vmatmul.mubr.bf16.gmra.mxu0 %v1641
        %v1811 = vpop.f32.mrf.mxu0
        %v1812 = vadd.f32 0.0, %v1811
        %v1813 = vpop.f32.mrf.mxu0
        %v1814 = vadd.f32 0.0, %v1813
        %v1815 = vpop.f32.mrf.mxu0
        %v1816 = vadd.f32 0.0, %v1815
        %v1817 = vpop.f32.mrf.mxu0
        %v1818 = vadd.f32 0.0, %v1817
        %1819 = vmatprep.mubr.bf16.mxu0 0
        %1820 = vmatmul.mubr.bf16.gmra.mxu0 %v1643
        %v1821 = vpop.f32.mrf.mxu0
        %v1822 = vadd.f32 0.0, %v1821
        %v1823 = vpop.f32.mrf.mxu0
        %v1824 = vadd.f32 0.0, %v1823
        %v1825 = vpop.f32.mrf.mxu0
        %v1826 = vadd.f32 0.0, %v1825
        %v1827 = vpop.f32.mrf.mxu0
        %v1828 = vadd.f32 0.0, %v1827
        %1829 = vmatprep.mubr.bf16.mxu0 0
        %1830 = vmatmul.mubr.bf16.gmra.mxu0 %v1645
        %v1831 = vpop.f32.mrf.mxu0
        %v1832 = vadd.f32 0.0, %v1831
        %v1833 = vpop.f32.mrf.mxu0
        %v1834 = vadd.f32 0.0, %v1833
        %v1835 = vpop.f32.mrf.mxu0
        %v1836 = vadd.f32 0.0, %v1835
        %v1837 = vpop.f32.mrf.mxu0
        %v1838 = vadd.f32 0.0, %v1837
        %1839 = vdwg.mxu0
        %v1840 = vmax.f32 %v1682, %v1684
        %1841 = vmax.xlane.f32.xlu0 %v1840
        %v1842 = vpop.xlane.xlu0 %1841
        %v1843 = vmax.f32 %v1686, %v1688
        %1844 = vmax.xlane.f32.xlu0 %v1843
        %v1845 = vpop.xlane.xlu0 %1844
        %v1846 = vmax.f32 %v1692, %v1694
        %1847 = vmax.xlane.f32.xlu0 %v1846
        %v1848 = vpop.xlane.xlu0 %1847
        %v1849 = vmax.f32 %v1696, %v1698
        %1850 = vmax.xlane.f32.xlu0 %v1849
        %v1851 = vpop.xlane.xlu0 %1850
        %v1852 = vmax.f32 %v1702, %v1704
        %1853 = vmax.xlane.f32.xlu0 %v1852
        %v1854 = vpop.xlane.xlu0 %1853
        %v1855 = vmax.f32 %v1706, %v1708
        %1856 = vmax.xlane.f32.xlu0 %v1855
        %v1857 = vpop.xlane.xlu0 %1856
        %v1858 = vmax.f32 %v1712, %v1714
        %1859 = vmax.xlane.f32.xlu0 %v1858
        %v1860 = vpop.xlane.xlu0 %1859
        %v1861 = vmax.f32 %v1716, %v1718
        %1862 = vmax.xlane.f32.xlu0 %v1861
        %v1863 = vpop.xlane.xlu0 %1862
        %v1864 = vmax.f32 %v1722, %v1724
        %1865 = vmax.xlane.f32.xlu0 %v1864
        %v1866 = vpop.xlane.xlu0 %1865
        %v1867 = vmax.f32 %v1726, %v1728
        %1868 = vmax.xlane.f32.xlu0 %v1867
        %v1869 = vpop.xlane.xlu0 %1868
        %v1870 = vmax.f32 %v1732, %v1734
        %1871 = vmax.xlane.f32.xlu0 %v1870
        %v1872 = vpop.xlane.xlu0 %1871
        %v1873 = vmax.f32 %v1736, %v1738
        %1874 = vmax.xlane.f32.xlu0 %v1873
        %v1875 = vpop.xlane.xlu0 %1874
        %v1876 = vmax.f32 %v1742, %v1744
        %1877 = vmax.xlane.f32.xlu0 %v1876
        %v1878 = vpop.xlane.xlu0 %1877
        %v1879 = vmax.f32 %v1746, %v1748
        %1880 = vmax.xlane.f32.xlu0 %v1879
        %v1881 = vpop.xlane.xlu0 %1880
        %v1882 = vmax.f32 %v1752, %v1754
        %1883 = vmax.xlane.f32.xlu0 %v1882
        %v1884 = vpop.xlane.xlu0 %1883
        %v1885 = vmax.f32 %v1756, %v1758
        %1886 = vmax.xlane.f32.xlu0 %v1885
        %v1887 = vpop.xlane.xlu0 %1886
        %v1888 = vmax.f32 %v1762, %v1764
        %1889 = vmax.xlane.f32.xlu0 %v1888
        %v1890 = vpop.xlane.xlu0 %1889
        %v1891 = vmax.f32 %v1766, %v1768
        %1892 = vmax.xlane.f32.xlu0 %v1891
        %v1893 = vpop.xlane.xlu0 %1892
        %v1894 = vmax.f32 %v1772, %v1774
        %1895 = vmax.xlane.f32.xlu0 %v1894
        %v1896 = vpop.xlane.xlu0 %1895
        %v1897 = vmax.f32 %v1776, %v1778
        %1898 = vmax.xlane.f32.xlu0 %v1897
        %v1899 = vpop.xlane.xlu0 %1898
        %v1900 = vmax.f32 %v1782, %v1784
        %1901 = vmax.xlane.f32.xlu0 %v1900
        %v1902 = vpop.xlane.xlu0 %1901
        %v1903 = vmax.f32 %v1786, %v1788
        %1904 = vmax.xlane.f32.xlu0 %v1903
        %v1905 = vpop.xlane.xlu0 %1904
        %v1906 = vmax.f32 %v1792, %v1794
        %1907 = vmax.xlane.f32.xlu0 %v1906
        %v1908 = vpop.xlane.xlu0 %1907
        %v1909 = vmax.f32 %v1796, %v1798
        %1910 = vmax.xlane.f32.xlu0 %v1909
        %v1911 = vpop.xlane.xlu0 %1910
        %v1912 = vmax.f32 %v1802, %v1804
        %1913 = vmax.xlane.f32.xlu0 %v1912
        %v1914 = vpop.xlane.xlu0 %1913
        %v1915 = vmax.f32 %v1806, %v1808
        %1916 = vmax.xlane.f32.xlu0 %v1915
        %v1917 = vpop.xlane.xlu0 %1916
        %v1918 = vmax.f32 %v1812, %v1814
        %1919 = vmax.xlane.f32.xlu0 %v1918
        %v1920 = vpop.xlane.xlu0 %1919
        %v1921 = vmax.f32 %v1816, %v1818
        %1922 = vmax.xlane.f32.xlu0 %v1921
        %v1923 = vpop.xlane.xlu0 %1922
        %v1924 = vmax.f32 %v1822, %v1824
        %1925 = vmax.xlane.f32.xlu0 %v1924
        %v1926 = vpop.xlane.xlu0 %1925
        %v1927 = vmax.f32 %v1826, %v1828
        %1928 = vmax.xlane.f32.xlu0 %v1927
        %v1929 = vpop.xlane.xlu0 %1928
        %v1930 = vmax.f32 %v1832, %v1834
        %1931 = vmax.xlane.f32.xlu0 %v1930
        %v1932 = vpop.xlane.xlu0 %1931
        %v1933 = vmax.f32 %v1836, %v1838
        %1934 = vmax.xlane.f32.xlu0 %v1933
        %v1935 = vpop.xlane.xlu0 %1934
        %v1936 = vsub.f32 %v1682, %v1842
        %v1937 = vsub.f32 %v1684, %v1842
        %v1938 = vsub.f32 %v1686, %v1845
        %v1939 = vsub.f32 %v1688, %v1845
        %v1940 = vsub.f32 %v1692, %v1848
        %v1941 = vsub.f32 %v1694, %v1848
        %v1942 = vsub.f32 %v1696, %v1851
        %v1943 = vsub.f32 %v1698, %v1851
        %v1944 = vsub.f32 %v1702, %v1854
        %v1945 = vsub.f32 %v1704, %v1854
        %v1946 = vsub.f32 %v1706, %v1857
        %v1947 = vsub.f32 %v1708, %v1857
        %v1948 = vsub.f32 %v1712, %v1860
        %v1949 = vsub.f32 %v1714, %v1860
        %v1950 = vsub.f32 %v1716, %v1863
        %v1951 = vsub.f32 %v1718, %v1863
        %v1952 = vsub.f32 %v1722, %v1866
        %v1953 = vsub.f32 %v1724, %v1866
        %v1954 = vsub.f32 %v1726, %v1869
        %v1955 = vsub.f32 %v1728, %v1869
        %v1956 = vsub.f32 %v1732, %v1872
        %v1957 = vsub.f32 %v1734, %v1872
        %v1958 = vsub.f32 %v1736, %v1875
        %v1959 = vsub.f32 %v1738, %v1875
        %v1960 = vsub.f32 %v1742, %v1878
        %v1961 = vsub.f32 %v1744, %v1878
        %v1962 = vsub.f32 %v1746, %v1881
        %v1963 = vsub.f32 %v1748, %v1881
        %v1964 = vsub.f32 %v1752, %v1884
        %v1965 = vsub.f32 %v1754, %v1884
        %v1966 = vsub.f32 %v1756, %v1887
        %v1967 = vsub.f32 %v1758, %v1887
        %v1968 = vsub.f32 %v1762, %v1890
        %v1969 = vsub.f32 %v1764, %v1890
        %v1970 = vsub.f32 %v1766, %v1893
        %v1971 = vsub.f32 %v1768, %v1893
        %v1972 = vsub.f32 %v1772, %v1896
        %v1973 = vsub.f32 %v1774, %v1896
        %v1974 = vsub.f32 %v1776, %v1899
        %v1975 = vsub.f32 %v1778, %v1899
        %v1976 = vsub.f32 %v1782, %v1902
        %v1977 = vsub.f32 %v1784, %v1902
        %v1978 = vsub.f32 %v1786, %v1905
        %v1979 = vsub.f32 %v1788, %v1905
        %v1980 = vsub.f32 %v1792, %v1908
        %v1981 = vsub.f32 %v1794, %v1908
        %v1982 = vsub.f32 %v1796, %v1911
        %v1983 = vsub.f32 %v1798, %v1911
        %v1984 = vsub.f32 %v1802, %v1914
        %v1985 = vsub.f32 %v1804, %v1914
        %v1986 = vsub.f32 %v1806, %v1917
        %v1987 = vsub.f32 %v1808, %v1917
        %v1988 = vsub.f32 %v1812, %v1920
        %v1989 = vsub.f32 %v1814, %v1920
        %v1990 = vsub.f32 %v1816, %v1923
        %v1991 = vsub.f32 %v1818, %v1923
        %v1992 = vsub.f32 %v1822, %v1926
        %v1993 = vsub.f32 %v1824, %v1926
        %v1994 = vsub.f32 %v1826, %v1929
        %v1995 = vsub.f32 %v1828, %v1929
        %v1996 = vsub.f32 %v1832, %v1932
        %v1997 = vsub.f32 %v1834, %v1932
        %v1998 = vsub.f32 %v1836, %v1935
        %v1999 = vsub.f32 %v1838, %v1935
        %v2000 = vmul.f32 %v1936, 1.442695
        %v2001 = vpow.pop %v2000
        %v2002 = vmul.f32 %v1937, 1.442695
        %v2003 = vpow.pop %v2002
        %v2004 = vmul.f32 %v1938, 1.442695
        %v2005 = vpow.pop %v2004
        %v2006 = vmul.f32 %v1939, 1.442695
        %v2007 = vpow.pop %v2006
        %v2008 = vmul.f32 %v1940, 1.442695
        %v2009 = vpow.pop %v2008
        %v2010 = vmul.f32 %v1941, 1.442695
        %v2011 = vpow.pop %v2010
        %v2012 = vmul.f32 %v1942, 1.442695
        %v2013 = vpow.pop %v2012
        %v2014 = vmul.f32 %v1943, 1.442695
        %v2015 = vpow.pop %v2014
        %v2016 = vmul.f32 %v1944, 1.442695
        %v2017 = vpow.pop %v2016
        %v2018 = vmul.f32 %v1945, 1.442695
        %v2019 = vpow.pop %v2018
        %v2020 = vmul.f32 %v1946, 1.442695
        %v2021 = vpow.pop %v2020
        %v2022 = vmul.f32 %v1947, 1.442695
        %v2023 = vpow.pop %v2022
        %v2024 = vmul.f32 %v1948, 1.442695
        %v2025 = vpow.pop %v2024
        %v2026 = vmul.f32 %v1949, 1.442695
        %v2027 = vpow.pop %v2026
        %v2028 = vmul.f32 %v1950, 1.442695
        %v2029 = vpow.pop %v2028
        %v2030 = vmul.f32 %v1951, 1.442695
        %v2031 = vpow.pop %v2030
        %v2032 = vmul.f32 %v1952, 1.442695
        %v2033 = vpow.pop %v2032
        %v2034 = vmul.f32 %v1953, 1.442695
        %v2035 = vpow.pop %v2034
        %v2036 = vmul.f32 %v1954, 1.442695
        %v2037 = vpow.pop %v2036
        %v2038 = vmul.f32 %v1955, 1.442695
        %v2039 = vpow.pop %v2038
        %v2040 = vmul.f32 %v1956, 1.442695
        %v2041 = vpow.pop %v2040
        %v2042 = vmul.f32 %v1957, 1.442695
        %v2043 = vpow.pop %v2042
        %v2044 = vmul.f32 %v1958, 1.442695
        %v2045 = vpow.pop %v2044
        %v2046 = vmul.f32 %v1959, 1.442695
        %v2047 = vpow.pop %v2046
        %v2048 = vmul.f32 %v1960, 1.442695
        %v2049 = vpow.pop %v2048
        %v2050 = vmul.f32 %v1961, 1.442695
        %v2051 = vpow.pop %v2050
        %v2052 = vmul.f32 %v1962, 1.442695
        %v2053 = vpow.pop %v2052
        %v2054 = vmul.f32 %v1963, 1.442695
        %v2055 = vpow.pop %v2054
        %v2056 = vmul.f32 %v1964, 1.442695
        %v2057 = vpow.pop %v2056
        %v2058 = vmul.f32 %v1965, 1.442695
        %v2059 = vpow.pop %v2058
        %v2060 = vmul.f32 %v1966, 1.442695
        %v2061 = vpow.pop %v2060
        %v2062 = vmul.f32 %v1967, 1.442695
        %v2063 = vpow.pop %v2062
        %v2064 = vmul.f32 %v1968, 1.442695
        %v2065 = vpow.pop %v2064
        %v2066 = vmul.f32 %v1969, 1.442695
        %v2067 = vpow.pop %v2066
        %v2068 = vmul.f32 %v1970, 1.442695
        %v2069 = vpow.pop %v2068
        %v2070 = vmul.f32 %v1971, 1.442695
        %v2071 = vpow.pop %v2070
        %v2072 = vmul.f32 %v1972, 1.442695
        %v2073 = vpow.pop %v2072
        %v2074 = vmul.f32 %v1973, 1.442695
        %v2075 = vpow.pop %v2074
        %v2076 = vmul.f32 %v1974, 1.442695
        %v2077 = vpow.pop %v2076
        %v2078 = vmul.f32 %v1975, 1.442695
        %v2079 = vpow.pop %v2078
        %v2080 = vmul.f32 %v1976, 1.442695
        %v2081 = vpow.pop %v2080
        %v2082 = vmul.f32 %v1977, 1.442695
        %v2083 = vpow.pop %v2082
        %v2084 = vmul.f32 %v1978, 1.442695
        %v2085 = vpow.pop %v2084
        %v2086 = vmul.f32 %v1979, 1.442695
        %v2087 = vpow.pop %v2086
        %v2088 = vmul.f32 %v1980, 1.442695
        %v2089 = vpow.pop %v2088
        %v2090 = vmul.f32 %v1981, 1.442695
        %v2091 = vpow.pop %v2090
        %v2092 = vmul.f32 %v1982, 1.442695
        %v2093 = vpow.pop %v2092
        %v2094 = vmul.f32 %v1983, 1.442695
        %v2095 = vpow.pop %v2094
        %v2096 = vmul.f32 %v1984, 1.442695
        %v2097 = vpow.pop %v2096
        %v2098 = vmul.f32 %v1985, 1.442695
        %v2099 = vpow.pop %v2098
        %v2100 = vmul.f32 %v1986, 1.442695
        %v2101 = vpow.pop %v2100
        %v2102 = vmul.f32 %v1987, 1.442695
        %v2103 = vpow.pop %v2102
        %v2104 = vmul.f32 %v1988, 1.442695
        %v2105 = vpow.pop %v2104
        %v2106 = vmul.f32 %v1989, 1.442695
        %v2107 = vpow.pop %v2106
        %v2108 = vmul.f32 %v1990, 1.442695
        %v2109 = vpow.pop %v2108
        %v2110 = vmul.f32 %v1991, 1.442695
        %v2111 = vpow.pop %v2110
        %v2112 = vmul.f32 %v1992, 1.442695
        %v2113 = vpow.pop %v2112
        %v2114 = vmul.f32 %v1993, 1.442695
        %v2115 = vpow.pop %v2114
        %v2116 = vmul.f32 %v1994, 1.442695
        %v2117 = vpow.pop %v2116
        %v2118 = vmul.f32 %v1995, 1.442695
        %v2119 = vpow.pop %v2118
        %v2120 = vmul.f32 %v1996, 1.442695
        %v2121 = vpow.pop %v2120
        %v2122 = vmul.f32 %v1997, 1.442695
        %v2123 = vpow.pop %v2122
        %v2124 = vmul.f32 %v1998, 1.442695
        %v2125 = vpow.pop %v2124
        %v2126 = vmul.f32 %v1999, 1.442695
        %v2127 = vpow.pop %v2126
        %v2128 = vadd.f32 %v2001, %v2003
        %2129 = vadd.xlane.f32.xlu0 %v2128
        %v2130 = vpop.xlane.xlu0 %2129
        %v2131 = vadd.f32 %v2005, %v2007
        %2132 = vadd.xlane.f32.xlu0 %v2131
        %v2133 = vpop.xlane.xlu0 %2132
        %v2134 = vadd.f32 %v2009, %v2011
        %2135 = vadd.xlane.f32.xlu0 %v2134
        %v2136 = vpop.xlane.xlu0 %2135
        %v2137 = vadd.f32 %v2013, %v2015
        %2138 = vadd.xlane.f32.xlu0 %v2137
        %v2139 = vpop.xlane.xlu0 %2138
        %v2140 = vadd.f32 %v2017, %v2019
        %2141 = vadd.xlane.f32.xlu0 %v2140
        %v2142 = vpop.xlane.xlu0 %2141
        %v2143 = vadd.f32 %v2021, %v2023
        %2144 = vadd.xlane.f32.xlu0 %v2143
        %v2145 = vpop.xlane.xlu0 %2144
        %v2146 = vadd.f32 %v2025, %v2027
        %2147 = vadd.xlane.f32.xlu0 %v2146
        %v2148 = vpop.xlane.xlu0 %2147
        %v2149 = vadd.f32 %v2029, %v2031
        %2150 = vadd.xlane.f32.xlu0 %v2149
        %v2151 = vpop.xlane.xlu0 %2150
        %v2152 = vadd.f32 %v2033, %v2035
        %2153 = vadd.xlane.f32.xlu0 %v2152
        %v2154 = vpop.xlane.xlu0 %2153
        %v2155 = vadd.f32 %v2037, %v2039
        %2156 = vadd.xlane.f32.xlu0 %v2155
        %v2157 = vpop.xlane.xlu0 %2156
        %v2158 = vadd.f32 %v2041, %v2043
        %2159 = vadd.xlane.f32.xlu0 %v2158
        %v2160 = vpop.xlane.xlu0 %2159
        %v2161 = vadd.f32 %v2045, %v2047
        %2162 = vadd.xlane.f32.xlu0 %v2161
        %v2163 = vpop.xlane.xlu0 %2162
        %v2164 = vadd.f32 %v2049, %v2051
        %2165 = vadd.xlane.f32.xlu0 %v2164
        %v2166 = vpop.xlane.xlu0 %2165
        %v2167 = vadd.f32 %v2053, %v2055
        %2168 = vadd.xlane.f32.xlu0 %v2167
        %v2169 = vpop.xlane.xlu0 %2168
        %v2170 = vadd.f32 %v2057, %v2059
        %2171 = vadd.xlane.f32.xlu0 %v2170
        %v2172 = vpop.xlane.xlu0 %2171
        %v2173 = vadd.f32 %v2061, %v2063
        %2174 = vadd.xlane.f32.xlu0 %v2173
        %v2175 = vpop.xlane.xlu0 %2174
        %v2176 = vadd.f32 %v2065, %v2067
        %2177 = vadd.xlane.f32.xlu0 %v2176
        %v2178 = vpop.xlane.xlu0 %2177
        %v2179 = vadd.f32 %v2069, %v2071
        %2180 = vadd.xlane.f32.xlu0 %v2179
        %v2181 = vpop.xlane.xlu0 %2180
        %v2182 = vadd.f32 %v2073, %v2075
        %2183 = vadd.xlane.f32.xlu0 %v2182
        %v2184 = vpop.xlane.xlu0 %2183
        %v2185 = vadd.f32 %v2077, %v2079
        %2186 = vadd.xlane.f32.xlu0 %v2185
        %v2187 = vpop.xlane.xlu0 %2186
        %v2188 = vadd.f32 %v2081, %v2083
        %2189 = vadd.xlane.f32.xlu0 %v2188
        %v2190 = vpop.xlane.xlu0 %2189
        %v2191 = vadd.f32 %v2085, %v2087
        %2192 = vadd.xlane.f32.xlu0 %v2191
        %v2193 = vpop.xlane.xlu0 %2192
        %v2194 = vadd.f32 %v2089, %v2091
        %2195 = vadd.xlane.f32.xlu0 %v2194
        %v2196 = vpop.xlane.xlu0 %2195
        %v2197 = vadd.f32 %v2093, %v2095
        %2198 = vadd.xlane.f32.xlu0 %v2197
        %v2199 = vpop.xlane.xlu0 %2198
        %v2200 = vadd.f32 %v2097, %v2099
        %2201 = vadd.xlane.f32.xlu0 %v2200
        %v2202 = vpop.xlane.xlu0 %2201
        %v2203 = vadd.f32 %v2101, %v2103
        %2204 = vadd.xlane.f32.xlu0 %v2203
        %v2205 = vpop.xlane.xlu0 %2204
        %v2206 = vadd.f32 %v2105, %v2107
        %2207 = vadd.xlane.f32.xlu0 %v2206
        %v2208 = vpop.xlane.xlu0 %2207
        %v2209 = vadd.f32 %v2109, %v2111
        %2210 = vadd.xlane.f32.xlu0 %v2209
        %v2211 = vpop.xlane.xlu0 %2210
        %v2212 = vadd.f32 %v2113, %v2115
        %2213 = vadd.xlane.f32.xlu0 %v2212
        %v2214 = vpop.xlane.xlu0 %2213
        %v2215 = vadd.f32 %v2117, %v2119
        %2216 = vadd.xlane.f32.xlu0 %v2215
        %v2217 = vpop.xlane.xlu0 %2216
        %v2218 = vadd.f32 %v2121, %v2123
        %2219 = vadd.xlane.f32.xlu0 %v2218
        %v2220 = vpop.xlane.xlu0 %2219
        %v2221 = vadd.f32 %v2125, %v2127
        %2222 = vadd.xlane.f32.xlu0 %v2221
        %v2223 = vpop.xlane.xlu0 %2222
        %v2224 = vrcp.pop %v2130
        %v2225 = vmul.f32 %v2001, %v2224
        %v2226 = vmul.f32 %v2003, %v2224
        %v2227 = vrcp.pop %v2133
        %v2228 = vmul.f32 %v2005, %v2227
        %v2229 = vmul.f32 %v2007, %v2227
        %v2230 = vrcp.pop %v2136
        %v2231 = vmul.f32 %v2009, %v2230
        %v2232 = vmul.f32 %v2011, %v2230
        %v2233 = vrcp.pop %v2139
        %v2234 = vmul.f32 %v2013, %v2233
        %v2235 = vmul.f32 %v2015, %v2233
        %v2236 = vrcp.pop %v2142
        %v2237 = vmul.f32 %v2017, %v2236
        %v2238 = vmul.f32 %v2019, %v2236
        %v2239 = vrcp.pop %v2145
        %v2240 = vmul.f32 %v2021, %v2239
        %v2241 = vmul.f32 %v2023, %v2239
        %v2242 = vrcp.pop %v2148
        %v2243 = vmul.f32 %v2025, %v2242
        %v2244 = vmul.f32 %v2027, %v2242
        %v2245 = vrcp.pop %v2151
        %v2246 = vmul.f32 %v2029, %v2245
        %v2247 = vmul.f32 %v2031, %v2245
        %v2248 = vrcp.pop %v2154
        %v2249 = vmul.f32 %v2033, %v2248
        %v2250 = vmul.f32 %v2035, %v2248
        %v2251 = vrcp.pop %v2157
        %v2252 = vmul.f32 %v2037, %v2251
        %v2253 = vmul.f32 %v2039, %v2251
        %v2254 = vrcp.pop %v2160
        %v2255 = vmul.f32 %v2041, %v2254
        %v2256 = vmul.f32 %v2043, %v2254
        %v2257 = vrcp.pop %v2163
        %v2258 = vmul.f32 %v2045, %v2257
        %v2259 = vmul.f32 %v2047, %v2257
        %v2260 = vrcp.pop %v2166
        %v2261 = vmul.f32 %v2049, %v2260
        %v2262 = vmul.f32 %v2051, %v2260
        %v2263 = vrcp.pop %v2169
        %v2264 = vmul.f32 %v2053, %v2263
        %v2265 = vmul.f32 %v2055, %v2263
        %v2266 = vrcp.pop %v2172
        %v2267 = vmul.f32 %v2057, %v2266
        %v2268 = vmul.f32 %v2059, %v2266
        %v2269 = vrcp.pop %v2175
        %v2270 = vmul.f32 %v2061, %v2269
        %v2271 = vmul.f32 %v2063, %v2269
        %v2272 = vrcp.pop %v2178
        %v2273 = vmul.f32 %v2065, %v2272
        %v2274 = vmul.f32 %v2067, %v2272
        %v2275 = vrcp.pop %v2181
        %v2276 = vmul.f32 %v2069, %v2275
        %v2277 = vmul.f32 %v2071, %v2275
        %v2278 = vrcp.pop %v2184
        %v2279 = vmul.f32 %v2073, %v2278
        %v2280 = vmul.f32 %v2075, %v2278
        %v2281 = vrcp.pop %v2187
        %v2282 = vmul.f32 %v2077, %v2281
        %v2283 = vmul.f32 %v2079, %v2281
        %v2284 = vrcp.pop %v2190
        %v2285 = vmul.f32 %v2081, %v2284
        %v2286 = vmul.f32 %v2083, %v2284
        %v2287 = vrcp.pop %v2193
        %v2288 = vmul.f32 %v2085, %v2287
        %v2289 = vmul.f32 %v2087, %v2287
        %v2290 = vrcp.pop %v2196
        %v2291 = vmul.f32 %v2089, %v2290
        %v2292 = vmul.f32 %v2091, %v2290
        %v2293 = vrcp.pop %v2199
        %v2294 = vmul.f32 %v2093, %v2293
        %v2295 = vmul.f32 %v2095, %v2293
        %v2296 = vrcp.pop %v2202
        %v2297 = vmul.f32 %v2097, %v2296
        %v2298 = vmul.f32 %v2099, %v2296
        %v2299 = vrcp.pop %v2205
        %v2300 = vmul.f32 %v2101, %v2299
        %v2301 = vmul.f32 %v2103, %v2299
        %v2302 = vrcp.pop %v2208
        %v2303 = vmul.f32 %v2105, %v2302
        %v2304 = vmul.f32 %v2107, %v2302
        %v2305 = vrcp.pop %v2211
        %v2306 = vmul.f32 %v2109, %v2305
        %v2307 = vmul.f32 %v2111, %v2305
        %v2308 = vrcp.pop %v2214
        %v2309 = vmul.f32 %v2113, %v2308
        %v2310 = vmul.f32 %v2115, %v2308
        %v2311 = vrcp.pop %v2217
        %v2312 = vmul.f32 %v2117, %v2311
        %v2313 = vmul.f32 %v2119, %v2311
        %v2314 = vrcp.pop %v2220
        %v2315 = vmul.f32 %v2121, %v2314
        %v2316 = vmul.f32 %v2123, %v2314
        %v2317 = vrcp.pop %v2223
        %v2318 = vmul.f32 %v2125, %v2317
        %v2319 = vmul.f32 %v2127, %v2317
        %v2320 = vpack.c.bf16 %v2228, %v2225
        %v2321 = vpack.c.bf16 %v2229, %v2226
        %v2322 = vpack.c.bf16 %v2234, %v2231
        %v2323 = vpack.c.bf16 %v2235, %v2232
        %v2324 = vpack.c.bf16 %v2240, %v2237
        %v2325 = vpack.c.bf16 %v2241, %v2238
        %v2326 = vpack.c.bf16 %v2246, %v2243
        %v2327 = vpack.c.bf16 %v2247, %v2244
        %v2328 = vpack.c.bf16 %v2252, %v2249
        %v2329 = vpack.c.bf16 %v2253, %v2250
        %v2330 = vpack.c.bf16 %v2258, %v2255
        %v2331 = vpack.c.bf16 %v2259, %v2256
        %v2332 = vpack.c.bf16 %v2264, %v2261
        %v2333 = vpack.c.bf16 %v2265, %v2262
        %v2334 = vpack.c.bf16 %v2270, %v2267
        %v2335 = vpack.c.bf16 %v2271, %v2268
        %v2336 = vpack.c.bf16 %v2276, %v2273
        %v2337 = vpack.c.bf16 %v2277, %v2274
        %v2338 = vpack.c.bf16 %v2282, %v2279
        %v2339 = vpack.c.bf16 %v2283, %v2280
        %v2340 = vpack.c.bf16 %v2288, %v2285
        %v2341 = vpack.c.bf16 %v2289, %v2286
        %v2342 = vpack.c.bf16 %v2294, %v2291
        %v2343 = vpack.c.bf16 %v2295, %v2292
        %v2344 = vpack.c.bf16 %v2300, %v2297
        %v2345 = vpack.c.bf16 %v2301, %v2298
        %v2346 = vpack.c.bf16 %v2306, %v2303
        %v2347 = vpack.c.bf16 %v2307, %v2304
        %v2348 = vpack.c.bf16 %v2312, %v2309
        %v2349 = vpack.c.bf16 %v2313, %v2310
        %v2350 = vpack.c.bf16 %v2318, %v2315
        %v2351 = vpack.c.bf16 %v2319, %v2316
        %2352 = vmatprep.subr.bf16.mxu0 0
        %2353 = vmatpush1.bf16.msra.mxu0 %v1280
        %2354 = vmatprep.subr.bf16.mxu0 0
        %2355 = vmatpush1.bf16.msra.mxu0 %v1276
        %2356 = vmatprep.subr.bf16.mxu0 0
        %2357 = vmatpush1.bf16.msra.mxu0 %v1272
        %2358 = vmatprep.subr.bf16.mxu0 0
        %2359 = vmatpush1.bf16.msra.mxu0 %v1268
        %2360 = vmatprep.subr.bf16.mxu0 0
        %2361 = vmatpush1.bf16.msra.mxu0 %v1264
        %2362 = vmatprep.subr.bf16.mxu0 0
        %2363 = vmatpush1.bf16.msra.mxu0 %v1260
        %2364 = vmatprep.subr.bf16.mxu0 0
        %2365 = vmatpush1.bf16.msra.mxu0 %v1256
        %2366 = vmatprep.subr.bf16.mxu0 0
        %2367 = vmatpush1.bf16.msra.mxu0 %v1252
        %2368 = vmatprep.subr.bf16.mxu0 0
        %2369 = vmatpush2.bf16.msra.mxu0 %v1312
        %2370 = vmatprep.subr.bf16.mxu0 0
        %2371 = vmatpush2.bf16.msra.mxu0 %v1308
        %2372 = vmatprep.subr.bf16.mxu0 0
        %2373 = vmatpush2.bf16.msra.mxu0 %v1304
        %2374 = vmatprep.subr.bf16.mxu0 0
        %2375 = vmatpush2.bf16.msra.mxu0 %v1300
        %2376 = vmatprep.subr.bf16.mxu0 0
        %2377 = vmatpush2.bf16.msra.mxu0 %v1296
        %2378 = vmatprep.subr.bf16.mxu0 0
        %2379 = vmatpush2.bf16.msra.mxu0 %v1292
        %2380 = vmatprep.subr.bf16.mxu0 0
        %2381 = vmatpush2.bf16.msra.mxu0 %v1288
        %2382 = vmatprep.subr.bf16.mxu0 0
        %2383 = vmatpush2.bf16.msra.mxu0 %v1284
        %2384 = vmatprep.mubr.bf16.mxu0 %v2321
        %2385 = vmatmul.mubr.bf16.gmra.mxu0 %v2320
        %v2386 = vpop.f32.mrf.mxu0
        %v2387 = vadd.f32 0.0, %v2386
        %v2388 = vpop.f32.mrf.mxu0
        %v2389 = vpop.f32.mrf.mxu0
        %v2390 = vadd.f32 0.0, %v2389
        %v2391 = vpop.f32.mrf.mxu0
        %2392 = vmatprep.mubr.bf16.mxu0 %v2323
        %2393 = vmatmul.mubr.bf16.gmra.mxu0 %v2322
        %v2394 = vpop.f32.mrf.mxu0
        %v2395 = vadd.f32 0.0, %v2394
        %v2396 = vpop.f32.mrf.mxu0
        %v2397 = vpop.f32.mrf.mxu0
        %v2398 = vadd.f32 0.0, %v2397
        %v2399 = vpop.f32.mrf.mxu0
        %2400 = vmatprep.mubr.bf16.mxu0 %v2325
        %2401 = vmatmul.mubr.bf16.gmra.mxu0 %v2324
        %v2402 = vpop.f32.mrf.mxu0
        %v2403 = vadd.f32 0.0, %v2402
        %v2404 = vpop.f32.mrf.mxu0
        %v2405 = vpop.f32.mrf.mxu0
        %v2406 = vadd.f32 0.0, %v2405
        %v2407 = vpop.f32.mrf.mxu0
        %2408 = vmatprep.mubr.bf16.mxu0 %v2327
        %2409 = vmatmul.mubr.bf16.gmra.mxu0 %v2326
        %v2410 = vpop.f32.mrf.mxu0
        %v2411 = vadd.f32 0.0, %v2410
        %v2412 = vpop.f32.mrf.mxu0
        %v2413 = vpop.f32.mrf.mxu0
        %v2414 = vadd.f32 0.0, %v2413
        %v2415 = vpop.f32.mrf.mxu0
        %2416 = vmatprep.mubr.bf16.mxu0 %v2329
        %2417 = vmatmul.mubr.bf16.gmra.mxu0 %v2328
        %v2418 = vpop.f32.mrf.mxu0
        %v2419 = vadd.f32 0.0, %v2418
        %v2420 = vpop.f32.mrf.mxu0
        %v2421 = vpop.f32.mrf.mxu0
        %v2422 = vadd.f32 0.0, %v2421
        %v2423 = vpop.f32.mrf.mxu0
        %2424 = vmatprep.mubr.bf16.mxu0 %v2331
        %2425 = vmatmul.mubr.bf16.gmra.mxu0 %v2330
        %v2426 = vpop.f32.mrf.mxu0
        %v2427 = vadd.f32 0.0, %v2426
        %v2428 = vpop.f32.mrf.mxu0
        %v2429 = vpop.f32.mrf.mxu0
        %v2430 = vadd.f32 0.0, %v2429
        %v2431 = vpop.f32.mrf.mxu0
        %2432 = vmatprep.mubr.bf16.mxu0 %v2333
        %2433 = vmatmul.mubr.bf16.gmra.mxu0 %v2332
        %v2434 = vpop.f32.mrf.mxu0
        %v2435 = vadd.f32 0.0, %v2434
        %v2436 = vpop.f32.mrf.mxu0
        %v2437 = vpop.f32.mrf.mxu0
        %v2438 = vadd.f32 0.0, %v2437
        %v2439 = vpop.f32.mrf.mxu0
        %2440 = vmatprep.mubr.bf16.mxu0 %v2335
        %2441 = vmatmul.mubr.bf16.gmra.mxu0 %v2334
        %v2442 = vpop.f32.mrf.mxu0
        %v2443 = vadd.f32 0.0, %v2442
        %v2444 = vpop.f32.mrf.mxu0
        %v2445 = vpop.f32.mrf.mxu0
        %v2446 = vadd.f32 0.0, %v2445
        %v2447 = vpop.f32.mrf.mxu0
        %2448 = vmatprep.mubr.bf16.mxu0 %v2337
        %2449 = vmatmul.mubr.bf16.gmra.mxu0 %v2336
        %v2450 = vpop.f32.mrf.mxu0
        %v2451 = vadd.f32 0.0, %v2450
        %v2452 = vpop.f32.mrf.mxu0
        %v2453 = vpop.f32.mrf.mxu0
        %v2454 = vadd.f32 0.0, %v2453
        %v2455 = vpop.f32.mrf.mxu0
        %2456 = vmatprep.mubr.bf16.mxu0 %v2339
        %2457 = vmatmul.mubr.bf16.gmra.mxu0 %v2338
        %v2458 = vpop.f32.mrf.mxu0
        %v2459 = vadd.f32 0.0, %v2458
        %v2460 = vpop.f32.mrf.mxu0
        %v2461 = vpop.f32.mrf.mxu0
        %v2462 = vadd.f32 0.0, %v2461
        %v2463 = vpop.f32.mrf.mxu0
        %2464 = vmatprep.mubr.bf16.mxu0 %v2341
        %2465 = vmatmul.mubr.bf16.gmra.mxu0 %v2340
        %v2466 = vpop.f32.mrf.mxu0
        %v2467 = vadd.f32 0.0, %v2466
        %v2468 = vpop.f32.mrf.mxu0
        %v2469 = vpop.f32.mrf.mxu0
        %v2470 = vadd.f32 0.0, %v2469
        %v2471 = vpop.f32.mrf.mxu0
        %2472 = vmatprep.mubr.bf16.mxu0 %v2343
        %2473 = vmatmul.mubr.bf16.gmra.mxu0 %v2342
        %v2474 = vpop.f32.mrf.mxu0
        %v2475 = vadd.f32 0.0, %v2474
        %v2476 = vpop.f32.mrf.mxu0
        %v2477 = vpop.f32.mrf.mxu0
        %v2478 = vadd.f32 0.0, %v2477
        %v2479 = vpop.f32.mrf.mxu0
        %2480 = vmatprep.mubr.bf16.mxu0 %v2345
        %2481 = vmatmul.mubr.bf16.gmra.mxu0 %v2344
        %v2482 = vpop.f32.mrf.mxu0
        %v2483 = vadd.f32 0.0, %v2482
        %v2484 = vpop.f32.mrf.mxu0
        %v2485 = vpop.f32.mrf.mxu0
        %v2486 = vadd.f32 0.0, %v2485
        %v2487 = vpop.f32.mrf.mxu0
        %2488 = vmatprep.mubr.bf16.mxu0 %v2347
        %2489 = vmatmul.mubr.bf16.gmra.mxu0 %v2346
        %v2490 = vpop.f32.mrf.mxu0
        %v2491 = vadd.f32 0.0, %v2490
        %v2492 = vpop.f32.mrf.mxu0
        %v2493 = vpop.f32.mrf.mxu0
        %v2494 = vadd.f32 0.0, %v2493
        %v2495 = vpop.f32.mrf.mxu0
        %2496 = vmatprep.mubr.bf16.mxu0 %v2349
        %2497 = vmatmul.mubr.bf16.gmra.mxu0 %v2348
        %v2498 = vpop.f32.mrf.mxu0
        %v2499 = vadd.f32 0.0, %v2498
        %v2500 = vpop.f32.mrf.mxu0
        %v2501 = vpop.f32.mrf.mxu0
        %v2502 = vadd.f32 0.0, %v2501
        %v2503 = vpop.f32.mrf.mxu0
        %2504 = vmatprep.mubr.bf16.mxu0 %v2351
        %2505 = vmatmul.mubr.bf16.gmra.mxu0 %v2350
        %v2506 = vpop.f32.mrf.mxu0
        %v2507 = vadd.f32 0.0, %v2506
        %v2508 = vpop.f32.mrf.mxu0
        %v2509 = vpop.f32.mrf.mxu0
        %v2510 = vadd.f32 0.0, %v2509
        %v2511 = vpop.f32.mrf.mxu0
        %2512 = vdwg.mxu0
        %2513 = vmatprep.subr.bf16.mxu0 0
        %2514 = vmatpush1.bf16.xpose.msra.mxu0 %v1279
        %2515 = vmatprep.subr.bf16.mxu0 0
        %2516 = vmatpush1.bf16.xpose.msra.mxu0 %v1275
        %2517 = vmatprep.subr.bf16.mxu0 0
        %2518 = vmatpush1.bf16.xpose.msra.mxu0 %v1271
        %2519 = vmatprep.subr.bf16.mxu0 0
        %2520 = vmatpush1.bf16.xpose.msra.mxu0 %v1267
        %2521 = vmatprep.subr.bf16.mxu0 0
        %2522 = vmatpush1.bf16.xpose.msra.mxu0 %v1263
        %2523 = vmatprep.subr.bf16.mxu0 0
        %2524 = vmatpush1.bf16.xpose.msra.mxu0 %v1259
        %2525 = vmatprep.subr.bf16.mxu0 0
        %2526 = vmatpush1.bf16.xpose.msra.mxu0 %v1255
        %2527 = vmatprep.subr.bf16.mxu0 0
        %2528 = vmatpush1.bf16.xpose.msra.mxu0 %v1251
        %2529 = vmatprep.subr.bf16.mxu0 0
        %2530 = vmatpush2.bf16.xpose.msra.mxu0 %v1311
        %2531 = vmatprep.subr.bf16.mxu0 0
        %2532 = vmatpush2.bf16.xpose.msra.mxu0 %v1307
        %2533 = vmatprep.subr.bf16.mxu0 0
        %2534 = vmatpush2.bf16.xpose.msra.mxu0 %v1303
        %2535 = vmatprep.subr.bf16.mxu0 0
        %2536 = vmatpush2.bf16.xpose.msra.mxu0 %v1299
        %2537 = vmatprep.subr.bf16.mxu0 0
        %2538 = vmatpush2.bf16.xpose.msra.mxu0 %v1295
        %2539 = vmatprep.subr.bf16.mxu0 0
        %2540 = vmatpush2.bf16.xpose.msra.mxu0 %v1291
        %2541 = vmatprep.subr.bf16.mxu0 0
        %2542 = vmatpush2.bf16.xpose.msra.mxu0 %v1287
        %2543 = vmatprep.subr.bf16.mxu0 0
        %2544 = vmatpush2.bf16.xpose.msra.mxu0 %v1283
        %2545 = vmatprep.mubr.bf16.mxu0 0
        %2546 = vmatmul.mubr.bf16.gmra.mxu0 %v1616
        %v2547 = vpop.f32.mrf.mxu0
        %v2548 = vadd.f32 0.0, %v2547
        %v2549 = vpop.f32.mrf.mxu0
        %v2550 = vadd.f32 0.0, %v2549
        %v2551 = vpop.f32.mrf.mxu0
        %v2552 = vadd.f32 0.0, %v2551
        %v2553 = vpop.f32.mrf.mxu0
        %v2554 = vadd.f32 0.0, %v2553
        %2555 = vmatprep.mubr.bf16.mxu0 0
        %2556 = vmatmul.mubr.bf16.gmra.mxu0 %v1618
        %v2557 = vpop.f32.mrf.mxu0
        %v2558 = vadd.f32 0.0, %v2557
        %v2559 = vpop.f32.mrf.mxu0
        %v2560 = vadd.f32 0.0, %v2559
        %v2561 = vpop.f32.mrf.mxu0
        %v2562 = vadd.f32 0.0, %v2561
        %v2563 = vpop.f32.mrf.mxu0
        %v2564 = vadd.f32 0.0, %v2563
        %2565 = vmatprep.mubr.bf16.mxu0 0
        %2566 = vmatmul.mubr.bf16.gmra.mxu0 %v1620
        %v2567 = vpop.f32.mrf.mxu0
        %v2568 = vadd.f32 0.0, %v2567
        %v2569 = vpop.f32.mrf.mxu0
        %v2570 = vadd.f32 0.0, %v2569
        %v2571 = vpop.f32.mrf.mxu0
        %v2572 = vadd.f32 0.0, %v2571
        %v2573 = vpop.f32.mrf.mxu0
        %v2574 = vadd.f32 0.0, %v2573
        %2575 = vmatprep.mubr.bf16.mxu0 0
        %2576 = vmatmul.mubr.bf16.gmra.mxu0 %v1622
        %v2577 = vpop.f32.mrf.mxu0
        %v2578 = vadd.f32 0.0, %v2577
        %v2579 = vpop.f32.mrf.mxu0
        %v2580 = vadd.f32 0.0, %v2579
        %v2581 = vpop.f32.mrf.mxu0
        %v2582 = vadd.f32 0.0, %v2581
        %v2583 = vpop.f32.mrf.mxu0
        %v2584 = vadd.f32 0.0, %v2583
        %2585 = vmatprep.mubr.bf16.mxu0 0
        %2586 = vmatmul.mubr.bf16.gmra.mxu0 %v1624
        %v2587 = vpop.f32.mrf.mxu0
        %v2588 = vadd.f32 0.0, %v2587
        %v2589 = vpop.f32.mrf.mxu0
        %v2590 = vadd.f32 0.0, %v2589
        %v2591 = vpop.f32.mrf.mxu0
        %v2592 = vadd.f32 0.0, %v2591
        %v2593 = vpop.f32.mrf.mxu0
        %v2594 = vadd.f32 0.0, %v2593
        %2595 = vmatprep.mubr.bf16.mxu0 0
        %2596 = vmatmul.mubr.bf16.gmra.mxu0 %v1626
        %v2597 = vpop.f32.mrf.mxu0
        %v2598 = vadd.f32 0.0, %v2597
        %v2599 = vpop.f32.mrf.mxu0
        %v2600 = vadd.f32 0.0, %v2599
        %v2601 = vpop.f32.mrf.mxu0
        %v2602 = vadd.f32 0.0, %v2601
        %v2603 = vpop.f32.mrf.mxu0
        %v2604 = vadd.f32 0.0, %v2603
        %2605 = vmatprep.mubr.bf16.mxu0 0
        %2606 = vmatmul.mubr.bf16.gmra.mxu0 %v1628
        %v2607 = vpop.f32.mrf.mxu0
        %v2608 = vadd.f32 0.0, %v2607
        %v2609 = vpop.f32.mrf.mxu0
        %v2610 = vadd.f32 0.0, %v2609
        %v2611 = vpop.f32.mrf.mxu0
        %v2612 = vadd.f32 0.0, %v2611
        %v2613 = vpop.f32.mrf.mxu0
        %v2614 = vadd.f32 0.0, %v2613
        %2615 = vmatprep.mubr.bf16.mxu0 0
        %2616 = vmatmul.mubr.bf16.gmra.mxu0 %v1630
        %v2617 = vpop.f32.mrf.mxu0
        %v2618 = vadd.f32 0.0, %v2617
        %v2619 = vpop.f32.mrf.mxu0
        %v2620 = vadd.f32 0.0, %v2619
        %v2621 = vpop.f32.mrf.mxu0
        %v2622 = vadd.f32 0.0, %v2621
        %v2623 = vpop.f32.mrf.mxu0
        %v2624 = vadd.f32 0.0, %v2623
        %2625 = vmatprep.mubr.bf16.mxu0 0
        %2626 = vmatmul.mubr.bf16.gmra.mxu0 %v1632
        %v2627 = vpop.f32.mrf.mxu0
        %v2628 = vadd.f32 0.0, %v2627
        %v2629 = vpop.f32.mrf.mxu0
        %v2630 = vadd.f32 0.0, %v2629
        %v2631 = vpop.f32.mrf.mxu0
        %v2632 = vadd.f32 0.0, %v2631
        %v2633 = vpop.f32.mrf.mxu0
        %v2634 = vadd.f32 0.0, %v2633
        %2635 = vmatprep.mubr.bf16.mxu0 0
        %2636 = vmatmul.mubr.bf16.gmra.mxu0 %v1634
        %v2637 = vpop.f32.mrf.mxu0
        %v2638 = vadd.f32 0.0, %v2637
        %v2639 = vpop.f32.mrf.mxu0
        %v2640 = vadd.f32 0.0, %v2639
        %v2641 = vpop.f32.mrf.mxu0
        %v2642 = vadd.f32 0.0, %v2641
        %v2643 = vpop.f32.mrf.mxu0
        %v2644 = vadd.f32 0.0, %v2643
        %2645 = vmatprep.mubr.bf16.mxu0 0
        %2646 = vmatmul.mubr.bf16.gmra.mxu0 %v1636
        %v2647 = vpop.f32.mrf.mxu0
        %v2648 = vadd.f32 0.0, %v2647
        %v2649 = vpop.f32.mrf.mxu0
        %v2650 = vadd.f32 0.0, %v2649
        %v2651 = vpop.f32.mrf.mxu0
        %v2652 = vadd.f32 0.0, %v2651
        %v2653 = vpop.f32.mrf.mxu0
        %v2654 = vadd.f32 0.0, %v2653
        %2655 = vmatprep.mubr.bf16.mxu0 0
        %2656 = vmatmul.mubr.bf16.gmra.mxu0 %v1638
        %v2657 = vpop.f32.mrf.mxu0
        %v2658 = vadd.f32 0.0, %v2657
        %v2659 = vpop.f32.mrf.mxu0
        %v2660 = vadd.f32 0.0, %v2659
        %v2661 = vpop.f32.mrf.mxu0
        %v2662 = vadd.f32 0.0, %v2661
        %v2663 = vpop.f32.mrf.mxu0
        %v2664 = vadd.f32 0.0, %v2663
        %2665 = vmatprep.mubr.bf16.mxu0 0
        %2666 = vmatmul.mubr.bf16.gmra.mxu0 %v1640
        %v2667 = vpop.f32.mrf.mxu0
        %v2668 = vadd.f32 0.0, %v2667
        %v2669 = vpop.f32.mrf.mxu0
        %v2670 = vadd.f32 0.0, %v2669
        %v2671 = vpop.f32.mrf.mxu0
        %v2672 = vadd.f32 0.0, %v2671
        %v2673 = vpop.f32.mrf.mxu0
        %v2674 = vadd.f32 0.0, %v2673
        %2675 = vmatprep.mubr.bf16.mxu0 0
        %2676 = vmatmul.mubr.bf16.gmra.mxu0 %v1642
        %v2677 = vpop.f32.mrf.mxu0
        %v2678 = vadd.f32 0.0, %v2677
        %v2679 = vpop.f32.mrf.mxu0
        %v2680 = vadd.f32 0.0, %v2679
        %v2681 = vpop.f32.mrf.mxu0
        %v2682 = vadd.f32 0.0, %v2681
        %v2683 = vpop.f32.mrf.mxu0
        %v2684 = vadd.f32 0.0, %v2683
        %2685 = vmatprep.mubr.bf16.mxu0 0
        %2686 = vmatmul.mubr.bf16.gmra.mxu0 %v1644
        %v2687 = vpop.f32.mrf.mxu0
        %v2688 = vadd.f32 0.0, %v2687
        %v2689 = vpop.f32.mrf.mxu0
        %v2690 = vadd.f32 0.0, %v2689
        %v2691 = vpop.f32.mrf.mxu0
        %v2692 = vadd.f32 0.0, %v2691
        %v2693 = vpop.f32.mrf.mxu0
        %v2694 = vadd.f32 0.0, %v2693
        %2695 = vmatprep.mubr.bf16.mxu0 0
        %2696 = vmatmul.mubr.bf16.gmra.mxu0 %v1646
        %v2697 = vpop.f32.mrf.mxu0
        %v2698 = vadd.f32 0.0, %v2697
        %v2699 = vpop.f32.mrf.mxu0
        %v2700 = vadd.f32 0.0, %v2699
        %v2701 = vpop.f32.mrf.mxu0
        %v2702 = vadd.f32 0.0, %v2701
        %v2703 = vpop.f32.mrf.mxu0
        %v2704 = vadd.f32 0.0, %v2703
        %2705 = vdwg.mxu0
        %v2706 = vmax.f32 %v2548, %v2550
        %2707 = vmax.xlane.f32.xlu0 %v2706
        %v2708 = vpop.xlane.xlu0 %2707
        %v2709 = vmax.f32 %v2552, %v2554
        %2710 = vmax.xlane.f32.xlu0 %v2709
        %v2711 = vpop.xlane.xlu0 %2710
        %v2712 = vmax.f32 %v2558, %v2560
        %2713 = vmax.xlane.f32.xlu0 %v2712
        %v2714 = vpop.xlane.xlu0 %2713
        %v2715 = vmax.f32 %v2562, %v2564
        %2716 = vmax.xlane.f32.xlu0 %v2715
        %v2717 = vpop.xlane.xlu0 %2716
        %v2718 = vmax.f32 %v2568, %v2570
        %2719 = vmax.xlane.f32.xlu0 %v2718
        %v2720 = vpop.xlane.xlu0 %2719
        %v2721 = vmax.f32 %v2572, %v2574
        %2722 = vmax.xlane.f32.xlu0 %v2721
        %v2723 = vpop.xlane.xlu0 %2722
        %v2724 = vmax.f32 %v2578, %v2580
        %2725 = vmax.xlane.f32.xlu0 %v2724
        %v2726 = vpop.xlane.xlu0 %2725
        %v2727 = vmax.f32 %v2582, %v2584
        %2728 = vmax.xlane.f32.xlu0 %v2727
        %v2729 = vpop.xlane.xlu0 %2728
        %v2730 = vmax.f32 %v2588, %v2590
        %2731 = vmax.xlane.f32.xlu0 %v2730
        %v2732 = vpop.xlane.xlu0 %2731
        %v2733 = vmax.f32 %v2592, %v2594
        %2734 = vmax.xlane.f32.xlu0 %v2733
        %v2735 = vpop.xlane.xlu0 %2734
        %v2736 = vmax.f32 %v2598, %v2600
        %2737 = vmax.xlane.f32.xlu0 %v2736
        %v2738 = vpop.xlane.xlu0 %2737
        %v2739 = vmax.f32 %v2602, %v2604
        %2740 = vmax.xlane.f32.xlu0 %v2739
        %v2741 = vpop.xlane.xlu0 %2740
        %v2742 = vmax.f32 %v2608, %v2610
        %2743 = vmax.xlane.f32.xlu0 %v2742
        %v2744 = vpop.xlane.xlu0 %2743
        %v2745 = vmax.f32 %v2612, %v2614
        %2746 = vmax.xlane.f32.xlu0 %v2745
        %v2747 = vpop.xlane.xlu0 %2746
        %v2748 = vmax.f32 %v2618, %v2620
        %2749 = vmax.xlane.f32.xlu0 %v2748
        %v2750 = vpop.xlane.xlu0 %2749
        %v2751 = vmax.f32 %v2622, %v2624
        %2752 = vmax.xlane.f32.xlu0 %v2751
        %v2753 = vpop.xlane.xlu0 %2752
        %v2754 = vmax.f32 %v2628, %v2630
        %2755 = vmax.xlane.f32.xlu0 %v2754
        %v2756 = vpop.xlane.xlu0 %2755
        %v2757 = vmax.f32 %v2632, %v2634
        %2758 = vmax.xlane.f32.xlu0 %v2757
        %v2759 = vpop.xlane.xlu0 %2758
        %v2760 = vmax.f32 %v2638, %v2640
        %2761 = vmax.xlane.f32.xlu0 %v2760
        %v2762 = vpop.xlane.xlu0 %2761
        %v2763 = vmax.f32 %v2642, %v2644
        %2764 = vmax.xlane.f32.xlu0 %v2763
        %v2765 = vpop.xlane.xlu0 %2764
        %v2766 = vmax.f32 %v2648, %v2650
        %2767 = vmax.xlane.f32.xlu0 %v2766
        %v2768 = vpop.xlane.xlu0 %2767
        %v2769 = vmax.f32 %v2652, %v2654
        %2770 = vmax.xlane.f32.xlu0 %v2769
        %v2771 = vpop.xlane.xlu0 %2770
        %v2772 = vmax.f32 %v2658, %v2660
        %2773 = vmax.xlane.f32.xlu0 %v2772
        %v2774 = vpop.xlane.xlu0 %2773
        %v2775 = vmax.f32 %v2662, %v2664
        %2776 = vmax.xlane.f32.xlu0 %v2775
        %v2777 = vpop.xlane.xlu0 %2776
        %v2778 = vmax.f32 %v2668, %v2670
        %2779 = vmax.xlane.f32.xlu0 %v2778
        %v2780 = vpop.xlane.xlu0 %2779
        %v2781 = vmax.f32 %v2672, %v2674
        %2782 = vmax.xlane.f32.xlu0 %v2781
        %v2783 = vpop.xlane.xlu0 %2782
        %v2784 = vmax.f32 %v2678, %v2680
        %2785 = vmax.xlane.f32.xlu0 %v2784
        %v2786 = vpop.xlane.xlu0 %2785
        %v2787 = vmax.f32 %v2682, %v2684
        %2788 = vmax.xlane.f32.xlu0 %v2787
        %v2789 = vpop.xlane.xlu0 %2788
        %v2790 = vmax.f32 %v2688, %v2690
        %2791 = vmax.xlane.f32.xlu0 %v2790
        %v2792 = vpop.xlane.xlu0 %2791
        %v2793 = vmax.f32 %v2692, %v2694
        %2794 = vmax.xlane.f32.xlu0 %v2793
        %v2795 = vpop.xlane.xlu0 %2794
        %v2796 = vmax.f32 %v2698, %v2700
        %2797 = vmax.xlane.f32.xlu0 %v2796
        %v2798 = vpop.xlane.xlu0 %2797
        %v2799 = vmax.f32 %v2702, %v2704
        %2800 = vmax.xlane.f32.xlu0 %v2799
        %v2801 = vpop.xlane.xlu0 %2800
        %v2802 = vsub.f32 %v2548, %v2708
        %v2803 = vsub.f32 %v2550, %v2708
        %v2804 = vsub.f32 %v2552, %v2711
        %v2805 = vsub.f32 %v2554, %v2711
        %v2806 = vsub.f32 %v2558, %v2714
        %v2807 = vsub.f32 %v2560, %v2714
        %v2808 = vsub.f32 %v2562, %v2717
        %v2809 = vsub.f32 %v2564, %v2717
        %v2810 = vsub.f32 %v2568, %v2720
        %v2811 = vsub.f32 %v2570, %v2720
        %v2812 = vsub.f32 %v2572, %v2723
        %v2813 = vsub.f32 %v2574, %v2723
        %v2814 = vsub.f32 %v2578, %v2726
        %v2815 = vsub.f32 %v2580, %v2726
        %v2816 = vsub.f32 %v2582, %v2729
        %v2817 = vsub.f32 %v2584, %v2729
        %v2818 = vsub.f32 %v2588, %v2732
        %v2819 = vsub.f32 %v2590, %v2732
        %v2820 = vsub.f32 %v2592, %v2735
        %v2821 = vsub.f32 %v2594, %v2735
        %v2822 = vsub.f32 %v2598, %v2738
        %v2823 = vsub.f32 %v2600, %v2738
        %v2824 = vsub.f32 %v2602, %v2741
        %v2825 = vsub.f32 %v2604, %v2741
        %v2826 = vsub.f32 %v2608, %v2744
        %v2827 = vsub.f32 %v2610, %v2744
        %v2828 = vsub.f32 %v2612, %v2747
        %v2829 = vsub.f32 %v2614, %v2747
        %v2830 = vsub.f32 %v2618, %v2750
        %v2831 = vsub.f32 %v2620, %v2750
        %v2832 = vsub.f32 %v2622, %v2753
        %v2833 = vsub.f32 %v2624, %v2753
        %v2834 = vsub.f32 %v2628, %v2756
        %v2835 = vsub.f32 %v2630, %v2756
        %v2836 = vsub.f32 %v2632, %v2759
        %v2837 = vsub.f32 %v2634, %v2759
        %v2838 = vsub.f32 %v2638, %v2762
        %v2839 = vsub.f32 %v2640, %v2762
        %v2840 = vsub.f32 %v2642, %v2765
        %v2841 = vsub.f32 %v2644, %v2765
        %v2842 = vsub.f32 %v2648, %v2768
        %v2843 = vsub.f32 %v2650, %v2768
        %v2844 = vsub.f32 %v2652, %v2771
        %v2845 = vsub.f32 %v2654, %v2771
        %v2846 = vsub.f32 %v2658, %v2774
        %v2847 = vsub.f32 %v2660, %v2774
        %v2848 = vsub.f32 %v2662, %v2777
        %v2849 = vsub.f32 %v2664, %v2777
        %v2850 = vsub.f32 %v2668, %v2780
        %v2851 = vsub.f32 %v2670, %v2780
        %v2852 = vsub.f32 %v2672, %v2783
        %v2853 = vsub.f32 %v2674, %v2783
        %v2854 = vsub.f32 %v2678, %v2786
        %v2855 = vsub.f32 %v2680, %v2786
        %v2856 = vsub.f32 %v2682, %v2789
        %v2857 = vsub.f32 %v2684, %v2789
        %v2858 = vsub.f32 %v2688, %v2792
        %v2859 = vsub.f32 %v2690, %v2792
        %v2860 = vsub.f32 %v2692, %v2795
        %v2861 = vsub.f32 %v2694, %v2795
        %v2862 = vsub.f32 %v2698, %v2798
        %v2863 = vsub.f32 %v2700, %v2798
        %v2864 = vsub.f32 %v2702, %v2801
        %v2865 = vsub.f32 %v2704, %v2801
        %v2866 = vmul.f32 %v2802, 1.442695
        %v2867 = vpow.pop %v2866
        %v2868 = vmul.f32 %v2803, 1.442695
        %v2869 = vpow.pop %v2868
        %v2870 = vmul.f32 %v2804, 1.442695
        %v2871 = vpow.pop %v2870
        %v2872 = vmul.f32 %v2805, 1.442695
        %v2873 = vpow.pop %v2872
        %v2874 = vmul.f32 %v2806, 1.442695
        %v2875 = vpow.pop %v2874
        %v2876 = vmul.f32 %v2807, 1.442695
        %v2877 = vpow.pop %v2876
        %v2878 = vmul.f32 %v2808, 1.442695
        %v2879 = vpow.pop %v2878
        %v2880 = vmul.f32 %v2809, 1.442695
        %v2881 = vpow.pop %v2880
        %v2882 = vmul.f32 %v2810, 1.442695
        %v2883 = vpow.pop %v2882
        %v2884 = vmul.f32 %v2811, 1.442695
        %v2885 = vpow.pop %v2884
        %v2886 = vmul.f32 %v2812, 1.442695
        %v2887 = vpow.pop %v2886
        %v2888 = vmul.f32 %v2813, 1.442695
        %v2889 = vpow.pop %v2888
        %v2890 = vmul.f32 %v2814, 1.442695
        %v2891 = vpow.pop %v2890
        %v2892 = vmul.f32 %v2815, 1.442695
        %v2893 = vpow.pop %v2892
        %v2894 = vmul.f32 %v2816, 1.442695
        %v2895 = vpow.pop %v2894
        %v2896 = vmul.f32 %v2817, 1.442695
        %v2897 = vpow.pop %v2896
        %v2898 = vmul.f32 %v2818, 1.442695
        %v2899 = vpow.pop %v2898
        %v2900 = vmul.f32 %v2819, 1.442695
        %v2901 = vpow.pop %v2900
        %v2902 = vmul.f32 %v2820, 1.442695
        %v2903 = vpow.pop %v2902
        %v2904 = vmul.f32 %v2821, 1.442695
        %v2905 = vpow.pop %v2904
        %v2906 = vmul.f32 %v2822, 1.442695
        %v2907 = vpow.pop %v2906
        %v2908 = vmul.f32 %v2823, 1.442695
        %v2909 = vpow.pop %v2908
        %v2910 = vmul.f32 %v2824, 1.442695
        %v2911 = vpow.pop %v2910
        %v2912 = vmul.f32 %v2825, 1.442695
        %v2913 = vpow.pop %v2912
        %v2914 = vmul.f32 %v2826, 1.442695
        %v2915 = vpow.pop %v2914
        %v2916 = vmul.f32 %v2827, 1.442695
        %v2917 = vpow.pop %v2916
        %v2918 = vmul.f32 %v2828, 1.442695
        %v2919 = vpow.pop %v2918
        %v2920 = vmul.f32 %v2829, 1.442695
        %v2921 = vpow.pop %v2920
        %v2922 = vmul.f32 %v2830, 1.442695
        %v2923 = vpow.pop %v2922
        %v2924 = vmul.f32 %v2831, 1.442695
        %v2925 = vpow.pop %v2924
        %v2926 = vmul.f32 %v2832, 1.442695
        %v2927 = vpow.pop %v2926
        %v2928 = vmul.f32 %v2833, 1.442695
        %v2929 = vpow.pop %v2928
        %v2930 = vmul.f32 %v2834, 1.442695
        %v2931 = vpow.pop %v2930
        %v2932 = vmul.f32 %v2835, 1.442695
        %v2933 = vpow.pop %v2932
        %v2934 = vmul.f32 %v2836, 1.442695
        %v2935 = vpow.pop %v2934
        %v2936 = vmul.f32 %v2837, 1.442695
        %v2937 = vpow.pop %v2936
        %v2938 = vmul.f32 %v2838, 1.442695
        %v2939 = vpow.pop %v2938
        %v2940 = vmul.f32 %v2839, 1.442695
        %v2941 = vpow.pop %v2940
        %v2942 = vmul.f32 %v2840, 1.442695
        %v2943 = vpow.pop %v2942
        %v2944 = vmul.f32 %v2841, 1.442695
        %v2945 = vpow.pop %v2944
        %v2946 = vmul.f32 %v2842, 1.442695
        %v2947 = vpow.pop %v2946
        %v2948 = vmul.f32 %v2843, 1.442695
        %v2949 = vpow.pop %v2948
        %v2950 = vmul.f32 %v2844, 1.442695
        %v2951 = vpow.pop %v2950
        %v2952 = vmul.f32 %v2845, 1.442695
        %v2953 = vpow.pop %v2952
        %v2954 = vmul.f32 %v2846, 1.442695
        %v2955 = vpow.pop %v2954
        %v2956 = vmul.f32 %v2847, 1.442695
        %v2957 = vpow.pop %v2956
        %v2958 = vmul.f32 %v2848, 1.442695
        %v2959 = vpow.pop %v2958
        %v2960 = vmul.f32 %v2849, 1.442695
        %v2961 = vpow.pop %v2960
        %v2962 = vmul.f32 %v2850, 1.442695
        %v2963 = vpow.pop %v2962
        %v2964 = vmul.f32 %v2851, 1.442695
        %v2965 = vpow.pop %v2964
        %v2966 = vmul.f32 %v2852, 1.442695
        %v2967 = vpow.pop %v2966
        %v2968 = vmul.f32 %v2853, 1.442695
        %v2969 = vpow.pop %v2968
        %v2970 = vmul.f32 %v2854, 1.442695
        %v2971 = vpow.pop %v2970
        %v2972 = vmul.f32 %v2855, 1.442695
        %v2973 = vpow.pop %v2972
        %v2974 = vmul.f32 %v2856, 1.442695
        %v2975 = vpow.pop %v2974
        %v2976 = vmul.f32 %v2857, 1.442695
        %v2977 = vpow.pop %v2976
        %v2978 = vmul.f32 %v2858, 1.442695
        %v2979 = vpow.pop %v2978
        %v2980 = vmul.f32 %v2859, 1.442695
        %v2981 = vpow.pop %v2980
        %v2982 = vmul.f32 %v2860, 1.442695
        %v2983 = vpow.pop %v2982
        %v2984 = vmul.f32 %v2861, 1.442695
        %v2985 = vpow.pop %v2984
        %v2986 = vmul.f32 %v2862, 1.442695
        %v2987 = vpow.pop %v2986
        %v2988 = vmul.f32 %v2863, 1.442695
        %v2989 = vpow.pop %v2988
        %v2990 = vmul.f32 %v2864, 1.442695
        %v2991 = vpow.pop %v2990
        %v2992 = vmul.f32 %v2865, 1.442695
        %v2993 = vpow.pop %v2992
        %v2994 = vadd.f32 %v2867, %v2869
        %2995 = vadd.xlane.f32.xlu0 %v2994
        %v2996 = vpop.xlane.xlu0 %2995
        %v2997 = vadd.f32 %v2871, %v2873
        %2998 = vadd.xlane.f32.xlu0 %v2997
        %v2999 = vpop.xlane.xlu0 %2998
        %v3000 = vadd.f32 %v2875, %v2877
        %3001 = vadd.xlane.f32.xlu0 %v3000
        %v3002 = vpop.xlane.xlu0 %3001
        %v3003 = vadd.f32 %v2879, %v2881
        %3004 = vadd.xlane.f32.xlu0 %v3003
        %v3005 = vpop.xlane.xlu0 %3004
        %v3006 = vadd.f32 %v2883, %v2885
        %3007 = vadd.xlane.f32.xlu0 %v3006
        %v3008 = vpop.xlane.xlu0 %3007
        %v3009 = vadd.f32 %v2887, %v2889
        %3010 = vadd.xlane.f32.xlu0 %v3009
        %v3011 = vpop.xlane.xlu0 %3010
        %v3012 = vadd.f32 %v2891, %v2893
        %3013 = vadd.xlane.f32.xlu0 %v3012
        %v3014 = vpop.xlane.xlu0 %3013
        %v3015 = vadd.f32 %v2895, %v2897
        %3016 = vadd.xlane.f32.xlu0 %v3015
        %v3017 = vpop.xlane.xlu0 %3016
        %v3018 = vadd.f32 %v2899, %v2901
        %3019 = vadd.xlane.f32.xlu0 %v3018
        %v3020 = vpop.xlane.xlu0 %3019
        %v3021 = vadd.f32 %v2903, %v2905
        %3022 = vadd.xlane.f32.xlu0 %v3021
        %v3023 = vpop.xlane.xlu0 %3022
        %v3024 = vadd.f32 %v2907, %v2909
        %3025 = vadd.xlane.f32.xlu0 %v3024
        %v3026 = vpop.xlane.xlu0 %3025
        %v3027 = vadd.f32 %v2911, %v2913
        %3028 = vadd.xlane.f32.xlu0 %v3027
        %v3029 = vpop.xlane.xlu0 %3028
        %v3030 = vadd.f32 %v2915, %v2917
        %3031 = vadd.xlane.f32.xlu0 %v3030
        %v3032 = vpop.xlane.xlu0 %3031
        %v3033 = vadd.f32 %v2919, %v2921
        %3034 = vadd.xlane.f32.xlu0 %v3033
        %v3035 = vpop.xlane.xlu0 %3034
        %v3036 = vadd.f32 %v2923, %v2925
        %3037 = vadd.xlane.f32.xlu0 %v3036
        %v3038 = vpop.xlane.xlu0 %3037
        %v3039 = vadd.f32 %v2927, %v2929
        %3040 = vadd.xlane.f32.xlu0 %v3039
        %v3041 = vpop.xlane.xlu0 %3040
        %v3042 = vadd.f32 %v2931, %v2933
        %3043 = vadd.xlane.f32.xlu0 %v3042
        %v3044 = vpop.xlane.xlu0 %3043
        %v3045 = vadd.f32 %v2935, %v2937
        %3046 = vadd.xlane.f32.xlu0 %v3045
        %v3047 = vpop.xlane.xlu0 %3046
        %v3048 = vadd.f32 %v2939, %v2941
        %3049 = vadd.xlane.f32.xlu0 %v3048
        %v3050 = vpop.xlane.xlu0 %3049
        %v3051 = vadd.f32 %v2943, %v2945
        %3052 = vadd.xlane.f32.xlu0 %v3051
        %v3053 = vpop.xlane.xlu0 %3052
        %v3054 = vadd.f32 %v2947, %v2949
        %3055 = vadd.xlane.f32.xlu0 %v3054
        %v3056 = vpop.xlane.xlu0 %3055
        %v3057 = vadd.f32 %v2951, %v2953
        %3058 = vadd.xlane.f32.xlu0 %v3057
        %v3059 = vpop.xlane.xlu0 %3058
        %v3060 = vadd.f32 %v2955, %v2957
        %3061 = vadd.xlane.f32.xlu0 %v3060
        %v3062 = vpop.xlane.xlu0 %3061
        %v3063 = vadd.f32 %v2959, %v2961
        %3064 = vadd.xlane.f32.xlu0 %v3063
        %v3065 = vpop.xlane.xlu0 %3064
        %v3066 = vadd.f32 %v2963, %v2965
        %3067 = vadd.xlane.f32.xlu0 %v3066
        %v3068 = vpop.xlane.xlu0 %3067
        %v3069 = vadd.f32 %v2967, %v2969
        %3070 = vadd.xlane.f32.xlu0 %v3069
        %v3071 = vpop.xlane.xlu0 %3070
        %v3072 = vadd.f32 %v2971, %v2973
        %3073 = vadd.xlane.f32.xlu0 %v3072
        %v3074 = vpop.xlane.xlu0 %3073
        %v3075 = vadd.f32 %v2975, %v2977
        %3076 = vadd.xlane.f32.xlu0 %v3075
        %v3077 = vpop.xlane.xlu0 %3076
        %v3078 = vadd.f32 %v2979, %v2981
        %3079 = vadd.xlane.f32.xlu0 %v3078
        %v3080 = vpop.xlane.xlu0 %3079
        %v3081 = vadd.f32 %v2983, %v2985
        %3082 = vadd.xlane.f32.xlu0 %v3081
        %v3083 = vpop.xlane.xlu0 %3082
        %v3084 = vadd.f32 %v2987, %v2989
        %3085 = vadd.xlane.f32.xlu0 %v3084
        %v3086 = vpop.xlane.xlu0 %3085
        %v3087 = vadd.f32 %v2991, %v2993
        %3088 = vadd.xlane.f32.xlu0 %v3087
        %v3089 = vpop.xlane.xlu0 %3088
        %v3090 = vrcp.pop %v2996
        %v3091 = vmul.f32 %v2867, %v3090
        %v3092 = vmul.f32 %v2869, %v3090
        %v3093 = vrcp.pop %v2999
        %v3094 = vmul.f32 %v2871, %v3093
        %v3095 = vmul.f32 %v2873, %v3093
        %v3096 = vrcp.pop %v3002
        %v3097 = vmul.f32 %v2875, %v3096
        %v3098 = vmul.f32 %v2877, %v3096
        %v3099 = vrcp.pop %v3005
        %v3100 = vmul.f32 %v2879, %v3099
        %v3101 = vmul.f32 %v2881, %v3099
        %v3102 = vrcp.pop %v3008
        %v3103 = vmul.f32 %v2883, %v3102
        %v3104 = vmul.f32 %v2885, %v3102
        %v3105 = vrcp.pop %v3011
        %v3106 = vmul.f32 %v2887, %v3105
        %v3107 = vmul.f32 %v2889, %v3105
        %v3108 = vrcp.pop %v3014
        %v3109 = vmul.f32 %v2891, %v3108
        %v3110 = vmul.f32 %v2893, %v3108
        %v3111 = vrcp.pop %v3017
        %v3112 = vmul.f32 %v2895, %v3111
        %v3113 = vmul.f32 %v2897, %v3111
        %v3114 = vrcp.pop %v3020
        %v3115 = vmul.f32 %v2899, %v3114
        %v3116 = vmul.f32 %v2901, %v3114
        %v3117 = vrcp.pop %v3023
        %v3118 = vmul.f32 %v2903, %v3117
        %v3119 = vmul.f32 %v2905, %v3117
        %v3120 = vrcp.pop %v3026
        %v3121 = vmul.f32 %v2907, %v3120
        %v3122 = vmul.f32 %v2909, %v3120
        %v3123 = vrcp.pop %v3029
        %v3124 = vmul.f32 %v2911, %v3123
        %v3125 = vmul.f32 %v2913, %v3123
        %v3126 = vrcp.pop %v3032
        %v3127 = vmul.f32 %v2915, %v3126
        %v3128 = vmul.f32 %v2917, %v3126
        %v3129 = vrcp.pop %v3035
        %v3130 = vmul.f32 %v2919, %v3129
        %v3131 = vmul.f32 %v2921, %v3129
        %v3132 = vrcp.pop %v3038
        %v3133 = vmul.f32 %v2923, %v3132
        %v3134 = vmul.f32 %v2925, %v3132
        %v3135 = vrcp.pop %v3041
        %v3136 = vmul.f32 %v2927, %v3135
        %v3137 = vmul.f32 %v2929, %v3135
        %v3138 = vrcp.pop %v3044
        %v3139 = vmul.f32 %v2931, %v3138
        %v3140 = vmul.f32 %v2933, %v3138
        %v3141 = vrcp.pop %v3047
        %v3142 = vmul.f32 %v2935, %v3141
        %v3143 = vmul.f32 %v2937, %v3141
        %v3144 = vrcp.pop %v3050
        %v3145 = vmul.f32 %v2939, %v3144
        %v3146 = vmul.f32 %v2941, %v3144
        %v3147 = vrcp.pop %v3053
        %v3148 = vmul.f32 %v2943, %v3147
        %v3149 = vmul.f32 %v2945, %v3147
        %v3150 = vrcp.pop %v3056
        %v3151 = vmul.f32 %v2947, %v3150
        %v3152 = vmul.f32 %v2949, %v3150
        %v3153 = vrcp.pop %v3059
        %v3154 = vmul.f32 %v2951, %v3153
        %v3155 = vmul.f32 %v2953, %v3153
        %v3156 = vrcp.pop %v3062
        %v3157 = vmul.f32 %v2955, %v3156
        %v3158 = vmul.f32 %v2957, %v3156
        %v3159 = vrcp.pop %v3065
        %v3160 = vmul.f32 %v2959, %v3159
        %v3161 = vmul.f32 %v2961, %v3159
        %v3162 = vrcp.pop %v3068
        %v3163 = vmul.f32 %v2963, %v3162
        %v3164 = vmul.f32 %v2965, %v3162
        %v3165 = vrcp.pop %v3071
        %v3166 = vmul.f32 %v2967, %v3165
        %v3167 = vmul.f32 %v2969, %v3165
        %v3168 = vrcp.pop %v3074
        %v3169 = vmul.f32 %v2971, %v3168
        %v3170 = vmul.f32 %v2973, %v3168
        %v3171 = vrcp.pop %v3077
        %v3172 = vmul.f32 %v2975, %v3171
        %v3173 = vmul.f32 %v2977, %v3171
        %v3174 = vrcp.pop %v3080
        %v3175 = vmul.f32 %v2979, %v3174
        %v3176 = vmul.f32 %v2981, %v3174
        %v3177 = vrcp.pop %v3083
        %v3178 = vmul.f32 %v2983, %v3177
        %v3179 = vmul.f32 %v2985, %v3177
        %v3180 = vrcp.pop %v3086
        %v3181 = vmul.f32 %v2987, %v3180
        %v3182 = vmul.f32 %v2989, %v3180
        %v3183 = vrcp.pop %v3089
        %v3184 = vmul.f32 %v2991, %v3183
        %v3185 = vmul.f32 %v2993, %v3183
        %v3186 = vpack.c.bf16 %v3094, %v3091
        %v3187 = vpack.c.bf16 %v3095, %v3092
        %v3188 = vpack.c.bf16 %v3100, %v3097
        %v3189 = vpack.c.bf16 %v3101, %v3098
        %v3190 = vpack.c.bf16 %v3106, %v3103
        %v3191 = vpack.c.bf16 %v3107, %v3104
        %v3192 = vpack.c.bf16 %v3112, %v3109
        %v3193 = vpack.c.bf16 %v3113, %v3110
        %v3194 = vpack.c.bf16 %v3118, %v3115
        %v3195 = vpack.c.bf16 %v3119, %v3116
        %v3196 = vpack.c.bf16 %v3124, %v3121
        %v3197 = vpack.c.bf16 %v3125, %v3122
        %v3198 = vpack.c.bf16 %v3130, %v3127
        %v3199 = vpack.c.bf16 %v3131, %v3128
        %v3200 = vpack.c.bf16 %v3136, %v3133
        %v3201 = vpack.c.bf16 %v3137, %v3134
        %v3202 = vpack.c.bf16 %v3142, %v3139
        %v3203 = vpack.c.bf16 %v3143, %v3140
        %v3204 = vpack.c.bf16 %v3148, %v3145
        %v3205 = vpack.c.bf16 %v3149, %v3146
        %v3206 = vpack.c.bf16 %v3154, %v3151
        %v3207 = vpack.c.bf16 %v3155, %v3152
        %v3208 = vpack.c.bf16 %v3160, %v3157
        %v3209 = vpack.c.bf16 %v3161, %v3158
        %v3210 = vpack.c.bf16 %v3166, %v3163
        %v3211 = vpack.c.bf16 %v3167, %v3164
        %v3212 = vpack.c.bf16 %v3172, %v3169
        %v3213 = vpack.c.bf16 %v3173, %v3170
        %v3214 = vpack.c.bf16 %v3178, %v3175
        %v3215 = vpack.c.bf16 %v3179, %v3176
        %v3216 = vpack.c.bf16 %v3184, %v3181
        %v3217 = vpack.c.bf16 %v3185, %v3182
        %3218 = vmatprep.subr.bf16.mxu0 0
        %3219 = vmatpush1.bf16.msra.mxu0 %v1281
        %3220 = vmatprep.subr.bf16.mxu0 0
        %3221 = vmatpush1.bf16.msra.mxu0 %v1277
        %3222 = vmatprep.subr.bf16.mxu0 0
        %3223 = vmatpush1.bf16.msra.mxu0 %v1273
        %3224 = vmatprep.subr.bf16.mxu0 0
        %3225 = vmatpush1.bf16.msra.mxu0 %v1269
        %3226 = vmatprep.subr.bf16.mxu0 0
        %3227 = vmatpush1.bf16.msra.mxu0 %v1265
        %3228 = vmatprep.subr.bf16.mxu0 0
        %3229 = vmatpush1.bf16.msra.mxu0 %v1261
        %3230 = vmatprep.subr.bf16.mxu0 0
        %3231 = vmatpush1.bf16.msra.mxu0 %v1257
        %3232 = vmatprep.subr.bf16.mxu0 0
        %3233 = vmatpush1.bf16.msra.mxu0 %v1253
        %3234 = vmatprep.subr.bf16.mxu0 0
        %3235 = vmatpush2.bf16.msra.mxu0 %v1313
        %3236 = vmatprep.subr.bf16.mxu0 0
        %3237 = vmatpush2.bf16.msra.mxu0 %v1309
        %3238 = vmatprep.subr.bf16.mxu0 0
        %3239 = vmatpush2.bf16.msra.mxu0 %v1305
        %3240 = vmatprep.subr.bf16.mxu0 0
        %3241 = vmatpush2.bf16.msra.mxu0 %v1301
        %3242 = vmatprep.subr.bf16.mxu0 0
        %3243 = vmatpush2.bf16.msra.mxu0 %v1297
        %3244 = vmatprep.subr.bf16.mxu0 0
        %3245 = vmatpush2.bf16.msra.mxu0 %v1293
        %3246 = vmatprep.subr.bf16.mxu0 0
        %3247 = vmatpush2.bf16.msra.mxu0 %v1289
        %3248 = vmatprep.subr.bf16.mxu0 0
        %3249 = vmatpush2.bf16.msra.mxu0 %v1285
        %3250 = vmatprep.mubr.bf16.mxu0 %v3187
        %3251 = vmatmul.mubr.bf16.gmra.mxu0 %v3186
        %v3252 = vpop.f32.mrf.mxu0
        %v3253 = vadd.f32 0.0, %v3252
        %v3254 = vpop.f32.mrf.mxu0
        %v3255 = vpop.f32.mrf.mxu0
        %v3256 = vadd.f32 0.0, %v3255
        %v3257 = vpop.f32.mrf.mxu0
        %3258 = vmatprep.mubr.bf16.mxu0 %v3189
        %3259 = vmatmul.mubr.bf16.gmra.mxu0 %v3188
        %v3260 = vpop.f32.mrf.mxu0
        %v3261 = vadd.f32 0.0, %v3260
        %v3262 = vpop.f32.mrf.mxu0
        %v3263 = vpop.f32.mrf.mxu0
        %v3264 = vadd.f32 0.0, %v3263
        %v3265 = vpop.f32.mrf.mxu0
        %3266 = vmatprep.mubr.bf16.mxu0 %v3191
        %3267 = vmatmul.mubr.bf16.gmra.mxu0 %v3190
        %v3268 = vpop.f32.mrf.mxu0
        %v3269 = vadd.f32 0.0, %v3268
        %v3270 = vpop.f32.mrf.mxu0
        %v3271 = vpop.f32.mrf.mxu0
        %v3272 = vadd.f32 0.0, %v3271
        %v3273 = vpop.f32.mrf.mxu0
        %3274 = vmatprep.mubr.bf16.mxu0 %v3193
        %3275 = vmatmul.mubr.bf16.gmra.mxu0 %v3192
        %v3276 = vpop.f32.mrf.mxu0
        %v3277 = vadd.f32 0.0, %v3276
        %v3278 = vpop.f32.mrf.mxu0
        %v3279 = vpop.f32.mrf.mxu0
        %v3280 = vadd.f32 0.0, %v3279
        %v3281 = vpop.f32.mrf.mxu0
        %3282 = vmatprep.mubr.bf16.mxu0 %v3195
        %3283 = vmatmul.mubr.bf16.gmra.mxu0 %v3194
        %v3284 = vpop.f32.mrf.mxu0
        %v3285 = vadd.f32 0.0, %v3284
        %v3286 = vpop.f32.mrf.mxu0
        %v3287 = vpop.f32.mrf.mxu0
        %v3288 = vadd.f32 0.0, %v3287
        %v3289 = vpop.f32.mrf.mxu0
        %3290 = vmatprep.mubr.bf16.mxu0 %v3197
        %3291 = vmatmul.mubr.bf16.gmra.mxu0 %v3196
        %v3292 = vpop.f32.mrf.mxu0
        %v3293 = vadd.f32 0.0, %v3292
        %v3294 = vpop.f32.mrf.mxu0
        %v3295 = vpop.f32.mrf.mxu0
        %v3296 = vadd.f32 0.0, %v3295
        %v3297 = vpop.f32.mrf.mxu0
        %3298 = vmatprep.mubr.bf16.mxu0 %v3199
        %3299 = vmatmul.mubr.bf16.gmra.mxu0 %v3198
        %v3300 = vpop.f32.mrf.mxu0
        %v3301 = vadd.f32 0.0, %v3300
        %v3302 = vpop.f32.mrf.mxu0
        %v3303 = vpop.f32.mrf.mxu0
        %v3304 = vadd.f32 0.0, %v3303
        %v3305 = vpop.f32.mrf.mxu0
        %3306 = vmatprep.mubr.bf16.mxu0 %v3201
        %3307 = vmatmul.mubr.bf16.gmra.mxu0 %v3200
        %v3308 = vpop.f32.mrf.mxu0
        %v3309 = vadd.f32 0.0, %v3308
        %v3310 = vpop.f32.mrf.mxu0
        %v3311 = vpop.f32.mrf.mxu0
        %v3312 = vadd.f32 0.0, %v3311
        %v3313 = vpop.f32.mrf.mxu0
        %3314 = vmatprep.mubr.bf16.mxu0 %v3203
        %3315 = vmatmul.mubr.bf16.gmra.mxu0 %v3202
        %v3316 = vpop.f32.mrf.mxu0
        %v3317 = vadd.f32 0.0, %v3316
        %v3318 = vpop.f32.mrf.mxu0
        %v3319 = vpop.f32.mrf.mxu0
        %v3320 = vadd.f32 0.0, %v3319
        %v3321 = vpop.f32.mrf.mxu0
        %3322 = vmatprep.mubr.bf16.mxu0 %v3205
        %3323 = vmatmul.mubr.bf16.gmra.mxu0 %v3204
        %v3324 = vpop.f32.mrf.mxu0
        %v3325 = vadd.f32 0.0, %v3324
        %v3326 = vpop.f32.mrf.mxu0
        %v3327 = vpop.f32.mrf.mxu0
        %v3328 = vadd.f32 0.0, %v3327
        %v3329 = vpop.f32.mrf.mxu0
        %3330 = vmatprep.mubr.bf16.mxu0 %v3207
        %3331 = vmatmul.mubr.bf16.gmra.mxu0 %v3206
        %v3332 = vpop.f32.mrf.mxu0
        %v3333 = vadd.f32 0.0, %v3332
        %v3334 = vpop.f32.mrf.mxu0
        %v3335 = vpop.f32.mrf.mxu0
        %v3336 = vadd.f32 0.0, %v3335
        %v3337 = vpop.f32.mrf.mxu0
        %3338 = vmatprep.mubr.bf16.mxu0 %v3209
        %3339 = vmatmul.mubr.bf16.gmra.mxu0 %v3208
        %v3340 = vpop.f32.mrf.mxu0
        %v3341 = vadd.f32 0.0, %v3340
        %v3342 = vpop.f32.mrf.mxu0
        %v3343 = vpop.f32.mrf.mxu0
        %v3344 = vadd.f32 0.0, %v3343
        %v3345 = vpop.f32.mrf.mxu0
        %3346 = vmatprep.mubr.bf16.mxu0 %v3211
        %3347 = vmatmul.mubr.bf16.gmra.mxu0 %v3210
        %v3348 = vpop.f32.mrf.mxu0
        %v3349 = vadd.f32 0.0, %v3348
        %v3350 = vpop.f32.mrf.mxu0
        %v3351 = vpop.f32.mrf.mxu0
        %v3352 = vadd.f32 0.0, %v3351
        %v3353 = vpop.f32.mrf.mxu0
        %3354 = vmatprep.mubr.bf16.mxu0 %v3213
        %3355 = vmatmul.mubr.bf16.gmra.mxu0 %v3212
        %v3356 = vpop.f32.mrf.mxu0
        %v3357 = vadd.f32 0.0, %v3356
        %v3358 = vpop.f32.mrf.mxu0
        %v3359 = vpop.f32.mrf.mxu0
        %v3360 = vadd.f32 0.0, %v3359
        %v3361 = vpop.f32.mrf.mxu0
        %3362 = vmatprep.mubr.bf16.mxu0 %v3215
        %3363 = vmatmul.mubr.bf16.gmra.mxu0 %v3214
        %v3364 = vpop.f32.mrf.mxu0
        %v3365 = vadd.f32 0.0, %v3364
        %v3366 = vpop.f32.mrf.mxu0
        %v3367 = vpop.f32.mrf.mxu0
        %v3368 = vadd.f32 0.0, %v3367
        %v3369 = vpop.f32.mrf.mxu0
        %3370 = vmatprep.mubr.bf16.mxu0 %v3217
        %3371 = vmatmul.mubr.bf16.gmra.mxu0 %v3216
        %v3372 = vpop.f32.mrf.mxu0
        %v3373 = vadd.f32 0.0, %v3372
        %v3374 = vpop.f32.mrf.mxu0
        %v3375 = vpop.f32.mrf.mxu0
        %v3376 = vadd.f32 0.0, %v3375
        %v3377 = vpop.f32.mrf.mxu0
        %3378 = vdwg.mxu0
        %v3379 = vpack.c.bf16 %v2390, %v2387
        %v3380 = vpack.c.bf16 %v3256, %v3253
        %v3381 = vpack.c.bf16 %v2398, %v2395
        %v3382 = vpack.c.bf16 %v3264, %v3261
        %v3383 = vpack.c.bf16 %v2406, %v2403
        %v3384 = vpack.c.bf16 %v3272, %v3269
        %v3385 = vpack.c.bf16 %v2414, %v2411
        %v3386 = vpack.c.bf16 %v3280, %v3277
        %v3387 = vpack.c.bf16 %v2422, %v2419
        %v3388 = vpack.c.bf16 %v3288, %v3285
        %v3389 = vpack.c.bf16 %v2430, %v2427
        %v3390 = vpack.c.bf16 %v3296, %v3293
        %v3391 = vpack.c.bf16 %v2438, %v2435
        %v3392 = vpack.c.bf16 %v3304, %v3301
        %v3393 = vpack.c.bf16 %v2446, %v2443
        %v3394 = vpack.c.bf16 %v3312, %v3309
        %v3395 = vpack.c.bf16 %v2454, %v2451
        %v3396 = vpack.c.bf16 %v3320, %v3317
        %v3397 = vpack.c.bf16 %v2462, %v2459
        %v3398 = vpack.c.bf16 %v3328, %v3325
        %v3399 = vpack.c.bf16 %v2470, %v2467
        %v3400 = vpack.c.bf16 %v3336, %v3333
        %v3401 = vpack.c.bf16 %v2478, %v2475
        %v3402 = vpack.c.bf16 %v3344, %v3341
        %v3403 = vpack.c.bf16 %v2486, %v2483
        %v3404 = vpack.c.bf16 %v3352, %v3349
        %v3405 = vpack.c.bf16 %v2494, %v2491
        %v3406 = vpack.c.bf16 %v3360, %v3357
        %v3407 = vpack.c.bf16 %v2502, %v2499
        %v3408 = vpack.c.bf16 %v3368, %v3365
        %v3409 = vpack.c.bf16 %v2510, %v2507
        %v3410 = vpack.c.bf16 %v3376, %v3373
        %v3411 = vld [vmem:[#allocation8] sm:$0xf]
        %v3412 = vld [vmem:[#allocation8 + $0x4] sm:$0xf]
        %v3413 = vld [vmem:[#allocation8 + $0x8] sm:$0xf]
        %v3414 = vld [vmem:[#allocation8 + $0xc] sm:$0xf]
        %v3415 = vld [vmem:[#allocation8 + $0x10] sm:$0xf]
        %v3416 = vld [vmem:[#allocation8 + $0x14] sm:$0xf]
        %v3417 = vld [vmem:[#allocation8 + $0x18] sm:$0xf]
        %v3418 = vld [vmem:[#allocation8 + $0x1c] sm:$0xf]
        %v3419 = vld [vmem:[#allocation8 + $0x20] sm:$0xf]
        %v3420 = vld [vmem:[#allocation8 + $0x24] sm:$0xf]
        %v3421 = vld [vmem:[#allocation8 + $0x28] sm:$0xf]
        %v3422 = vld [vmem:[#allocation8 + $0x2c] sm:$0xf]
        %v3423 = vld [vmem:[#allocation8 + $0x30] sm:$0xf]
        %v3424 = vld [vmem:[#allocation8 + $0x34] sm:$0xf]
        %v3425 = vld [vmem:[#allocation8 + $0x38] sm:$0xf]
        %v3426 = vld [vmem:[#allocation8 + $0x3c] sm:$0xf]
        %v3427 = vld [vmem:[#allocation8 + $0x40] sm:$0xf]
        %v3428 = vld [vmem:[#allocation8 + $0x44] sm:$0xf]
        %v3429 = vld [vmem:[#allocation8 + $0x48] sm:$0xf]
        %v3430 = vld [vmem:[#allocation8 + $0x4c] sm:$0xf]
        %v3431 = vld [vmem:[#allocation8 + $0x50] sm:$0xf]
        %v3432 = vld [vmem:[#allocation8 + $0x54] sm:$0xf]
        %v3433 = vld [vmem:[#allocation8 + $0x58] sm:$0xf]
        %v3434 = vld [vmem:[#allocation8 + $0x5c] sm:$0xf]
        %v3435 = vld [vmem:[#allocation8 + $0x60] sm:$0xf]
        %v3436 = vld [vmem:[#allocation8 + $0x64] sm:$0xf]
        %v3437 = vld [vmem:[#allocation8 + $0x68] sm:$0xf]
        %v3438 = vld [vmem:[#allocation8 + $0x6c] sm:$0xf]
        %v3439 = vld [vmem:[#allocation8 + $0x70] sm:$0xf]
        %v3440 = vld [vmem:[#allocation8 + $0x74] sm:$0xf]
        %v3441 = vld [vmem:[#allocation8 + $0x78] sm:$0xf]
        %v3442 = vld [vmem:[#allocation8 + $0x7c] sm:$0xf]
        %v3443 = vld [vmem:[%s6] sm:$0x1]
        %v3445 = vlaneseq
        %v3446 = vshrl.u32 %v3445, 7
        %v3447 = vsub.s32 0, %v3446
        %v3448 = vrot.slane %v3443, %v3447
        %v3482 = vunpack.c.l.b16 %v3411
        %v3483 = vunpack.c.l.b16 %v3412
        %v3484 = vunpack.c.l.b16 %v3413
        %v3485 = vunpack.c.l.b16 %v3414
        %v3486 = vunpack.c.l.b16 %v3415
        %v3487 = vunpack.c.l.b16 %v3416
        %v3488 = vunpack.c.l.b16 %v3417
        %v3489 = vunpack.c.l.b16 %v3418
        %v3490 = vunpack.c.l.b16 %v3419
        %v3491 = vunpack.c.l.b16 %v3420
        %v3492 = vunpack.c.l.b16 %v3421
        %v3493 = vunpack.c.l.b16 %v3422
        %v3494 = vunpack.c.l.b16 %v3423
        %v3495 = vunpack.c.l.b16 %v3424
        %v3496 = vunpack.c.l.b16 %v3425
        %v3497 = vunpack.c.l.b16 %v3426
        %v3498 = vunpack.c.l.b16 %v3427
        %v3499 = vunpack.c.l.b16 %v3428
        %v3500 = vunpack.c.l.b16 %v3429
        %v3501 = vunpack.c.l.b16 %v3430
        %v3502 = vunpack.c.l.b16 %v3431
        %v3503 = vunpack.c.l.b16 %v3432
        %v3504 = vunpack.c.l.b16 %v3433
        %v3505 = vunpack.c.l.b16 %v3434
        %v3506 = vunpack.c.l.b16 %v3435
        %v3507 = vunpack.c.l.b16 %v3436
        %v3508 = vunpack.c.l.b16 %v3437
        %v3509 = vunpack.c.l.b16 %v3438
        %v3510 = vunpack.c.l.b16 %v3439
        %v3511 = vunpack.c.l.b16 %v3440
        %v3512 = vunpack.c.l.b16 %v3441
        %v3513 = vunpack.c.l.b16 %v3442
        %v3514 = vpack.c.b16 %v3483, %v3482
        %v3515 = vpack.c.b16 %v3485, %v3484
        %v3516 = vpack.c.b16 %v3487, %v3486
        %v3517 = vpack.c.b16 %v3489, %v3488
        %v3518 = vpack.c.b16 %v3491, %v3490
        %v3519 = vpack.c.b16 %v3493, %v3492
        %v3520 = vpack.c.b16 %v3495, %v3494
        %v3521 = vpack.c.b16 %v3497, %v3496
        %v3522 = vpack.c.b16 %v3499, %v3498
        %v3523 = vpack.c.b16 %v3501, %v3500
        %v3524 = vpack.c.b16 %v3503, %v3502
        %v3525 = vpack.c.b16 %v3505, %v3504
        %v3526 = vpack.c.b16 %v3507, %v3506
        %v3527 = vpack.c.b16 %v3509, %v3508
        %v3528 = vpack.c.b16 %v3511, %v3510
        %v3529 = vpack.c.b16 %v3513, %v3512
        %3546 = vmatprep.subr.bf16.mxu0 0
        %3547 = vmatpush1.bf16.msra.mxu0 %v3521
        %3548 = vmatprep.subr.bf16.mxu0 0
        %3549 = vmatpush1.bf16.msra.mxu0 %v3520
        %3550 = vmatprep.subr.bf16.mxu0 0
        %3551 = vmatpush1.bf16.msra.mxu0 %v3519
        %3552 = vmatprep.subr.bf16.mxu0 0
        %3553 = vmatpush1.bf16.msra.mxu0 %v3518
        %3554 = vmatprep.subr.bf16.mxu0 0
        %3555 = vmatpush1.bf16.msra.mxu0 %v3517
        %3556 = vmatprep.subr.bf16.mxu0 0
        %3557 = vmatpush1.bf16.msra.mxu0 %v3516
        %3558 = vmatprep.subr.bf16.mxu0 0
        %3559 = vmatpush1.bf16.msra.mxu0 %v3515
        %3560 = vmatprep.subr.bf16.mxu0 0
        %3561 = vmatpush1.bf16.msra.mxu0 %v3514
        %3562 = vmatprep.subr.bf16.mxu0 0
        %3563 = vmatpush2.bf16.msra.mxu0 %v3529
        %3564 = vmatprep.subr.bf16.mxu0 0
        %3565 = vmatpush2.bf16.msra.mxu0 %v3528
        %3566 = vmatprep.subr.bf16.mxu0 0
        %3567 = vmatpush2.bf16.msra.mxu0 %v3527
        %3568 = vmatprep.subr.bf16.mxu0 0
        %3569 = vmatpush2.bf16.msra.mxu0 %v3526
        %3570 = vmatprep.subr.bf16.mxu0 0
        %3571 = vmatpush2.bf16.msra.mxu0 %v3525
        %3572 = vmatprep.subr.bf16.mxu0 0
        %3573 = vmatpush2.bf16.msra.mxu0 %v3524
        %3574 = vmatprep.subr.bf16.mxu0 0
        %3575 = vmatpush2.bf16.msra.mxu0 %v3523
        %3576 = vmatprep.subr.bf16.mxu0 0
        %3577 = vmatpush2.bf16.msra.mxu0 %v3522
        %3578 = vmatprep.mubr.bf16.mxu0 %v3380
        %3579 = vmatmul.mubr.bf16.gmra.mxu0 %v3379
        %v3580 = vpop.f32.mrf.mxu0
        %v3581 = vadd.f32 %v3448, %v3580
        %v3582 = vpop.f32.mrf.mxu0
        %v3583 = vpop.f32.mrf.mxu0
        %v3584 = vadd.f32 %v3448, %v3583
        %v3585 = vpop.f32.mrf.mxu0
        %3586 = vmatprep.mubr.bf16.mxu0 %v3382
        %3587 = vmatmul.mubr.bf16.gmra.mxu0 %v3381
        %v3588 = vpop.f32.mrf.mxu0
        %v3589 = vadd.f32 %v3448, %v3588
        %v3590 = vpop.f32.mrf.mxu0
        %v3591 = vpop.f32.mrf.mxu0
        %v3592 = vadd.f32 %v3448, %v3591
        %v3593 = vpop.f32.mrf.mxu0
        %3594 = vmatprep.mubr.bf16.mxu0 %v3384
        %3595 = vmatmul.mubr.bf16.gmra.mxu0 %v3383
        %v3596 = vpop.f32.mrf.mxu0
        %v3597 = vadd.f32 %v3448, %v3596
        %v3598 = vpop.f32.mrf.mxu0
        %v3599 = vpop.f32.mrf.mxu0
        %v3600 = vadd.f32 %v3448, %v3599
        %v3601 = vpop.f32.mrf.mxu0
        %3602 = vmatprep.mubr.bf16.mxu0 %v3386
        %3603 = vmatmul.mubr.bf16.gmra.mxu0 %v3385
        %v3604 = vpop.f32.mrf.mxu0
        %v3605 = vadd.f32 %v3448, %v3604
        %v3606 = vpop.f32.mrf.mxu0
        %v3607 = vpop.f32.mrf.mxu0
        %v3608 = vadd.f32 %v3448, %v3607
        %v3609 = vpop.f32.mrf.mxu0
        %3610 = vmatprep.mubr.bf16.mxu0 %v3388
        %3611 = vmatmul.mubr.bf16.gmra.mxu0 %v3387
        %v3612 = vpop.f32.mrf.mxu0
        %v3613 = vadd.f32 %v3448, %v3612
        %v3614 = vpop.f32.mrf.mxu0
        %v3615 = vpop.f32.mrf.mxu0
        %v3616 = vadd.f32 %v3448, %v3615
        %v3617 = vpop.f32.mrf.mxu0
        %3618 = vmatprep.mubr.bf16.mxu0 %v3390
        %3619 = vmatmul.mubr.bf16.gmra.mxu0 %v3389
        %v3620 = vpop.f32.mrf.mxu0
        %v3621 = vadd.f32 %v3448, %v3620
        %v3622 = vpop.f32.mrf.mxu0
        %v3623 = vpop.f32.mrf.mxu0
        %v3624 = vadd.f32 %v3448, %v3623
        %v3625 = vpop.f32.mrf.mxu0
        %3626 = vmatprep.mubr.bf16.mxu0 %v3392
        %3627 = vmatmul.mubr.bf16.gmra.mxu0 %v3391
        %v3628 = vpop.f32.mrf.mxu0
        %v3629 = vadd.f32 %v3448, %v3628
        %v3630 = vpop.f32.mrf.mxu0
        %v3631 = vpop.f32.mrf.mxu0
        %v3632 = vadd.f32 %v3448, %v3631
        %v3633 = vpop.f32.mrf.mxu0
        %3634 = vmatprep.mubr.bf16.mxu0 %v3394
        %3635 = vmatmul.mubr.bf16.gmra.mxu0 %v3393
        %v3636 = vpop.f32.mrf.mxu0
        %v3637 = vadd.f32 %v3448, %v3636
        %v3638 = vpop.f32.mrf.mxu0
        %v3639 = vpop.f32.mrf.mxu0
        %v3640 = vadd.f32 %v3448, %v3639
        %v3641 = vpop.f32.mrf.mxu0
        %3642 = vmatprep.mubr.bf16.mxu0 %v3396
        %3643 = vmatmul.mubr.bf16.gmra.mxu0 %v3395
        %v3644 = vpop.f32.mrf.mxu0
        %v3645 = vadd.f32 %v3448, %v3644
        %v3646 = vpop.f32.mrf.mxu0
        %v3647 = vpop.f32.mrf.mxu0
        %v3648 = vadd.f32 %v3448, %v3647
        %v3649 = vpop.f32.mrf.mxu0
        %3650 = vmatprep.mubr.bf16.mxu0 %v3398
        %3651 = vmatmul.mubr.bf16.gmra.mxu0 %v3397
        %v3652 = vpop.f32.mrf.mxu0
        %v3653 = vadd.f32 %v3448, %v3652
        %v3654 = vpop.f32.mrf.mxu0
        %v3655 = vpop.f32.mrf.mxu0
        %v3656 = vadd.f32 %v3448, %v3655
        %v3657 = vpop.f32.mrf.mxu0
        %3658 = vmatprep.mubr.bf16.mxu0 %v3400
        %3659 = vmatmul.mubr.bf16.gmra.mxu0 %v3399
        %v3660 = vpop.f32.mrf.mxu0
        %v3661 = vadd.f32 %v3448, %v3660
        %v3662 = vpop.f32.mrf.mxu0
        %v3663 = vpop.f32.mrf.mxu0
        %v3664 = vadd.f32 %v3448, %v3663
        %v3665 = vpop.f32.mrf.mxu0
        %3666 = vmatprep.mubr.bf16.mxu0 %v3402
        %3667 = vmatmul.mubr.bf16.gmra.mxu0 %v3401
        %v3668 = vpop.f32.mrf.mxu0
        %v3669 = vadd.f32 %v3448, %v3668
        %v3670 = vpop.f32.mrf.mxu0
        %v3671 = vpop.f32.mrf.mxu0
        %v3672 = vadd.f32 %v3448, %v3671
        %v3673 = vpop.f32.mrf.mxu0
        %3674 = vmatprep.mubr.bf16.mxu0 %v3404
        %3675 = vmatmul.mubr.bf16.gmra.mxu0 %v3403
        %v3676 = vpop.f32.mrf.mxu0
        %v3677 = vadd.f32 %v3448, %v3676
        %v3678 = vpop.f32.mrf.mxu0
        %v3679 = vpop.f32.mrf.mxu0
        %v3680 = vadd.f32 %v3448, %v3679
        %v3681 = vpop.f32.mrf.mxu0
        %3682 = vmatprep.mubr.bf16.mxu0 %v3406
        %3683 = vmatmul.mubr.bf16.gmra.mxu0 %v3405
        %v3684 = vpop.f32.mrf.mxu0
        %v3685 = vadd.f32 %v3448, %v3684
        %v3686 = vpop.f32.mrf.mxu0
        %v3687 = vpop.f32.mrf.mxu0
        %v3688 = vadd.f32 %v3448, %v3687
        %v3689 = vpop.f32.mrf.mxu0
        %3690 = vmatprep.mubr.bf16.mxu0 %v3408
        %3691 = vmatmul.mubr.bf16.gmra.mxu0 %v3407
        %v3692 = vpop.f32.mrf.mxu0
        %v3693 = vadd.f32 %v3448, %v3692
        %v3694 = vpop.f32.mrf.mxu0
        %v3695 = vpop.f32.mrf.mxu0
        %v3696 = vadd.f32 %v3448, %v3695
        %v3697 = vpop.f32.mrf.mxu0
        %3698 = vmatprep.mubr.bf16.mxu0 %v3410
        %3699 = vmatmul.mubr.bf16.gmra.mxu0 %v3409
        %v3700 = vpop.f32.mrf.mxu0
        %v3701 = vadd.f32 %v3448, %v3700
        %v3702 = vpop.f32.mrf.mxu0
        %v3703 = vpop.f32.mrf.mxu0
        %v3704 = vadd.f32 %v3448, %v3703
        %v3705 = vpop.f32.mrf.mxu0
        %3706 = vdwg.mxu0
        %v3707 = vld [vmem:[%s7] sm:$0x1]
        %v3708 = vld [vmem:[%s8] sm:$0x1]
        %3709 = vadd.xlane.f32.xlu0 %v3581
        %v3710 = vpop.xlane.xlu0 %3709
        %3711 = vadd.xlane.f32.xlu0 %v3584
        %v3712 = vpop.xlane.xlu0 %3711
        %3713 = vadd.xlane.f32.xlu0 %v3589
        %v3714 = vpop.xlane.xlu0 %3713
        %3715 = vadd.xlane.f32.xlu0 %v3592
        %v3716 = vpop.xlane.xlu0 %3715
        %3717 = vadd.xlane.f32.xlu0 %v3597
        %v3718 = vpop.xlane.xlu0 %3717
        %3719 = vadd.xlane.f32.xlu0 %v3600
        %v3720 = vpop.xlane.xlu0 %3719
        %3721 = vadd.xlane.f32.xlu0 %v3605
        %v3722 = vpop.xlane.xlu0 %3721
        %3723 = vadd.xlane.f32.xlu0 %v3608
        %v3724 = vpop.xlane.xlu0 %3723
        %3725 = vadd.xlane.f32.xlu0 %v3613
        %v3726 = vpop.xlane.xlu0 %3725
        %3727 = vadd.xlane.f32.xlu0 %v3616
        %v3728 = vpop.xlane.xlu0 %3727
        %3729 = vadd.xlane.f32.xlu0 %v3621
        %v3730 = vpop.xlane.xlu0 %3729
        %3731 = vadd.xlane.f32.xlu0 %v3624
        %v3732 = vpop.xlane.xlu0 %3731
        %3733 = vadd.xlane.f32.xlu0 %v3629
        %v3734 = vpop.xlane.xlu0 %3733
        %3735 = vadd.xlane.f32.xlu0 %v3632
        %v3736 = vpop.xlane.xlu0 %3735
        %3737 = vadd.xlane.f32.xlu0 %v3637
        %v3738 = vpop.xlane.xlu0 %3737
        %3739 = vadd.xlane.f32.xlu0 %v3640
        %v3740 = vpop.xlane.xlu0 %3739
        %3741 = vadd.xlane.f32.xlu0 %v3645
        %v3742 = vpop.xlane.xlu0 %3741
        %3743 = vadd.xlane.f32.xlu0 %v3648
        %v3744 = vpop.xlane.xlu0 %3743
        %3745 = vadd.xlane.f32.xlu0 %v3653
        %v3746 = vpop.xlane.xlu0 %3745
        %3747 = vadd.xlane.f32.xlu0 %v3656
        %v3748 = vpop.xlane.xlu0 %3747
        %3749 = vadd.xlane.f32.xlu0 %v3661
        %v3750 = vpop.xlane.xlu0 %3749
        %3751 = vadd.xlane.f32.xlu0 %v3664
        %v3752 = vpop.xlane.xlu0 %3751
        %3753 = vadd.xlane.f32.xlu0 %v3669
        %v3754 = vpop.xlane.xlu0 %3753
        %3755 = vadd.xlane.f32.xlu0 %v3672
        %v3756 = vpop.xlane.xlu0 %3755
        %3757 = vadd.xlane.f32.xlu0 %v3677
        %v3758 = vpop.xlane.xlu0 %3757
        %3759 = vadd.xlane.f32.xlu0 %v3680
        %v3760 = vpop.xlane.xlu0 %3759
        %3761 = vadd.xlane.f32.xlu0 %v3685
        %v3762 = vpop.xlane.xlu0 %3761
        %3763 = vadd.xlane.f32.xlu0 %v3688
        %v3764 = vpop.xlane.xlu0 %3763
        %3765 = vadd.xlane.f32.xlu0 %v3693
        %v3766 = vpop.xlane.xlu0 %3765
        %3767 = vadd.xlane.f32.xlu0 %v3696
        %v3768 = vpop.xlane.xlu0 %3767
        %3769 = vadd.xlane.f32.xlu0 %v3701
        %v3770 = vpop.xlane.xlu0 %3769
        %3771 = vadd.xlane.f32.xlu0 %v3704
        %v3772 = vpop.xlane.xlu0 %3771
        %v3773 = vrcp.pop 128.0
        %v3774 = vmul.f32 %v3710, %v3773
        %v3775 = vmul.f32 %v3712, %v3773
        %v3776 = vmul.f32 %v3714, %v3773
        %v3777 = vmul.f32 %v3716, %v3773
        %v3778 = vmul.f32 %v3718, %v3773
        %v3779 = vmul.f32 %v3720, %v3773
        %v3780 = vmul.f32 %v3722, %v3773
        %v3781 = vmul.f32 %v3724, %v3773
        %v3782 = vmul.f32 %v3726, %v3773
        %v3783 = vmul.f32 %v3728, %v3773
        %v3784 = vmul.f32 %v3730, %v3773
        %v3785 = vmul.f32 %v3732, %v3773
        %v3786 = vmul.f32 %v3734, %v3773
        %v3787 = vmul.f32 %v3736, %v3773
        %v3788 = vmul.f32 %v3738, %v3773
        %v3789 = vmul.f32 %v3740, %v3773
        %v3790 = vmul.f32 %v3742, %v3773
        %v3791 = vmul.f32 %v3744, %v3773
        %v3792 = vmul.f32 %v3746, %v3773
        %v3793 = vmul.f32 %v3748, %v3773
        %v3794 = vmul.f32 %v3750, %v3773
        %v3795 = vmul.f32 %v3752, %v3773
        %v3796 = vmul.f32 %v3754, %v3773
        %v3797 = vmul.f32 %v3756, %v3773
        %v3798 = vmul.f32 %v3758, %v3773
        %v3799 = vmul.f32 %v3760, %v3773
        %v3800 = vmul.f32 %v3762, %v3773
        %v3801 = vmul.f32 %v3764, %v3773
        %v3802 = vmul.f32 %v3766, %v3773
        %v3803 = vmul.f32 %v3768, %v3773
        %v3804 = vmul.f32 %v3770, %v3773
        %v3805 = vmul.f32 %v3772, %v3773
        %v3806 = vsub.f32 %v3581, %v3774
        %v3807 = vsub.f32 %v3584, %v3775
        %v3808 = vsub.f32 %v3589, %v3776
        %v3809 = vsub.f32 %v3592, %v3777
        %v3810 = vsub.f32 %v3597, %v3778
        %v3811 = vsub.f32 %v3600, %v3779
        %v3812 = vsub.f32 %v3605, %v3780
        %v3813 = vsub.f32 %v3608, %v3781
        %v3814 = vsub.f32 %v3613, %v3782
        %v3815 = vsub.f32 %v3616, %v3783
        %v3816 = vsub.f32 %v3621, %v3784
        %v3817 = vsub.f32 %v3624, %v3785
        %v3818 = vsub.f32 %v3629, %v3786
        %v3819 = vsub.f32 %v3632, %v3787
        %v3820 = vsub.f32 %v3637, %v3788
        %v3821 = vsub.f32 %v3640, %v3789
        %v3822 = vsub.f32 %v3645, %v3790
        %v3823 = vsub.f32 %v3648, %v3791
        %v3824 = vsub.f32 %v3653, %v3792
        %v3825 = vsub.f32 %v3656, %v3793
        %v3826 = vsub.f32 %v3661, %v3794
        %v3827 = vsub.f32 %v3664, %v3795
        %v3828 = vsub.f32 %v3669, %v3796
        %v3829 = vsub.f32 %v3672, %v3797
        %v3830 = vsub.f32 %v3677, %v3798
        %v3831 = vsub.f32 %v3680, %v3799
        %v3832 = vsub.f32 %v3685, %v3800
        %v3833 = vsub.f32 %v3688, %v3801
        %v3834 = vsub.f32 %v3693, %v3802
        %v3835 = vsub.f32 %v3696, %v3803
        %v3836 = vsub.f32 %v3701, %v3804
        %v3837 = vsub.f32 %v3704, %v3805
        %v3838 = vmul.f32 %v3806, %v3806
        %v3839 = vmul.f32 %v3807, %v3807
        %v3840 = vmul.f32 %v3808, %v3808
        %v3841 = vmul.f32 %v3809, %v3809
        %v3842 = vmul.f32 %v3810, %v3810
        %v3843 = vmul.f32 %v3811, %v3811
        %v3844 = vmul.f32 %v3812, %v3812
        %v3845 = vmul.f32 %v3813, %v3813
        %v3846 = vmul.f32 %v3814, %v3814
        %v3847 = vmul.f32 %v3815, %v3815
        %v3848 = vmul.f32 %v3816, %v3816
        %v3849 = vmul.f32 %v3817, %v3817
        %v3850 = vmul.f32 %v3818, %v3818
        %v3851 = vmul.f32 %v3819, %v3819
        %v3852 = vmul.f32 %v3820, %v3820
        %v3853 = vmul.f32 %v3821, %v3821
        %v3854 = vmul.f32 %v3822, %v3822
        %v3855 = vmul.f32 %v3823, %v3823
        %v3856 = vmul.f32 %v3824, %v3824
        %v3857 = vmul.f32 %v3825, %v3825
        %v3858 = vmul.f32 %v3826, %v3826
        %v3859 = vmul.f32 %v3827, %v3827
        %v3860 = vmul.f32 %v3828, %v3828
        %v3861 = vmul.f32 %v3829, %v3829
        %v3862 = vmul.f32 %v3830, %v3830
        %v3863 = vmul.f32 %v3831, %v3831
        %v3864 = vmul.f32 %v3832, %v3832
        %v3865 = vmul.f32 %v3833, %v3833
        %v3866 = vmul.f32 %v3834, %v3834
        %v3867 = vmul.f32 %v3835, %v3835
        %v3868 = vmul.f32 %v3836, %v3836
        %v3869 = vmul.f32 %v3837, %v3837
        %3870 = vadd.xlane.f32.xlu0 %v3838
        %v3871 = vpop.xlane.xlu0 %3870
        %3872 = vadd.xlane.f32.xlu0 %v3839
        %v3873 = vpop.xlane.xlu0 %3872
        %3874 = vadd.xlane.f32.xlu0 %v3840
        %v3875 = vpop.xlane.xlu0 %3874
        %3876 = vadd.xlane.f32.xlu0 %v3841
        %v3877 = vpop.xlane.xlu0 %3876
        %3878 = vadd.xlane.f32.xlu0 %v3842
        %v3879 = vpop.xlane.xlu0 %3878
        %3880 = vadd.xlane.f32.xlu0 %v3843
        %v3881 = vpop.xlane.xlu0 %3880
        %3882 = vadd.xlane.f32.xlu0 %v3844
        %v3883 = vpop.xlane.xlu0 %3882
        %3884 = vadd.xlane.f32.xlu0 %v3845
        %v3885 = vpop.xlane.xlu0 %3884
        %3886 = vadd.xlane.f32.xlu0 %v3846
        %v3887 = vpop.xlane.xlu0 %3886
        %3888 = vadd.xlane.f32.xlu0 %v3847
        %v3889 = vpop.xlane.xlu0 %3888
        %3890 = vadd.xlane.f32.xlu0 %v3848
        %v3891 = vpop.xlane.xlu0 %3890
        %3892 = vadd.xlane.f32.xlu0 %v3849
        %v3893 = vpop.xlane.xlu0 %3892
        %3894 = vadd.xlane.f32.xlu0 %v3850
        %v3895 = vpop.xlane.xlu0 %3894
        %3896 = vadd.xlane.f32.xlu0 %v3851
        %v3897 = vpop.xlane.xlu0 %3896
        %3898 = vadd.xlane.f32.xlu0 %v3852
        %v3899 = vpop.xlane.xlu0 %3898
        %3900 = vadd.xlane.f32.xlu0 %v3853
        %v3901 = vpop.xlane.xlu0 %3900
        %3902 = vadd.xlane.f32.xlu0 %v3854
        %v3903 = vpop.xlane.xlu0 %3902
        %3904 = vadd.xlane.f32.xlu0 %v3855
        %v3905 = vpop.xlane.xlu0 %3904
        %3906 = vadd.xlane.f32.xlu0 %v3856
        %v3907 = vpop.xlane.xlu0 %3906
        %3908 = vadd.xlane.f32.xlu0 %v3857
        %v3909 = vpop.xlane.xlu0 %3908
        %3910 = vadd.xlane.f32.xlu0 %v3858
        %v3911 = vpop.xlane.xlu0 %3910
        %3912 = vadd.xlane.f32.xlu0 %v3859
        %v3913 = vpop.xlane.xlu0 %3912
        %3914 = vadd.xlane.f32.xlu0 %v3860
        %v3915 = vpop.xlane.xlu0 %3914
        %3916 = vadd.xlane.f32.xlu0 %v3861
        %v3917 = vpop.xlane.xlu0 %3916
        %3918 = vadd.xlane.f32.xlu0 %v3862
        %v3919 = vpop.xlane.xlu0 %3918
        %3920 = vadd.xlane.f32.xlu0 %v3863
        %v3921 = vpop.xlane.xlu0 %3920
        %3922 = vadd.xlane.f32.xlu0 %v3864
        %v3923 = vpop.xlane.xlu0 %3922
        %3924 = vadd.xlane.f32.xlu0 %v3865
        %v3925 = vpop.xlane.xlu0 %3924
        %3926 = vadd.xlane.f32.xlu0 %v3866
        %v3927 = vpop.xlane.xlu0 %3926
        %3928 = vadd.xlane.f32.xlu0 %v3867
        %v3929 = vpop.xlane.xlu0 %3928
        %3930 = vadd.xlane.f32.xlu0 %v3868
        %v3931 = vpop.xlane.xlu0 %3930
        %3932 = vadd.xlane.f32.xlu0 %v3869
        %v3933 = vpop.xlane.xlu0 %3932
        %v3934 = vmul.f32 %v3871, %v3773
        %v3935 = vmul.f32 %v3873, %v3773
        %v3936 = vmul.f32 %v3875, %v3773
        %v3937 = vmul.f32 %v3877, %v3773
        %v3938 = vmul.f32 %v3879, %v3773
        %v3939 = vmul.f32 %v3881, %v3773
        %v3940 = vmul.f32 %v3883, %v3773
        %v3941 = vmul.f32 %v3885, %v3773
        %v3942 = vmul.f32 %v3887, %v3773
        %v3943 = vmul.f32 %v3889, %v3773
        %v3944 = vmul.f32 %v3891, %v3773
        %v3945 = vmul.f32 %v3893, %v3773
        %v3946 = vmul.f32 %v3895, %v3773
        %v3947 = vmul.f32 %v3897, %v3773
        %v3948 = vmul.f32 %v3899, %v3773
        %v3949 = vmul.f32 %v3901, %v3773
        %v3950 = vmul.f32 %v3903, %v3773
        %v3951 = vmul.f32 %v3905, %v3773
        %v3952 = vmul.f32 %v3907, %v3773
        %v3953 = vmul.f32 %v3909, %v3773
        %v3954 = vmul.f32 %v3911, %v3773
        %v3955 = vmul.f32 %v3913, %v3773
        %v3956 = vmul.f32 %v3915, %v3773
        %v3957 = vmul.f32 %v3917, %v3773
        %v3958 = vmul.f32 %v3919, %v3773
        %v3959 = vmul.f32 %v3921, %v3773
        %v3960 = vmul.f32 %v3923, %v3773
        %v3961 = vmul.f32 %v3925, %v3773
        %v3962 = vmul.f32 %v3927, %v3773
        %v3963 = vmul.f32 %v3929, %v3773
        %v3964 = vmul.f32 %v3931, %v3773
        %v3965 = vmul.f32 %v3933, %v3773
        %v3967 = vlaneseq
        %v3968 = vshrl.u32 %v3967, 7
        %v3969 = vsub.s32 0, %v3968
        %v3970 = vrot.slane %v3707, %v3969
        %v3972 = vmul.f32 %v3970, %v3806
        %v3973 = vmul.f32 %v3970, %v3807
        %v3974 = vmul.f32 %v3970, %v3808
        %v3975 = vmul.f32 %v3970, %v3809
        %v3976 = vmul.f32 %v3970, %v3810
        %v3977 = vmul.f32 %v3970, %v3811
        %v3978 = vmul.f32 %v3970, %v3812
        %v3979 = vmul.f32 %v3970, %v3813
        %v3980 = vmul.f32 %v3970, %v3814
        %v3981 = vmul.f32 %v3970, %v3815
        %v3982 = vmul.f32 %v3970, %v3816
        %v3983 = vmul.f32 %v3970, %v3817
        %v3984 = vmul.f32 %v3970, %v3818
        %v3985 = vmul.f32 %v3970, %v3819
        %v3986 = vmul.f32 %v3970, %v3820
        %v3987 = vmul.f32 %v3970, %v3821
        %v3988 = vmul.f32 %v3970, %v3822
        %v3989 = vmul.f32 %v3970, %v3823
        %v3990 = vmul.f32 %v3970, %v3824
        %v3991 = vmul.f32 %v3970, %v3825
        %v3992 = vmul.f32 %v3970, %v3826
        %v3993 = vmul.f32 %v3970, %v3827
        %v3994 = vmul.f32 %v3970, %v3828
        %v3995 = vmul.f32 %v3970, %v3829
        %v3996 = vmul.f32 %v3970, %v3830
        %v3997 = vmul.f32 %v3970, %v3831
        %v3998 = vmul.f32 %v3970, %v3832
        %v3999 = vmul.f32 %v3970, %v3833
        %v4000 = vmul.f32 %v3970, %v3834
        %v4001 = vmul.f32 %v3970, %v3835
        %v4002 = vmul.f32 %v3970, %v3836
        %v4003 = vmul.f32 %v3970, %v3837
        %v4004 = vadd.f32 %v3934, 1e-06
        %v4005 = vadd.f32 %v3935, 1e-06
        %v4006 = vadd.f32 %v3936, 1e-06
        %v4007 = vadd.f32 %v3937, 1e-06
        %v4008 = vadd.f32 %v3938, 1e-06
        %v4009 = vadd.f32 %v3939, 1e-06
        %v4010 = vadd.f32 %v3940, 1e-06
        %v4011 = vadd.f32 %v3941, 1e-06
        %v4012 = vadd.f32 %v3942, 1e-06
        %v4013 = vadd.f32 %v3943, 1e-06
        %v4014 = vadd.f32 %v3944, 1e-06
        %v4015 = vadd.f32 %v3945, 1e-06
        %v4016 = vadd.f32 %v3946, 1e-06
        %v4017 = vadd.f32 %v3947, 1e-06
        %v4018 = vadd.f32 %v3948, 1e-06
        %v4019 = vadd.f32 %v3949, 1e-06
        %v4020 = vadd.f32 %v3950, 1e-06
        %v4021 = vadd.f32 %v3951, 1e-06
        %v4022 = vadd.f32 %v3952, 1e-06
        %v4023 = vadd.f32 %v3953, 1e-06
        %v4024 = vadd.f32 %v3954, 1e-06
        %v4025 = vadd.f32 %v3955, 1e-06
        %v4026 = vadd.f32 %v3956, 1e-06
        %v4027 = vadd.f32 %v3957, 1e-06
        %v4028 = vadd.f32 %v3958, 1e-06
        %v4029 = vadd.f32 %v3959, 1e-06
        %v4030 = vadd.f32 %v3960, 1e-06
        %v4031 = vadd.f32 %v3961, 1e-06
        %v4032 = vadd.f32 %v3962, 1e-06
        %v4033 = vadd.f32 %v3963, 1e-06
        %v4034 = vadd.f32 %v3964, 1e-06
        %v4035 = vadd.f32 %v3965, 1e-06
        %v4036 = vrsqrt.pop %v4004
        %v4037 = vrsqrt.pop %v4005
        %v4038 = vrsqrt.pop %v4006
        %v4039 = vrsqrt.pop %v4007
        %v4040 = vrsqrt.pop %v4008
        %v4041 = vrsqrt.pop %v4009
        %v4042 = vrsqrt.pop %v4010
        %v4043 = vrsqrt.pop %v4011
        %v4044 = vrsqrt.pop %v4012
        %v4045 = vrsqrt.pop %v4013
        %v4046 = vrsqrt.pop %v4014
        %v4047 = vrsqrt.pop %v4015
        %v4048 = vrsqrt.pop %v4016
        %v4049 = vrsqrt.pop %v4017
        %v4050 = vrsqrt.pop %v4018
        %v4051 = vrsqrt.pop %v4019
        %v4052 = vrsqrt.pop %v4020
        %v4053 = vrsqrt.pop %v4021
        %v4054 = vrsqrt.pop %v4022
        %v4055 = vrsqrt.pop %v4023
        %v4056 = vrsqrt.pop %v4024
        %v4057 = vrsqrt.pop %v4025
        %v4058 = vrsqrt.pop %v4026
        %v4059 = vrsqrt.pop %v4027
        %v4060 = vrsqrt.pop %v4028
        %v4061 = vrsqrt.pop %v4029
        %v4062 = vrsqrt.pop %v4030
        %v4063 = vrsqrt.pop %v4031
        %v4064 = vrsqrt.pop %v4032
        %v4065 = vrsqrt.pop %v4033
        %v4066 = vrsqrt.pop %v4034
        %v4067 = vrsqrt.pop %v4035
        %v4068 = vmul.f32 %v3972, %v4036
        %v4069 = vmul.f32 %v3973, %v4037
        %v4070 = vmul.f32 %v3974, %v4038
        %v4071 = vmul.f32 %v3975, %v4039
        %v4072 = vmul.f32 %v3976, %v4040
        %v4073 = vmul.f32 %v3977, %v4041
        %v4074 = vmul.f32 %v3978, %v4042
        %v4075 = vmul.f32 %v3979, %v4043
        %v4076 = vmul.f32 %v3980, %v4044
        %v4077 = vmul.f32 %v3981, %v4045
        %v4078 = vmul.f32 %v3982, %v4046
        %v4079 = vmul.f32 %v3983, %v4047
        %v4080 = vmul.f32 %v3984, %v4048
        %v4081 = vmul.f32 %v3985, %v4049
        %v4082 = vmul.f32 %v3986, %v4050
        %v4083 = vmul.f32 %v3987, %v4051
        %v4084 = vmul.f32 %v3988, %v4052
        %v4085 = vmul.f32 %v3989, %v4053
        %v4086 = vmul.f32 %v3990, %v4054
        %v4087 = vmul.f32 %v3991, %v4055
        %v4088 = vmul.f32 %v3992, %v4056
        %v4089 = vmul.f32 %v3993, %v4057
        %v4090 = vmul.f32 %v3994, %v4058
        %v4091 = vmul.f32 %v3995, %v4059
        %v4092 = vmul.f32 %v3996, %v4060
        %v4093 = vmul.f32 %v3997, %v4061
        %v4094 = vmul.f32 %v3998, %v4062
        %v4095 = vmul.f32 %v3999, %v4063
        %v4096 = vmul.f32 %v4000, %v4064
        %v4097 = vmul.f32 %v4001, %v4065
        %v4098 = vmul.f32 %v4002, %v4066
        %v4099 = vmul.f32 %v4003, %v4067
        %v4101 = vlaneseq
        %v4102 = vshrl.u32 %v4101, 7
        %v4103 = vsub.s32 0, %v4102
        %v4104 = vrot.slane %v3708, %v4103
        %v4106 = vadd.f32 %v4068, %v4104
        %v4107 = vadd.f32 %v4069, %v4104
        %v4108 = vadd.f32 %v4070, %v4104
        %v4109 = vadd.f32 %v4071, %v4104
        %v4110 = vadd.f32 %v4072, %v4104
        %v4111 = vadd.f32 %v4073, %v4104
        %v4112 = vadd.f32 %v4074, %v4104
        %v4113 = vadd.f32 %v4075, %v4104
        %v4114 = vadd.f32 %v4076, %v4104
        %v4115 = vadd.f32 %v4077, %v4104
        %v4116 = vadd.f32 %v4078, %v4104
        %v4117 = vadd.f32 %v4079, %v4104
        %v4118 = vadd.f32 %v4080, %v4104
        %v4119 = vadd.f32 %v4081, %v4104
        %v4120 = vadd.f32 %v4082, %v4104
        %v4121 = vadd.f32 %v4083, %v4104
        %v4122 = vadd.f32 %v4084, %v4104
        %v4123 = vadd.f32 %v4085, %v4104
        %v4124 = vadd.f32 %v4086, %v4104
        %v4125 = vadd.f32 %v4087, %v4104
        %v4126 = vadd.f32 %v4088, %v4104
        %v4127 = vadd.f32 %v4089, %v4104
        %v4128 = vadd.f32 %v4090, %v4104
        %v4129 = vadd.f32 %v4091, %v4104
        %v4130 = vadd.f32 %v4092, %v4104
        %v4131 = vadd.f32 %v4093, %v4104
        %v4132 = vadd.f32 %v4094, %v4104
        %v4133 = vadd.f32 %v4095, %v4104
        %v4134 = vadd.f32 %v4096, %v4104
        %v4135 = vadd.f32 %v4097, %v4104
        %v4136 = vadd.f32 %v4098, %v4104
        %v4137 = vadd.f32 %v4099, %v4104
        %v4138 = vadd.f32 %v602, %v4106
        %v4139 = vadd.f32 %v603, %v4107
        %v4140 = vadd.f32 %v604, %v4108
        %v4141 = vadd.f32 %v605, %v4109
        %v4142 = vadd.f32 %v606, %v4110
        %v4143 = vadd.f32 %v607, %v4111
        %v4144 = vadd.f32 %v608, %v4112
        %v4145 = vadd.f32 %v609, %v4113
        %v4146 = vadd.f32 %v610, %v4114
        %v4147 = vadd.f32 %v611, %v4115
        %v4148 = vadd.f32 %v612, %v4116
        %v4149 = vadd.f32 %v613, %v4117
        %v4150 = vadd.f32 %v614, %v4118
        %v4151 = vadd.f32 %v615, %v4119
        %v4152 = vadd.f32 %v616, %v4120
        %v4153 = vadd.f32 %v617, %v4121
        %v4154 = vadd.f32 %v618, %v4122
        %v4155 = vadd.f32 %v619, %v4123
        %v4156 = vadd.f32 %v620, %v4124
        %v4157 = vadd.f32 %v621, %v4125
        %v4158 = vadd.f32 %v622, %v4126
        %v4159 = vadd.f32 %v623, %v4127
        %v4160 = vadd.f32 %v624, %v4128
        %v4161 = vadd.f32 %v625, %v4129
        %v4162 = vadd.f32 %v626, %v4130
        %v4163 = vadd.f32 %v627, %v4131
        %v4164 = vadd.f32 %v628, %v4132
        %v4165 = vadd.f32 %v629, %v4133
        %v4166 = vadd.f32 %v630, %v4134
        %v4167 = vadd.f32 %v631, %v4135
        %v4168 = vadd.f32 %v632, %v4136
        %v4169 = vadd.f32 %v633, %v4137
        %v4170 = vpack.c.bf16 %v4139, %v4138
        %v4171 = vpack.c.bf16 %v4141, %v4140
        %v4172 = vpack.c.bf16 %v4143, %v4142
        %v4173 = vpack.c.bf16 %v4145, %v4144
        %v4174 = vpack.c.bf16 %v4147, %v4146
        %v4175 = vpack.c.bf16 %v4149, %v4148
        %v4176 = vpack.c.bf16 %v4151, %v4150
        %v4177 = vpack.c.bf16 %v4153, %v4152
        %v4178 = vpack.c.bf16 %v4155, %v4154
        %v4179 = vpack.c.bf16 %v4157, %v4156
        %v4180 = vpack.c.bf16 %v4159, %v4158
        %v4181 = vpack.c.bf16 %v4161, %v4160
        %v4182 = vpack.c.bf16 %v4163, %v4162
        %v4183 = vpack.c.bf16 %v4165, %v4164
        %v4184 = vpack.c.bf16 %v4167, %v4166
        %v4185 = vpack.c.bf16 %v4169, %v4168
        %v4186 = vld [vmem:[#allocation10] sm:$0xff]
        %v4187 = vld [vmem:[#allocation10 + $0x8] sm:$0xff]
        %v4188 = vld [vmem:[#allocation10 + $0x10] sm:$0xff]
        %v4189 = vld [vmem:[#allocation10 + $0x18] sm:$0xff]
        %v4190 = vld [vmem:[#allocation10 + $0x20] sm:$0xff]
        %v4191 = vld [vmem:[#allocation10 + $0x28] sm:$0xff]
        %v4192 = vld [vmem:[#allocation10 + $0x30] sm:$0xff]
        %v4193 = vld [vmem:[#allocation10 + $0x38] sm:$0xff]
        %v4194 = vld [vmem:[#allocation10 + $0x40] sm:$0xff]
        %v4195 = vld [vmem:[#allocation10 + $0x48] sm:$0xff]
        %v4196 = vld [vmem:[#allocation10 + $0x50] sm:$0xff]
        %v4197 = vld [vmem:[#allocation10 + $0x58] sm:$0xff]
        %v4198 = vld [vmem:[#allocation10 + $0x60] sm:$0xff]
        %v4199 = vld [vmem:[#allocation10 + $0x68] sm:$0xff]
        %v4200 = vld [vmem:[#allocation10 + $0x70] sm:$0xff]
        %v4201 = vld [vmem:[#allocation10 + $0x78] sm:$0xff]
        %v4202 = vld [vmem:[%s10] sm:$0x3]
        %v4204 = vlaneseq
        %v4205 = vshrl.u32 %v4204, 7
        %v4206 = vsub.s32 0, %v4205
        %v4207 = vrot.slane %v4202, %v4206
        %v4208 = vlaneseq
        %v4209 = vshrl.u32 %v4208, 7
        %v4210 = vsub.s32 1, %v4209
        %v4211 = vrot.slane %v4202, %v4210
        %v4230 = vunpack.c.l.b16 %v4186
        %v4231 = vunpack.c.h.b16 %v4186
        %v4232 = vunpack.c.l.b16 %v4187
        %v4233 = vunpack.c.h.b16 %v4187
        %v4234 = vunpack.c.l.b16 %v4188
        %v4235 = vunpack.c.h.b16 %v4188
        %v4236 = vunpack.c.l.b16 %v4189
        %v4237 = vunpack.c.h.b16 %v4189
        %v4238 = vunpack.c.l.b16 %v4190
        %v4239 = vunpack.c.h.b16 %v4190
        %v4240 = vunpack.c.l.b16 %v4191
        %v4241 = vunpack.c.h.b16 %v4191
        %v4242 = vunpack.c.l.b16 %v4192
        %v4243 = vunpack.c.h.b16 %v4192
        %v4244 = vunpack.c.l.b16 %v4193
        %v4245 = vunpack.c.h.b16 %v4193
        %v4246 = vunpack.c.l.b16 %v4194
        %v4247 = vunpack.c.h.b16 %v4194
        %v4248 = vunpack.c.l.b16 %v4195
        %v4249 = vunpack.c.h.b16 %v4195
        %v4250 = vunpack.c.l.b16 %v4196
        %v4251 = vunpack.c.h.b16 %v4196
        %v4252 = vunpack.c.l.b16 %v4197
        %v4253 = vunpack.c.h.b16 %v4197
        %v4254 = vunpack.c.l.b16 %v4198
        %v4255 = vunpack.c.h.b16 %v4198
        %v4256 = vunpack.c.l.b16 %v4199
        %v4257 = vunpack.c.h.b16 %v4199
        %v4258 = vunpack.c.l.b16 %v4200
        %v4259 = vunpack.c.h.b16 %v4200
        %v4260 = vunpack.c.l.b16 %v4201
        %v4261 = vunpack.c.h.b16 %v4201
        %v4262 = vpack.c.b16 %v4232, %v4230
        %v4263 = vpack.c.b16 %v4233, %v4231
        %v4264 = vpack.c.b16 %v4236, %v4234
        %v4265 = vpack.c.b16 %v4237, %v4235
        %v4266 = vpack.c.b16 %v4240, %v4238
        %v4267 = vpack.c.b16 %v4241, %v4239
        %v4268 = vpack.c.b16 %v4244, %v4242
        %v4269 = vpack.c.b16 %v4245, %v4243
        %v4270 = vpack.c.b16 %v4248, %v4246
        %v4271 = vpack.c.b16 %v4249, %v4247
        %v4272 = vpack.c.b16 %v4252, %v4250
        %v4273 = vpack.c.b16 %v4253, %v4251
        %v4274 = vpack.c.b16 %v4256, %v4254
        %v4275 = vpack.c.b16 %v4257, %v4255
        %v4276 = vpack.c.b16 %v4260, %v4258
        %v4277 = vpack.c.b16 %v4261, %v4259
        %4294 = vmatprep.subr.bf16.mxu0 %v4277
        %4295 = vmatpush1.bf16.msra.mxu0 %v4276
        %4296 = vmatprep.subr.bf16.mxu0 %v4275
        %4297 = vmatpush1.bf16.msra.mxu0 %v4274
        %4298 = vmatprep.subr.bf16.mxu0 %v4273
        %4299 = vmatpush1.bf16.msra.mxu0 %v4272
        %4300 = vmatprep.subr.bf16.mxu0 %v4271
        %4301 = vmatpush1.bf16.msra.mxu0 %v4270
        %4302 = vmatprep.subr.bf16.mxu0 %v4269
        %4303 = vmatpush1.bf16.msra.mxu0 %v4268
        %4304 = vmatprep.subr.bf16.mxu0 %v4267
        %4305 = vmatpush1.bf16.msra.mxu0 %v4266
        %4306 = vmatprep.subr.bf16.mxu0 %v4265
        %4307 = vmatpush1.bf16.msra.mxu0 %v4264
        %4308 = vmatprep.subr.bf16.mxu0 %v4263
        %4309 = vmatpush1.bf16.msra.mxu0 %v4262
        %4310 = vmatprep.subr.bf16.mxu0 0
        %4311 = vmatpush2.bf16.msra.mxu0 0
        %4312 = vmatprep.subr.bf16.mxu0 0
        %4313 = vmatpush2.bf16.msra.mxu0 0
        %4314 = vmatprep.subr.bf16.mxu0 0
        %4315 = vmatpush2.bf16.msra.mxu0 0
        %4316 = vmatprep.subr.bf16.mxu0 0
        %4317 = vmatpush2.bf16.msra.mxu0 0
        %4318 = vmatprep.subr.bf16.mxu0 0
        %4319 = vmatpush2.bf16.msra.mxu0 0
        %4320 = vmatprep.subr.bf16.mxu0 0
        %4321 = vmatpush2.bf16.msra.mxu0 0
        %4322 = vmatprep.subr.bf16.mxu0 0
        %4323 = vmatpush2.bf16.msra.mxu0 0
        %4324 = vmatprep.subr.bf16.mxu0 0
        %4325 = vmatpush2.bf16.msra.mxu0 0
        %4326 = vmatprep.mubr.bf16.mxu0 0
        %4327 = vmatmul.mubr.bf16.gmra.mxu0 %v4170
        %v4328 = vpop.f32.mrf.mxu0
        %v4329 = vadd.f32 %v4207, %v4328
        %v4330 = vpop.f32.mrf.mxu0
        %v4331 = vadd.f32 %v4211, %v4330
        %v4332 = vpop.f32.mrf.mxu0
        %v4333 = vadd.f32 %v4207, %v4332
        %v4334 = vpop.f32.mrf.mxu0
        %v4335 = vadd.f32 %v4211, %v4334
        %4336 = vmatprep.mubr.bf16.mxu0 0
        %4337 = vmatmul.mubr.bf16.gmra.mxu0 %v4171
        %v4338 = vpop.f32.mrf.mxu0
        %v4339 = vadd.f32 %v4207, %v4338
        %v4340 = vpop.f32.mrf.mxu0
        %v4341 = vadd.f32 %v4211, %v4340
        %v4342 = vpop.f32.mrf.mxu0
        %v4343 = vadd.f32 %v4207, %v4342
        %v4344 = vpop.f32.mrf.mxu0
        %v4345 = vadd.f32 %v4211, %v4344
        %4346 = vmatprep.mubr.bf16.mxu0 0
        %4347 = vmatmul.mubr.bf16.gmra.mxu0 %v4172
        %v4348 = vpop.f32.mrf.mxu0
        %v4349 = vadd.f32 %v4207, %v4348
        %v4350 = vpop.f32.mrf.mxu0
        %v4351 = vadd.f32 %v4211, %v4350
        %v4352 = vpop.f32.mrf.mxu0
        %v4353 = vadd.f32 %v4207, %v4352
        %v4354 = vpop.f32.mrf.mxu0
        %v4355 = vadd.f32 %v4211, %v4354
        %4356 = vmatprep.mubr.bf16.mxu0 0
        %4357 = vmatmul.mubr.bf16.gmra.mxu0 %v4173
        %v4358 = vpop.f32.mrf.mxu0
        %v4359 = vadd.f32 %v4207, %v4358
        %v4360 = vpop.f32.mrf.mxu0
        %v4361 = vadd.f32 %v4211, %v4360
        %v4362 = vpop.f32.mrf.mxu0
        %v4363 = vadd.f32 %v4207, %v4362
        %v4364 = vpop.f32.mrf.mxu0
        %v4365 = vadd.f32 %v4211, %v4364
        %4366 = vmatprep.mubr.bf16.mxu0 0
        %4367 = vmatmul.mubr.bf16.gmra.mxu0 %v4174
        %v4368 = vpop.f32.mrf.mxu0
        %v4369 = vadd.f32 %v4207, %v4368
        %v4370 = vpop.f32.mrf.mxu0
        %v4371 = vadd.f32 %v4211, %v4370
        %v4372 = vpop.f32.mrf.mxu0
        %v4373 = vadd.f32 %v4207, %v4372
        %v4374 = vpop.f32.mrf.mxu0
        %v4375 = vadd.f32 %v4211, %v4374
        %4376 = vmatprep.mubr.bf16.mxu0 0
        %4377 = vmatmul.mubr.bf16.gmra.mxu0 %v4175
        %v4378 = vpop.f32.mrf.mxu0
        %v4379 = vadd.f32 %v4207, %v4378
        %v4380 = vpop.f32.mrf.mxu0
        %v4381 = vadd.f32 %v4211, %v4380
        %v4382 = vpop.f32.mrf.mxu0
        %v4383 = vadd.f32 %v4207, %v4382
        %v4384 = vpop.f32.mrf.mxu0
        %v4385 = vadd.f32 %v4211, %v4384
        %4386 = vmatprep.mubr.bf16.mxu0 0
        %4387 = vmatmul.mubr.bf16.gmra.mxu0 %v4176
        %v4388 = vpop.f32.mrf.mxu0
        %v4389 = vadd.f32 %v4207, %v4388
        %v4390 = vpop.f32.mrf.mxu0
        %v4391 = vadd.f32 %v4211, %v4390
        %v4392 = vpop.f32.mrf.mxu0
        %v4393 = vadd.f32 %v4207, %v4392
        %v4394 = vpop.f32.mrf.mxu0
        %v4395 = vadd.f32 %v4211, %v4394
        %4396 = vmatprep.mubr.bf16.mxu0 0
        %4397 = vmatmul.mubr.bf16.gmra.mxu0 %v4177
        %v4398 = vpop.f32.mrf.mxu0
        %v4399 = vadd.f32 %v4207, %v4398
        %v4400 = vpop.f32.mrf.mxu0
        %v4401 = vadd.f32 %v4211, %v4400
        %v4402 = vpop.f32.mrf.mxu0
        %v4403 = vadd.f32 %v4207, %v4402
        %v4404 = vpop.f32.mrf.mxu0
        %v4405 = vadd.f32 %v4211, %v4404
        %4406 = vmatprep.mubr.bf16.mxu0 0
        %4407 = vmatmul.mubr.bf16.gmra.mxu0 %v4178
        %v4408 = vpop.f32.mrf.mxu0
        %v4409 = vadd.f32 %v4207, %v4408
        %v4410 = vpop.f32.mrf.mxu0
        %v4411 = vadd.f32 %v4211, %v4410
        %v4412 = vpop.f32.mrf.mxu0
        %v4413 = vadd.f32 %v4207, %v4412
        %v4414 = vpop.f32.mrf.mxu0
        %v4415 = vadd.f32 %v4211, %v4414
        %4416 = vmatprep.mubr.bf16.mxu0 0
        %4417 = vmatmul.mubr.bf16.gmra.mxu0 %v4179
        %v4418 = vpop.f32.mrf.mxu0
        %v4419 = vadd.f32 %v4207, %v4418
        %v4420 = vpop.f32.mrf.mxu0
        %v4421 = vadd.f32 %v4211, %v4420
        %v4422 = vpop.f32.mrf.mxu0
        %v4423 = vadd.f32 %v4207, %v4422
        %v4424 = vpop.f32.mrf.mxu0
        %v4425 = vadd.f32 %v4211, %v4424
        %4426 = vmatprep.mubr.bf16.mxu0 0
        %4427 = vmatmul.mubr.bf16.gmra.mxu0 %v4180
        %v4428 = vpop.f32.mrf.mxu0
        %v4429 = vadd.f32 %v4207, %v4428
        %v4430 = vpop.f32.mrf.mxu0
        %v4431 = vadd.f32 %v4211, %v4430
        %v4432 = vpop.f32.mrf.mxu0
        %v4433 = vadd.f32 %v4207, %v4432
        %v4434 = vpop.f32.mrf.mxu0
        %v4435 = vadd.f32 %v4211, %v4434
        %4436 = vmatprep.mubr.bf16.mxu0 0
        %4437 = vmatmul.mubr.bf16.gmra.mxu0 %v4181
        %v4438 = vpop.f32.mrf.mxu0
        %v4439 = vadd.f32 %v4207, %v4438
        %v4440 = vpop.f32.mrf.mxu0
        %v4441 = vadd.f32 %v4211, %v4440
        %v4442 = vpop.f32.mrf.mxu0
        %v4443 = vadd.f32 %v4207, %v4442
        %v4444 = vpop.f32.mrf.mxu0
        %v4445 = vadd.f32 %v4211, %v4444
        %4446 = vmatprep.mubr.bf16.mxu0 0
        %4447 = vmatmul.mubr.bf16.gmra.mxu0 %v4182
        %v4448 = vpop.f32.mrf.mxu0
        %v4449 = vadd.f32 %v4207, %v4448
        %v4450 = vpop.f32.mrf.mxu0
        %v4451 = vadd.f32 %v4211, %v4450
        %v4452 = vpop.f32.mrf.mxu0
        %v4453 = vadd.f32 %v4207, %v4452
        %v4454 = vpop.f32.mrf.mxu0
        %v4455 = vadd.f32 %v4211, %v4454
        %4456 = vmatprep.mubr.bf16.mxu0 0
        %4457 = vmatmul.mubr.bf16.gmra.mxu0 %v4183
        %v4458 = vpop.f32.mrf.mxu0
        %v4459 = vadd.f32 %v4207, %v4458
        %v4460 = vpop.f32.mrf.mxu0
        %v4461 = vadd.f32 %v4211, %v4460
        %v4462 = vpop.f32.mrf.mxu0
        %v4463 = vadd.f32 %v4207, %v4462
        %v4464 = vpop.f32.mrf.mxu0
        %v4465 = vadd.f32 %v4211, %v4464
        %4466 = vmatprep.mubr.bf16.mxu0 0
        %4467 = vmatmul.mubr.bf16.gmra.mxu0 %v4184
        %v4468 = vpop.f32.mrf.mxu0
        %v4469 = vadd.f32 %v4207, %v4468
        %v4470 = vpop.f32.mrf.mxu0
        %v4471 = vadd.f32 %v4211, %v4470
        %v4472 = vpop.f32.mrf.mxu0
        %v4473 = vadd.f32 %v4207, %v4472
        %v4474 = vpop.f32.mrf.mxu0
        %v4475 = vadd.f32 %v4211, %v4474
        %4476 = vmatprep.mubr.bf16.mxu0 0
        %4477 = vmatmul.mubr.bf16.gmra.mxu0 %v4185
        %v4478 = vpop.f32.mrf.mxu0
        %v4479 = vadd.f32 %v4207, %v4478
        %v4480 = vpop.f32.mrf.mxu0
        %v4481 = vadd.f32 %v4211, %v4480
        %v4482 = vpop.f32.mrf.mxu0
        %v4483 = vadd.f32 %v4207, %v4482
        %v4484 = vpop.f32.mrf.mxu0
        %v4485 = vadd.f32 %v4211, %v4484
        %4486 = vdwg.mxu0
        %v4487 = vmax.f32 %v4329, 0.0
        %v4488 = vmax.f32 %v4331, 0.0
        %v4489 = vmax.f32 %v4333, 0.0
        %v4490 = vmax.f32 %v4335, 0.0
        %v4491 = vmax.f32 %v4339, 0.0
        %v4492 = vmax.f32 %v4341, 0.0
        %v4493 = vmax.f32 %v4343, 0.0
        %v4494 = vmax.f32 %v4345, 0.0
        %v4495 = vmax.f32 %v4349, 0.0
        %v4496 = vmax.f32 %v4351, 0.0
        %v4497 = vmax.f32 %v4353, 0.0
        %v4498 = vmax.f32 %v4355, 0.0
        %v4499 = vmax.f32 %v4359, 0.0
        %v4500 = vmax.f32 %v4361, 0.0
        %v4501 = vmax.f32 %v4363, 0.0
        %v4502 = vmax.f32 %v4365, 0.0
        %v4503 = vmax.f32 %v4369, 0.0
        %v4504 = vmax.f32 %v4371, 0.0
        %v4505 = vmax.f32 %v4373, 0.0
        %v4506 = vmax.f32 %v4375, 0.0
        %v4507 = vmax.f32 %v4379, 0.0
        %v4508 = vmax.f32 %v4381, 0.0
        %v4509 = vmax.f32 %v4383, 0.0
        %v4510 = vmax.f32 %v4385, 0.0
        %v4511 = vmax.f32 %v4389, 0.0
        %v4512 = vmax.f32 %v4391, 0.0
        %v4513 = vmax.f32 %v4393, 0.0
        %v4514 = vmax.f32 %v4395, 0.0
        %v4515 = vmax.f32 %v4399, 0.0
        %v4516 = vmax.f32 %v4401, 0.0
        %v4517 = vmax.f32 %v4403, 0.0
        %v4518 = vmax.f32 %v4405, 0.0
        %v4519 = vmax.f32 %v4409, 0.0
        %v4520 = vmax.f32 %v4411, 0.0
        %v4521 = vmax.f32 %v4413, 0.0
        %v4522 = vmax.f32 %v4415, 0.0
        %v4523 = vmax.f32 %v4419, 0.0
        %v4524 = vmax.f32 %v4421, 0.0
        %v4525 = vmax.f32 %v4423, 0.0
        %v4526 = vmax.f32 %v4425, 0.0
        %v4527 = vmax.f32 %v4429, 0.0
        %v4528 = vmax.f32 %v4431, 0.0
        %v4529 = vmax.f32 %v4433, 0.0
        %v4530 = vmax.f32 %v4435, 0.0
        %v4531 = vmax.f32 %v4439, 0.0
        %v4532 = vmax.f32 %v4441, 0.0
        %v4533 = vmax.f32 %v4443, 0.0
        %v4534 = vmax.f32 %v4445, 0.0
        %v4535 = vmax.f32 %v4449, 0.0
        %v4536 = vmax.f32 %v4451, 0.0
        %v4537 = vmax.f32 %v4453, 0.0
        %v4538 = vmax.f32 %v4455, 0.0
        %v4539 = vmax.f32 %v4459, 0.0
        %v4540 = vmax.f32 %v4461, 0.0
        %v4541 = vmax.f32 %v4463, 0.0
        %v4542 = vmax.f32 %v4465, 0.0
        %v4543 = vmax.f32 %v4469, 0.0
        %v4544 = vmax.f32 %v4471, 0.0
        %v4545 = vmax.f32 %v4473, 0.0
        %v4546 = vmax.f32 %v4475, 0.0
        %v4547 = vmax.f32 %v4479, 0.0
        %v4548 = vmax.f32 %v4481, 0.0
        %v4549 = vmax.f32 %v4483, 0.0
        %v4550 = vmax.f32 %v4485, 0.0
        %v4551 = vpack.c.bf16 %v4489, %v4487
        %v4552 = vpack.c.bf16 %v4490, %v4488
        %v4553 = vpack.c.bf16 %v4493, %v4491
        %v4554 = vpack.c.bf16 %v4494, %v4492
        %v4555 = vpack.c.bf16 %v4497, %v4495
        %v4556 = vpack.c.bf16 %v4498, %v4496
        %v4557 = vpack.c.bf16 %v4501, %v4499
        %v4558 = vpack.c.bf16 %v4502, %v4500
        %v4559 = vpack.c.bf16 %v4505, %v4503
        %v4560 = vpack.c.bf16 %v4506, %v4504
        %v4561 = vpack.c.bf16 %v4509, %v4507
        %v4562 = vpack.c.bf16 %v4510, %v4508
        %v4563 = vpack.c.bf16 %v4513, %v4511
        %v4564 = vpack.c.bf16 %v4514, %v4512
        %v4565 = vpack.c.bf16 %v4517, %v4515
        %v4566 = vpack.c.bf16 %v4518, %v4516
        %v4567 = vpack.c.bf16 %v4521, %v4519
        %v4568 = vpack.c.bf16 %v4522, %v4520
        %v4569 = vpack.c.bf16 %v4525, %v4523
        %v4570 = vpack.c.bf16 %v4526, %v4524
        %v4571 = vpack.c.bf16 %v4529, %v4527
        %v4572 = vpack.c.bf16 %v4530, %v4528
        %v4573 = vpack.c.bf16 %v4533, %v4531
        %v4574 = vpack.c.bf16 %v4534, %v4532
        %v4575 = vpack.c.bf16 %v4537, %v4535
        %v4576 = vpack.c.bf16 %v4538, %v4536
        %v4577 = vpack.c.bf16 %v4541, %v4539
        %v4578 = vpack.c.bf16 %v4542, %v4540
        %v4579 = vpack.c.bf16 %v4545, %v4543
        %v4580 = vpack.c.bf16 %v4546, %v4544
        %v4581 = vpack.c.bf16 %v4549, %v4547
        %v4582 = vpack.c.bf16 %v4550, %v4548
        %v4583 = vld [vmem:[#allocation11] sm:$0xf]
        %v4584 = vld [vmem:[#allocation11 + $0x4] sm:$0xf]
        %v4585 = vld [vmem:[#allocation11 + $0x8] sm:$0xf]
        %v4586 = vld [vmem:[#allocation11 + $0xc] sm:$0xf]
        %v4587 = vld [vmem:[#allocation11 + $0x10] sm:$0xf]
        %v4588 = vld [vmem:[#allocation11 + $0x14] sm:$0xf]
        %v4589 = vld [vmem:[#allocation11 + $0x18] sm:$0xf]
        %v4590 = vld [vmem:[#allocation11 + $0x1c] sm:$0xf]
        %v4591 = vld [vmem:[#allocation11 + $0x20] sm:$0xf]
        %v4592 = vld [vmem:[#allocation11 + $0x24] sm:$0xf]
        %v4593 = vld [vmem:[#allocation11 + $0x28] sm:$0xf]
        %v4594 = vld [vmem:[#allocation11 + $0x2c] sm:$0xf]
        %v4595 = vld [vmem:[#allocation11 + $0x30] sm:$0xf]
        %v4596 = vld [vmem:[#allocation11 + $0x34] sm:$0xf]
        %v4597 = vld [vmem:[#allocation11 + $0x38] sm:$0xf]
        %v4598 = vld [vmem:[#allocation11 + $0x3c] sm:$0xf]
        %v4599 = vld [vmem:[#allocation11 + $0x40] sm:$0xf]
        %v4600 = vld [vmem:[#allocation11 + $0x44] sm:$0xf]
        %v4601 = vld [vmem:[#allocation11 + $0x48] sm:$0xf]
        %v4602 = vld [vmem:[#allocation11 + $0x4c] sm:$0xf]
        %v4603 = vld [vmem:[#allocation11 + $0x50] sm:$0xf]
        %v4604 = vld [vmem:[#allocation11 + $0x54] sm:$0xf]
        %v4605 = vld [vmem:[#allocation11 + $0x58] sm:$0xf]
        %v4606 = vld [vmem:[#allocation11 + $0x5c] sm:$0xf]
        %v4607 = vld [vmem:[#allocation11 + $0x60] sm:$0xf]
        %v4608 = vld [vmem:[#allocation11 + $0x64] sm:$0xf]
        %v4609 = vld [vmem:[#allocation11 + $0x68] sm:$0xf]
        %v4610 = vld [vmem:[#allocation11 + $0x6c] sm:$0xf]
        %v4611 = vld [vmem:[#allocation11 + $0x70] sm:$0xf]
        %v4612 = vld [vmem:[#allocation11 + $0x74] sm:$0xf]
        %v4613 = vld [vmem:[#allocation11 + $0x78] sm:$0xf]
        %v4614 = vld [vmem:[#allocation11 + $0x7c] sm:$0xf]
        %v4615 = vld [vmem:[%s12] sm:$0x1]
        %v4617 = vlaneseq
        %v4618 = vshrl.u32 %v4617, 7
        %v4619 = vsub.s32 0, %v4618
        %v4620 = vrot.slane %v4615, %v4619
        %v4654 = vunpack.c.l.b16 %v4583
        %v4655 = vunpack.c.l.b16 %v4584
        %v4656 = vunpack.c.l.b16 %v4585
        %v4657 = vunpack.c.l.b16 %v4586
        %v4658 = vunpack.c.l.b16 %v4587
        %v4659 = vunpack.c.l.b16 %v4588
        %v4660 = vunpack.c.l.b16 %v4589
        %v4661 = vunpack.c.l.b16 %v4590
        %v4662 = vunpack.c.l.b16 %v4591
        %v4663 = vunpack.c.l.b16 %v4592
        %v4664 = vunpack.c.l.b16 %v4593
        %v4665 = vunpack.c.l.b16 %v4594
        %v4666 = vunpack.c.l.b16 %v4595
        %v4667 = vunpack.c.l.b16 %v4596
        %v4668 = vunpack.c.l.b16 %v4597
        %v4669 = vunpack.c.l.b16 %v4598
        %v4670 = vunpack.c.l.b16 %v4599
        %v4671 = vunpack.c.l.b16 %v4600
        %v4672 = vunpack.c.l.b16 %v4601
        %v4673 = vunpack.c.l.b16 %v4602
        %v4674 = vunpack.c.l.b16 %v4603
        %v4675 = vunpack.c.l.b16 %v4604
        %v4676 = vunpack.c.l.b16 %v4605
        %v4677 = vunpack.c.l.b16 %v4606
        %v4678 = vunpack.c.l.b16 %v4607
        %v4679 = vunpack.c.l.b16 %v4608
        %v4680 = vunpack.c.l.b16 %v4609
        %v4681 = vunpack.c.l.b16 %v4610
        %v4682 = vunpack.c.l.b16 %v4611
        %v4683 = vunpack.c.l.b16 %v4612
        %v4684 = vunpack.c.l.b16 %v4613
        %v4685 = vunpack.c.l.b16 %v4614
        %v4686 = vpack.c.b16 %v4655, %v4654
        %v4687 = vpack.c.b16 %v4657, %v4656
        %v4688 = vpack.c.b16 %v4659, %v4658
        %v4689 = vpack.c.b16 %v4661, %v4660
        %v4690 = vpack.c.b16 %v4663, %v4662
        %v4691 = vpack.c.b16 %v4665, %v4664
        %v4692 = vpack.c.b16 %v4667, %v4666
        %v4693 = vpack.c.b16 %v4669, %v4668
        %v4694 = vpack.c.b16 %v4671, %v4670
        %v4695 = vpack.c.b16 %v4673, %v4672
        %v4696 = vpack.c.b16 %v4675, %v4674
        %v4697 = vpack.c.b16 %v4677, %v4676
        %v4698 = vpack.c.b16 %v4679, %v4678
        %v4699 = vpack.c.b16 %v4681, %v4680
        %v4700 = vpack.c.b16 %v4683, %v4682
        %v4701 = vpack.c.b16 %v4685, %v4684
        %4718 = vmatprep.subr.bf16.mxu0 0
        %4719 = vmatpush1.bf16.msra.mxu0 %v4693
        %4720 = vmatprep.subr.bf16.mxu0 0
        %4721 = vmatpush1.bf16.msra.mxu0 %v4692
        %4722 = vmatprep.subr.bf16.mxu0 0
        %4723 = vmatpush1.bf16.msra.mxu0 %v4691
        %4724 = vmatprep.subr.bf16.mxu0 0
        %4725 = vmatpush1.bf16.msra.mxu0 %v4690
        %4726 = vmatprep.subr.bf16.mxu0 0
        %4727 = vmatpush1.bf16.msra.mxu0 %v4689
        %4728 = vmatprep.subr.bf16.mxu0 0
        %4729 = vmatpush1.bf16.msra.mxu0 %v4688
        %4730 = vmatprep.subr.bf16.mxu0 0
        %4731 = vmatpush1.bf16.msra.mxu0 %v4687
        %4732 = vmatprep.subr.bf16.mxu0 0
        %4733 = vmatpush1.bf16.msra.mxu0 %v4686
        %4734 = vmatprep.subr.bf16.mxu0 0
        %4735 = vmatpush2.bf16.msra.mxu0 %v4701
        %4736 = vmatprep.subr.bf16.mxu0 0
        %4737 = vmatpush2.bf16.msra.mxu0 %v4700
        %4738 = vmatprep.subr.bf16.mxu0 0
        %4739 = vmatpush2.bf16.msra.mxu0 %v4699
        %4740 = vmatprep.subr.bf16.mxu0 0
        %4741 = vmatpush2.bf16.msra.mxu0 %v4698
        %4742 = vmatprep.subr.bf16.mxu0 0
        %4743 = vmatpush2.bf16.msra.mxu0 %v4697
        %4744 = vmatprep.subr.bf16.mxu0 0
        %4745 = vmatpush2.bf16.msra.mxu0 %v4696
        %4746 = vmatprep.subr.bf16.mxu0 0
        %4747 = vmatpush2.bf16.msra.mxu0 %v4695
        %4748 = vmatprep.subr.bf16.mxu0 0
        %4749 = vmatpush2.bf16.msra.mxu0 %v4694
        %4750 = vmatprep.mubr.bf16.mxu0 %v4552
        %4751 = vmatmul.mubr.bf16.gmra.mxu0 %v4551
        %v4752 = vpop.f32.mrf.mxu0
        %v4753 = vadd.f32 %v4620, %v4752
        %v4754 = vpop.f32.mrf.mxu0
        %v4755 = vpop.f32.mrf.mxu0
        %v4756 = vadd.f32 %v4620, %v4755
        %v4757 = vpop.f32.mrf.mxu0
        %4758 = vmatprep.mubr.bf16.mxu0 %v4554
        %4759 = vmatmul.mubr.bf16.gmra.mxu0 %v4553
        %v4760 = vpop.f32.mrf.mxu0
        %v4761 = vadd.f32 %v4620, %v4760
        %v4762 = vpop.f32.mrf.mxu0
        %v4763 = vpop.f32.mrf.mxu0
        %v4764 = vadd.f32 %v4620, %v4763
        %v4765 = vpop.f32.mrf.mxu0
        %4766 = vmatprep.mubr.bf16.mxu0 %v4556
        %4767 = vmatmul.mubr.bf16.gmra.mxu0 %v4555
        %v4768 = vpop.f32.mrf.mxu0
        %v4769 = vadd.f32 %v4620, %v4768
        %v4770 = vpop.f32.mrf.mxu0
        %v4771 = vpop.f32.mrf.mxu0
        %v4772 = vadd.f32 %v4620, %v4771
        %v4773 = vpop.f32.mrf.mxu0
        %4774 = vmatprep.mubr.bf16.mxu0 %v4558
        %4775 = vmatmul.mubr.bf16.gmra.mxu0 %v4557
        %v4776 = vpop.f32.mrf.mxu0
        %v4777 = vadd.f32 %v4620, %v4776
        %v4778 = vpop.f32.mrf.mxu0
        %v4779 = vpop.f32.mrf.mxu0
        %v4780 = vadd.f32 %v4620, %v4779
        %v4781 = vpop.f32.mrf.mxu0
        %4782 = vmatprep.mubr.bf16.mxu0 %v4560
        %4783 = vmatmul.mubr.bf16.gmra.mxu0 %v4559
        %v4784 = vpop.f32.mrf.mxu0
        %v4785 = vadd.f32 %v4620, %v4784
        %v4786 = vpop.f32.mrf.mxu0
        %v4787 = vpop.f32.mrf.mxu0
        %v4788 = vadd.f32 %v4620, %v4787
        %v4789 = vpop.f32.mrf.mxu0
        %4790 = vmatprep.mubr.bf16.mxu0 %v4562
        %4791 = vmatmul.mubr.bf16.gmra.mxu0 %v4561
        %v4792 = vpop.f32.mrf.mxu0
        %v4793 = vadd.f32 %v4620, %v4792
        %v4794 = vpop.f32.mrf.mxu0
        %v4795 = vpop.f32.mrf.mxu0
        %v4796 = vadd.f32 %v4620, %v4795
        %v4797 = vpop.f32.mrf.mxu0
        %4798 = vmatprep.mubr.bf16.mxu0 %v4564
        %4799 = vmatmul.mubr.bf16.gmra.mxu0 %v4563
        %v4800 = vpop.f32.mrf.mxu0
        %v4801 = vadd.f32 %v4620, %v4800
        %v4802 = vpop.f32.mrf.mxu0
        %v4803 = vpop.f32.mrf.mxu0
        %v4804 = vadd.f32 %v4620, %v4803
        %v4805 = vpop.f32.mrf.mxu0
        %4806 = vmatprep.mubr.bf16.mxu0 %v4566
        %4807 = vmatmul.mubr.bf16.gmra.mxu0 %v4565
        %v4808 = vpop.f32.mrf.mxu0
        %v4809 = vadd.f32 %v4620, %v4808
        %v4810 = vpop.f32.mrf.mxu0
        %v4811 = vpop.f32.mrf.mxu0
        %v4812 = vadd.f32 %v4620, %v4811
        %v4813 = vpop.f32.mrf.mxu0
        %4814 = vmatprep.mubr.bf16.mxu0 %v4568
        %4815 = vmatmul.mubr.bf16.gmra.mxu0 %v4567
        %v4816 = vpop.f32.mrf.mxu0
        %v4817 = vadd.f32 %v4620, %v4816
        %v4818 = vpop.f32.mrf.mxu0
        %v4819 = vpop.f32.mrf.mxu0
        %v4820 = vadd.f32 %v4620, %v4819
        %v4821 = vpop.f32.mrf.mxu0
        %4822 = vmatprep.mubr.bf16.mxu0 %v4570
        %4823 = vmatmul.mubr.bf16.gmra.mxu0 %v4569
        %v4824 = vpop.f32.mrf.mxu0
        %v4825 = vadd.f32 %v4620, %v4824
        %v4826 = vpop.f32.mrf.mxu0
        %v4827 = vpop.f32.mrf.mxu0
        %v4828 = vadd.f32 %v4620, %v4827
        %v4829 = vpop.f32.mrf.mxu0
        %4830 = vmatprep.mubr.bf16.mxu0 %v4572
        %4831 = vmatmul.mubr.bf16.gmra.mxu0 %v4571
        %v4832 = vpop.f32.mrf.mxu0
        %v4833 = vadd.f32 %v4620, %v4832
        %v4834 = vpop.f32.mrf.mxu0
        %v4835 = vpop.f32.mrf.mxu0
        %v4836 = vadd.f32 %v4620, %v4835
        %v4837 = vpop.f32.mrf.mxu0
        %4838 = vmatprep.mubr.bf16.mxu0 %v4574
        %4839 = vmatmul.mubr.bf16.gmra.mxu0 %v4573
        %v4840 = vpop.f32.mrf.mxu0
        %v4841 = vadd.f32 %v4620, %v4840
        %v4842 = vpop.f32.mrf.mxu0
        %v4843 = vpop.f32.mrf.mxu0
        %v4844 = vadd.f32 %v4620, %v4843
        %v4845 = vpop.f32.mrf.mxu0
        %4846 = vmatprep.mubr.bf16.mxu0 %v4576
        %4847 = vmatmul.mubr.bf16.gmra.mxu0 %v4575
        %v4848 = vpop.f32.mrf.mxu0
        %v4849 = vadd.f32 %v4620, %v4848
        %v4850 = vpop.f32.mrf.mxu0
        %v4851 = vpop.f32.mrf.mxu0
        %v4852 = vadd.f32 %v4620, %v4851
        %v4853 = vpop.f32.mrf.mxu0
        %4854 = vmatprep.mubr.bf16.mxu0 %v4578
        %4855 = vmatmul.mubr.bf16.gmra.mxu0 %v4577
        %v4856 = vpop.f32.mrf.mxu0
        %v4857 = vadd.f32 %v4620, %v4856
        %v4858 = vpop.f32.mrf.mxu0
        %v4859 = vpop.f32.mrf.mxu0
        %v4860 = vadd.f32 %v4620, %v4859
        %v4861 = vpop.f32.mrf.mxu0
        %4862 = vmatprep.mubr.bf16.mxu0 %v4580
        %4863 = vmatmul.mubr.bf16.gmra.mxu0 %v4579
        %v4864 = vpop.f32.mrf.mxu0
        %v4865 = vadd.f32 %v4620, %v4864
        %v4866 = vpop.f32.mrf.mxu0
        %v4867 = vpop.f32.mrf.mxu0
        %v4868 = vadd.f32 %v4620, %v4867
        %v4869 = vpop.f32.mrf.mxu0
        %4870 = vmatprep.mubr.bf16.mxu0 %v4582
        %4871 = vmatmul.mubr.bf16.gmra.mxu0 %v4581
        %v4872 = vpop.f32.mrf.mxu0
        %v4873 = vadd.f32 %v4620, %v4872
        %v4874 = vpop.f32.mrf.mxu0
        %v4875 = vpop.f32.mrf.mxu0
        %v4876 = vadd.f32 %v4620, %v4875
        %v4877 = vpop.f32.mrf.mxu0
        %4878 = vdwg.mxu0
        %v4879 = vld [vmem:[%s13] sm:$0x1]
        %v4880 = vld [vmem:[%s14] sm:$0x1]
        %4881 = vadd.xlane.f32.xlu0 %v4753
        %v4882 = vpop.xlane.xlu0 %4881
        %4883 = vadd.xlane.f32.xlu0 %v4756
        %v4884 = vpop.xlane.xlu0 %4883
        %4885 = vadd.xlane.f32.xlu0 %v4761
        %v4886 = vpop.xlane.xlu0 %4885
        %4887 = vadd.xlane.f32.xlu0 %v4764
        %v4888 = vpop.xlane.xlu0 %4887
        %4889 = vadd.xlane.f32.xlu0 %v4769
        %v4890 = vpop.xlane.xlu0 %4889
        %4891 = vadd.xlane.f32.xlu0 %v4772
        %v4892 = vpop.xlane.xlu0 %4891
        %4893 = vadd.xlane.f32.xlu0 %v4777
        %v4894 = vpop.xlane.xlu0 %4893
        %4895 = vadd.xlane.f32.xlu0 %v4780
        %v4896 = vpop.xlane.xlu0 %4895
        %4897 = vadd.xlane.f32.xlu0 %v4785
        %v4898 = vpop.xlane.xlu0 %4897
        %4899 = vadd.xlane.f32.xlu0 %v4788
        %v4900 = vpop.xlane.xlu0 %4899
        %4901 = vadd.xlane.f32.xlu0 %v4793
        %v4902 = vpop.xlane.xlu0 %4901
        %4903 = vadd.xlane.f32.xlu0 %v4796
        %v4904 = vpop.xlane.xlu0 %4903
        %4905 = vadd.xlane.f32.xlu0 %v4801
        %v4906 = vpop.xlane.xlu0 %4905
        %4907 = vadd.xlane.f32.xlu0 %v4804
        %v4908 = vpop.xlane.xlu0 %4907
        %4909 = vadd.xlane.f32.xlu0 %v4809
        %v4910 = vpop.xlane.xlu0 %4909
        %4911 = vadd.xlane.f32.xlu0 %v4812
        %v4912 = vpop.xlane.xlu0 %4911
        %4913 = vadd.xlane.f32.xlu0 %v4817
        %v4914 = vpop.xlane.xlu0 %4913
        %4915 = vadd.xlane.f32.xlu0 %v4820
        %v4916 = vpop.xlane.xlu0 %4915
        %4917 = vadd.xlane.f32.xlu0 %v4825
        %v4918 = vpop.xlane.xlu0 %4917
        %4919 = vadd.xlane.f32.xlu0 %v4828
        %v4920 = vpop.xlane.xlu0 %4919
        %4921 = vadd.xlane.f32.xlu0 %v4833
        %v4922 = vpop.xlane.xlu0 %4921
        %4923 = vadd.xlane.f32.xlu0 %v4836
        %v4924 = vpop.xlane.xlu0 %4923
        %4925 = vadd.xlane.f32.xlu0 %v4841
        %v4926 = vpop.xlane.xlu0 %4925
        %4927 = vadd.xlane.f32.xlu0 %v4844
        %v4928 = vpop.xlane.xlu0 %4927
        %4929 = vadd.xlane.f32.xlu0 %v4849
        %v4930 = vpop.xlane.xlu0 %4929
        %4931 = vadd.xlane.f32.xlu0 %v4852
        %v4932 = vpop.xlane.xlu0 %4931
        %4933 = vadd.xlane.f32.xlu0 %v4857
        %v4934 = vpop.xlane.xlu0 %4933
        %4935 = vadd.xlane.f32.xlu0 %v4860
        %v4936 = vpop.xlane.xlu0 %4935
        %4937 = vadd.xlane.f32.xlu0 %v4865
        %v4938 = vpop.xlane.xlu0 %4937
        %4939 = vadd.xlane.f32.xlu0 %v4868
        %v4940 = vpop.xlane.xlu0 %4939
        %4941 = vadd.xlane.f32.xlu0 %v4873
        %v4942 = vpop.xlane.xlu0 %4941
        %4943 = vadd.xlane.f32.xlu0 %v4876
        %v4944 = vpop.xlane.xlu0 %4943
        %v4945 = vmul.f32 %v4882, %v3773
        %v4946 = vmul.f32 %v4884, %v3773
        %v4947 = vmul.f32 %v4886, %v3773
        %v4948 = vmul.f32 %v4888, %v3773
        %v4949 = vmul.f32 %v4890, %v3773
        %v4950 = vmul.f32 %v4892, %v3773
        %v4951 = vmul.f32 %v4894, %v3773
        %v4952 = vmul.f32 %v4896, %v3773
        %v4953 = vmul.f32 %v4898, %v3773
        %v4954 = vmul.f32 %v4900, %v3773
        %v4955 = vmul.f32 %v4902, %v3773
        %v4956 = vmul.f32 %v4904, %v3773
        %v4957 = vmul.f32 %v4906, %v3773
        %v4958 = vmul.f32 %v4908, %v3773
        %v4959 = vmul.f32 %v4910, %v3773
        %v4960 = vmul.f32 %v4912, %v3773
        %v4961 = vmul.f32 %v4914, %v3773
        %v4962 = vmul.f32 %v4916, %v3773
        %v4963 = vmul.f32 %v4918, %v3773
        %v4964 = vmul.f32 %v4920, %v3773
        %v4965 = vmul.f32 %v4922, %v3773
        %v4966 = vmul.f32 %v4924, %v3773
        %v4967 = vmul.f32 %v4926, %v3773
        %v4968 = vmul.f32 %v4928, %v3773
        %v4969 = vmul.f32 %v4930, %v3773
        %v4970 = vmul.f32 %v4932, %v3773
        %v4971 = vmul.f32 %v4934, %v3773
        %v4972 = vmul.f32 %v4936, %v3773
        %v4973 = vmul.f32 %v4938, %v3773
        %v4974 = vmul.f32 %v4940, %v3773
        %v4975 = vmul.f32 %v4942, %v3773
        %v4976 = vmul.f32 %v4944, %v3773
        %v4977 = vsub.f32 %v4753, %v4945
        %v4978 = vsub.f32 %v4756, %v4946
        %v4979 = vsub.f32 %v4761, %v4947
        %v4980 = vsub.f32 %v4764, %v4948
        %v4981 = vsub.f32 %v4769, %v4949
        %v4982 = vsub.f32 %v4772, %v4950
        %v4983 = vsub.f32 %v4777, %v4951
        %v4984 = vsub.f32 %v4780, %v4952
        %v4985 = vsub.f32 %v4785, %v4953
        %v4986 = vsub.f32 %v4788, %v4954
        %v4987 = vsub.f32 %v4793, %v4955
        %v4988 = vsub.f32 %v4796, %v4956
        %v4989 = vsub.f32 %v4801, %v4957
        %v4990 = vsub.f32 %v4804, %v4958
        %v4991 = vsub.f32 %v4809, %v4959
        %v4992 = vsub.f32 %v4812, %v4960
        %v4993 = vsub.f32 %v4817, %v4961
        %v4994 = vsub.f32 %v4820, %v4962
        %v4995 = vsub.f32 %v4825, %v4963
        %v4996 = vsub.f32 %v4828, %v4964
        %v4997 = vsub.f32 %v4833, %v4965
        %v4998 = vsub.f32 %v4836, %v4966
        %v4999 = vsub.f32 %v4841, %v4967
        %v5000 = vsub.f32 %v4844, %v4968
        %v5001 = vsub.f32 %v4849, %v4969
        %v5002 = vsub.f32 %v4852, %v4970
        %v5003 = vsub.f32 %v4857, %v4971
        %v5004 = vsub.f32 %v4860, %v4972
        %v5005 = vsub.f32 %v4865, %v4973
        %v5006 = vsub.f32 %v4868, %v4974
        %v5007 = vsub.f32 %v4873, %v4975
        %v5008 = vsub.f32 %v4876, %v4976
        %v5009 = vmul.f32 %v4977, %v4977
        %v5010 = vmul.f32 %v4978, %v4978
        %v5011 = vmul.f32 %v4979, %v4979
        %v5012 = vmul.f32 %v4980, %v4980
        %v5013 = vmul.f32 %v4981, %v4981
        %v5014 = vmul.f32 %v4982, %v4982
        %v5015 = vmul.f32 %v4983, %v4983
        %v5016 = vmul.f32 %v4984, %v4984
        %v5017 = vmul.f32 %v4985, %v4985
        %v5018 = vmul.f32 %v4986, %v4986
        %v5019 = vmul.f32 %v4987, %v4987
        %v5020 = vmul.f32 %v4988, %v4988
        %v5021 = vmul.f32 %v4989, %v4989
        %v5022 = vmul.f32 %v4990, %v4990
        %v5023 = vmul.f32 %v4991, %v4991
        %v5024 = vmul.f32 %v4992, %v4992
        %v5025 = vmul.f32 %v4993, %v4993
        %v5026 = vmul.f32 %v4994, %v4994
        %v5027 = vmul.f32 %v4995, %v4995
        %v5028 = vmul.f32 %v4996, %v4996
        %v5029 = vmul.f32 %v4997, %v4997
        %v5030 = vmul.f32 %v4998, %v4998
        %v5031 = vmul.f32 %v4999, %v4999
        %v5032 = vmul.f32 %v5000, %v5000
        %v5033 = vmul.f32 %v5001, %v5001
        %v5034 = vmul.f32 %v5002, %v5002
        %v5035 = vmul.f32 %v5003, %v5003
        %v5036 = vmul.f32 %v5004, %v5004
        %v5037 = vmul.f32 %v5005, %v5005
        %v5038 = vmul.f32 %v5006, %v5006
        %v5039 = vmul.f32 %v5007, %v5007
        %v5040 = vmul.f32 %v5008, %v5008
        %5041 = vadd.xlane.f32.xlu0 %v5009
        %v5042 = vpop.xlane.xlu0 %5041
        %5043 = vadd.xlane.f32.xlu0 %v5010
        %v5044 = vpop.xlane.xlu0 %5043
        %5045 = vadd.xlane.f32.xlu0 %v5011
        %v5046 = vpop.xlane.xlu0 %5045
        %5047 = vadd.xlane.f32.xlu0 %v5012
        %v5048 = vpop.xlane.xlu0 %5047
        %5049 = vadd.xlane.f32.xlu0 %v5013
        %v5050 = vpop.xlane.xlu0 %5049
        %5051 = vadd.xlane.f32.xlu0 %v5014
        %v5052 = vpop.xlane.xlu0 %5051
        %5053 = vadd.xlane.f32.xlu0 %v5015
        %v5054 = vpop.xlane.xlu0 %5053
        %5055 = vadd.xlane.f32.xlu0 %v5016
        %v5056 = vpop.xlane.xlu0 %5055
        %5057 = vadd.xlane.f32.xlu0 %v5017
        %v5058 = vpop.xlane.xlu0 %5057
        %5059 = vadd.xlane.f32.xlu0 %v5018
        %v5060 = vpop.xlane.xlu0 %5059
        %5061 = vadd.xlane.f32.xlu0 %v5019
        %v5062 = vpop.xlane.xlu0 %5061
        %5063 = vadd.xlane.f32.xlu0 %v5020
        %v5064 = vpop.xlane.xlu0 %5063
        %5065 = vadd.xlane.f32.xlu0 %v5021
        %v5066 = vpop.xlane.xlu0 %5065
        %5067 = vadd.xlane.f32.xlu0 %v5022
        %v5068 = vpop.xlane.xlu0 %5067
        %5069 = vadd.xlane.f32.xlu0 %v5023
        %v5070 = vpop.xlane.xlu0 %5069
        %5071 = vadd.xlane.f32.xlu0 %v5024
        %v5072 = vpop.xlane.xlu0 %5071
        %5073 = vadd.xlane.f32.xlu0 %v5025
        %v5074 = vpop.xlane.xlu0 %5073
        %5075 = vadd.xlane.f32.xlu0 %v5026
        %v5076 = vpop.xlane.xlu0 %5075
        %5077 = vadd.xlane.f32.xlu0 %v5027
        %v5078 = vpop.xlane.xlu0 %5077
        %5079 = vadd.xlane.f32.xlu0 %v5028
        %v5080 = vpop.xlane.xlu0 %5079
        %5081 = vadd.xlane.f32.xlu0 %v5029
        %v5082 = vpop.xlane.xlu0 %5081
        %5083 = vadd.xlane.f32.xlu0 %v5030
        %v5084 = vpop.xlane.xlu0 %5083
        %5085 = vadd.xlane.f32.xlu0 %v5031
        %v5086 = vpop.xlane.xlu0 %5085
        %5087 = vadd.xlane.f32.xlu0 %v5032
        %v5088 = vpop.xlane.xlu0 %5087
        %5089 = vadd.xlane.f32.xlu0 %v5033
        %v5090 = vpop.xlane.xlu0 %5089
        %5091 = vadd.xlane.f32.xlu0 %v5034
        %v5092 = vpop.xlane.xlu0 %5091
        %5093 = vadd.xlane.f32.xlu0 %v5035
        %v5094 = vpop.xlane.xlu0 %5093
        %5095 = vadd.xlane.f32.xlu0 %v5036
        %v5096 = vpop.xlane.xlu0 %5095
        %5097 = vadd.xlane.f32.xlu0 %v5037
        %v5098 = vpop.xlane.xlu0 %5097
        %5099 = vadd.xlane.f32.xlu0 %v5038
        %v5100 = vpop.xlane.xlu0 %5099
        %5101 = vadd.xlane.f32.xlu0 %v5039
        %v5102 = vpop.xlane.xlu0 %5101
        %5103 = vadd.xlane.f32.xlu0 %v5040
        %v5104 = vpop.xlane.xlu0 %5103
        %v5105 = vmul.f32 %v5042, %v3773
        %v5106 = vmul.f32 %v5044, %v3773
        %v5107 = vmul.f32 %v5046, %v3773
        %v5108 = vmul.f32 %v5048, %v3773
        %v5109 = vmul.f32 %v5050, %v3773
        %v5110 = vmul.f32 %v5052, %v3773
        %v5111 = vmul.f32 %v5054, %v3773
        %v5112 = vmul.f32 %v5056, %v3773
        %v5113 = vmul.f32 %v5058, %v3773
        %v5114 = vmul.f32 %v5060, %v3773
        %v5115 = vmul.f32 %v5062, %v3773
        %v5116 = vmul.f32 %v5064, %v3773
        %v5117 = vmul.f32 %v5066, %v3773
        %v5118 = vmul.f32 %v5068, %v3773
        %v5119 = vmul.f32 %v5070, %v3773
        %v5120 = vmul.f32 %v5072, %v3773
        %v5121 = vmul.f32 %v5074, %v3773
        %v5122 = vmul.f32 %v5076, %v3773
        %v5123 = vmul.f32 %v5078, %v3773
        %v5124 = vmul.f32 %v5080, %v3773
        %v5125 = vmul.f32 %v5082, %v3773
        %v5126 = vmul.f32 %v5084, %v3773
        %v5127 = vmul.f32 %v5086, %v3773
        %v5128 = vmul.f32 %v5088, %v3773
        %v5129 = vmul.f32 %v5090, %v3773
        %v5130 = vmul.f32 %v5092, %v3773
        %v5131 = vmul.f32 %v5094, %v3773
        %v5132 = vmul.f32 %v5096, %v3773
        %v5133 = vmul.f32 %v5098, %v3773
        %v5134 = vmul.f32 %v5100, %v3773
        %v5135 = vmul.f32 %v5102, %v3773
        %v5136 = vmul.f32 %v5104, %v3773
        %v5138 = vlaneseq
        %v5139 = vshrl.u32 %v5138, 7
        %v5140 = vsub.s32 0, %v5139
        %v5141 = vrot.slane %v4879, %v5140
        %v5143 = vmul.f32 %v5141, %v4977
        %v5144 = vmul.f32 %v5141, %v4978
        %v5145 = vmul.f32 %v5141, %v4979
        %v5146 = vmul.f32 %v5141, %v4980
        %v5147 = vmul.f32 %v5141, %v4981
        %v5148 = vmul.f32 %v5141, %v4982
        %v5149 = vmul.f32 %v5141, %v4983
        %v5150 = vmul.f32 %v5141, %v4984
        %v5151 = vmul.f32 %v5141, %v4985
        %v5152 = vmul.f32 %v5141, %v4986
        %v5153 = vmul.f32 %v5141, %v4987
        %v5154 = vmul.f32 %v5141, %v4988
        %v5155 = vmul.f32 %v5141, %v4989
        %v5156 = vmul.f32 %v5141, %v4990
        %v5157 = vmul.f32 %v5141, %v4991
        %v5158 = vmul.f32 %v5141, %v4992
        %v5159 = vmul.f32 %v5141, %v4993
        %v5160 = vmul.f32 %v5141, %v4994
        %v5161 = vmul.f32 %v5141, %v4995
        %v5162 = vmul.f32 %v5141, %v4996
        %v5163 = vmul.f32 %v5141, %v4997
        %v5164 = vmul.f32 %v5141, %v4998
        %v5165 = vmul.f32 %v5141, %v4999
        %v5166 = vmul.f32 %v5141, %v5000
        %v5167 = vmul.f32 %v5141, %v5001
        %v5168 = vmul.f32 %v5141, %v5002
        %v5169 = vmul.f32 %v5141, %v5003
        %v5170 = vmul.f32 %v5141, %v5004
        %v5171 = vmul.f32 %v5141, %v5005
        %v5172 = vmul.f32 %v5141, %v5006
        %v5173 = vmul.f32 %v5141, %v5007
        %v5174 = vmul.f32 %v5141, %v5008
        %v5175 = vadd.f32 %v5105, 1e-06
        %v5176 = vadd.f32 %v5106, 1e-06
        %v5177 = vadd.f32 %v5107, 1e-06
        %v5178 = vadd.f32 %v5108, 1e-06
        %v5179 = vadd.f32 %v5109, 1e-06
        %v5180 = vadd.f32 %v5110, 1e-06
        %v5181 = vadd.f32 %v5111, 1e-06
        %v5182 = vadd.f32 %v5112, 1e-06
        %v5183 = vadd.f32 %v5113, 1e-06
        %v5184 = vadd.f32 %v5114, 1e-06
        %v5185 = vadd.f32 %v5115, 1e-06
        %v5186 = vadd.f32 %v5116, 1e-06
        %v5187 = vadd.f32 %v5117, 1e-06
        %v5188 = vadd.f32 %v5118, 1e-06
        %v5189 = vadd.f32 %v5119, 1e-06
        %v5190 = vadd.f32 %v5120, 1e-06
        %v5191 = vadd.f32 %v5121, 1e-06
        %v5192 = vadd.f32 %v5122, 1e-06
        %v5193 = vadd.f32 %v5123, 1e-06
        %v5194 = vadd.f32 %v5124, 1e-06
        %v5195 = vadd.f32 %v5125, 1e-06
        %v5196 = vadd.f32 %v5126, 1e-06
        %v5197 = vadd.f32 %v5127, 1e-06
        %v5198 = vadd.f32 %v5128, 1e-06
        %v5199 = vadd.f32 %v5129, 1e-06
        %v5200 = vadd.f32 %v5130, 1e-06
        %v5201 = vadd.f32 %v5131, 1e-06
        %v5202 = vadd.f32 %v5132, 1e-06
        %v5203 = vadd.f32 %v5133, 1e-06
        %v5204 = vadd.f32 %v5134, 1e-06
        %v5205 = vadd.f32 %v5135, 1e-06
        %v5206 = vadd.f32 %v5136, 1e-06
        %v5207 = vrsqrt.pop %v5175
        %v5208 = vrsqrt.pop %v5176
        %v5209 = vrsqrt.pop %v5177
        %v5210 = vrsqrt.pop %v5178
        %v5211 = vrsqrt.pop %v5179
        %v5212 = vrsqrt.pop %v5180
        %v5213 = vrsqrt.pop %v5181
        %v5214 = vrsqrt.pop %v5182
        %v5215 = vrsqrt.pop %v5183
        %v5216 = vrsqrt.pop %v5184
        %v5217 = vrsqrt.pop %v5185
        %v5218 = vrsqrt.pop %v5186
        %v5219 = vrsqrt.pop %v5187
        %v5220 = vrsqrt.pop %v5188
        %v5221 = vrsqrt.pop %v5189
        %v5222 = vrsqrt.pop %v5190
        %v5223 = vrsqrt.pop %v5191
        %v5224 = vrsqrt.pop %v5192
        %v5225 = vrsqrt.pop %v5193
        %v5226 = vrsqrt.pop %v5194
        %v5227 = vrsqrt.pop %v5195
        %v5228 = vrsqrt.pop %v5196
        %v5229 = vrsqrt.pop %v5197
        %v5230 = vrsqrt.pop %v5198
        %v5231 = vrsqrt.pop %v5199
        %v5232 = vrsqrt.pop %v5200
        %v5233 = vrsqrt.pop %v5201
        %v5234 = vrsqrt.pop %v5202
        %v5235 = vrsqrt.pop %v5203
        %v5236 = vrsqrt.pop %v5204
        %v5237 = vrsqrt.pop %v5205
        %v5238 = vrsqrt.pop %v5206
        %v5239 = vmul.f32 %v5143, %v5207
        %v5240 = vmul.f32 %v5144, %v5208
        %v5241 = vmul.f32 %v5145, %v5209
        %v5242 = vmul.f32 %v5146, %v5210
        %v5243 = vmul.f32 %v5147, %v5211
        %v5244 = vmul.f32 %v5148, %v5212
        %v5245 = vmul.f32 %v5149, %v5213
        %v5246 = vmul.f32 %v5150, %v5214
        %v5247 = vmul.f32 %v5151, %v5215
        %v5248 = vmul.f32 %v5152, %v5216
        %v5249 = vmul.f32 %v5153, %v5217
        %v5250 = vmul.f32 %v5154, %v5218
        %v5251 = vmul.f32 %v5155, %v5219
        %v5252 = vmul.f32 %v5156, %v5220
        %v5253 = vmul.f32 %v5157, %v5221
        %v5254 = vmul.f32 %v5158, %v5222
        %v5255 = vmul.f32 %v5159, %v5223
        %v5256 = vmul.f32 %v5160, %v5224
        %v5257 = vmul.f32 %v5161, %v5225
        %v5258 = vmul.f32 %v5162, %v5226
        %v5259 = vmul.f32 %v5163, %v5227
        %v5260 = vmul.f32 %v5164, %v5228
        %v5261 = vmul.f32 %v5165, %v5229
        %v5262 = vmul.f32 %v5166, %v5230
        %v5263 = vmul.f32 %v5167, %v5231
        %v5264 = vmul.f32 %v5168, %v5232
        %v5265 = vmul.f32 %v5169, %v5233
        %v5266 = vmul.f32 %v5170, %v5234
        %v5267 = vmul.f32 %v5171, %v5235
        %v5268 = vmul.f32 %v5172, %v5236
        %v5269 = vmul.f32 %v5173, %v5237
        %v5270 = vmul.f32 %v5174, %v5238
        %v5272 = vlaneseq
        %v5273 = vshrl.u32 %v5272, 7
        %v5274 = vsub.s32 0, %v5273
        %v5275 = vrot.slane %v4880, %v5274
        %v5277 = vadd.f32 %v5239, %v5275
        %v5278 = vadd.f32 %v5240, %v5275
        %v5279 = vadd.f32 %v5241, %v5275
        %v5280 = vadd.f32 %v5242, %v5275
        %v5281 = vadd.f32 %v5243, %v5275
        %v5282 = vadd.f32 %v5244, %v5275
        %v5283 = vadd.f32 %v5245, %v5275
        %v5284 = vadd.f32 %v5246, %v5275
        %v5285 = vadd.f32 %v5247, %v5275
        %v5286 = vadd.f32 %v5248, %v5275
        %v5287 = vadd.f32 %v5249, %v5275
        %v5288 = vadd.f32 %v5250, %v5275
        %v5289 = vadd.f32 %v5251, %v5275
        %v5290 = vadd.f32 %v5252, %v5275
        %v5291 = vadd.f32 %v5253, %v5275
        %v5292 = vadd.f32 %v5254, %v5275
        %v5293 = vadd.f32 %v5255, %v5275
        %v5294 = vadd.f32 %v5256, %v5275
        %v5295 = vadd.f32 %v5257, %v5275
        %v5296 = vadd.f32 %v5258, %v5275
        %v5297 = vadd.f32 %v5259, %v5275
        %v5298 = vadd.f32 %v5260, %v5275
        %v5299 = vadd.f32 %v5261, %v5275
        %v5300 = vadd.f32 %v5262, %v5275
        %v5301 = vadd.f32 %v5263, %v5275
        %v5302 = vadd.f32 %v5264, %v5275
        %v5303 = vadd.f32 %v5265, %v5275
        %v5304 = vadd.f32 %v5266, %v5275
        %v5305 = vadd.f32 %v5267, %v5275
        %v5306 = vadd.f32 %v5268, %v5275
        %v5307 = vadd.f32 %v5269, %v5275
        %v5308 = vadd.f32 %v5270, %v5275
        %v5309 = vadd.f32 %v4138, %v5277
        %v5310 = vadd.f32 %v4139, %v5278
        %v5311 = vadd.f32 %v4140, %v5279
        %v5312 = vadd.f32 %v4141, %v5280
        %v5313 = vadd.f32 %v4142, %v5281
        %v5314 = vadd.f32 %v4143, %v5282
        %v5315 = vadd.f32 %v4144, %v5283
        %v5316 = vadd.f32 %v4145, %v5284
        %v5317 = vadd.f32 %v4146, %v5285
        %v5318 = vadd.f32 %v4147, %v5286
        %v5319 = vadd.f32 %v4148, %v5287
        %v5320 = vadd.f32 %v4149, %v5288
        %v5321 = vadd.f32 %v4150, %v5289
        %v5322 = vadd.f32 %v4151, %v5290
        %v5323 = vadd.f32 %v4152, %v5291
        %v5324 = vadd.f32 %v4153, %v5292
        %v5325 = vadd.f32 %v4154, %v5293
        %v5326 = vadd.f32 %v4155, %v5294
        %v5327 = vadd.f32 %v4156, %v5295
        %v5328 = vadd.f32 %v4157, %v5296
        %v5329 = vadd.f32 %v4158, %v5297
        %v5330 = vadd.f32 %v4159, %v5298
        %v5331 = vadd.f32 %v4160, %v5299
        %v5332 = vadd.f32 %v4161, %v5300
        %v5333 = vadd.f32 %v4162, %v5301
        %v5334 = vadd.f32 %v4163, %v5302
        %v5335 = vadd.f32 %v4164, %v5303
        %v5336 = vadd.f32 %v4165, %v5304
        %v5337 = vadd.f32 %v4166, %v5305
        %v5338 = vadd.f32 %v4167, %v5306
        %v5339 = vadd.f32 %v4168, %v5307
        %v5340 = vadd.f32 %v4169, %v5308
        %5341 = vst [vmem:[%s599] sm:$0xff] %v5309
        %5342 = vst [vmem:[%s599 + $0x8] sm:$0xff] %v5310
        %5343 = vst [vmem:[%s599 + $0x10] sm:$0xff] %v5311
        %5344 = vst [vmem:[%s599 + $0x18] sm:$0xff] %v5312
        %5345 = vst [vmem:[%s599 + $0x20] sm:$0xff] %v5313
        %5346 = vst [vmem:[%s599 + $0x28] sm:$0xff] %v5314
        %5347 = vst [vmem:[%s599 + $0x30] sm:$0xff] %v5315
        %5348 = vst [vmem:[%s599 + $0x38] sm:$0xff] %v5316
        %5349 = vst [vmem:[%s599 + $0x40] sm:$0xff] %v5317
        %5350 = vst [vmem:[%s599 + $0x48] sm:$0xff] %v5318
        %5351 = vst [vmem:[%s599 + $0x50] sm:$0xff] %v5319
        %5352 = vst [vmem:[%s599 + $0x58] sm:$0xff] %v5320
        %5353 = vst [vmem:[%s599 + $0x60] sm:$0xff] %v5321
        %5354 = vst [vmem:[%s599 + $0x68] sm:$0xff] %v5322
        %5355 = vst [vmem:[%s599 + $0x70] sm:$0xff] %v5323
        %5356 = vst [vmem:[%s599 + $0x78] sm:$0xff] %v5324
        %5357 = vst [vmem:[%s599 + $0x80] sm:$0xff] %v5325
        %5358 = vst [vmem:[%s599 + $0x88] sm:$0xff] %v5326
        %5359 = vst [vmem:[%s599 + $0x90] sm:$0xff] %v5327
        %5360 = vst [vmem:[%s599 + $0x98] sm:$0xff] %v5328
        %5361 = vst [vmem:[%s599 + $0xa0] sm:$0xff] %v5329
        %5362 = vst [vmem:[%s599 + $0xa8] sm:$0xff] %v5330
        %5363 = vst [vmem:[%s599 + $0xb0] sm:$0xff] %v5331
        %5364 = vst [vmem:[%s599 + $0xb8] sm:$0xff] %v5332
        %5365 = vst [vmem:[%s599 + $0xc0] sm:$0xff] %v5333
        %5366 = vst [vmem:[%s599 + $0xc8] sm:$0xff] %v5334
        %5367 = vst [vmem:[%s599 + $0xd0] sm:$0xff] %v5335
        %5368 = vst [vmem:[%s599 + $0xd8] sm:$0xff] %v5336
        %5369 = vst [vmem:[%s599 + $0xe0] sm:$0xff] %v5337
        %5370 = vst [vmem:[%s599 + $0xe8] sm:$0xff] %v5338
        %5371 = vst [vmem:[%s599 + $0xf0] sm:$0xff] %v5339
        %5372 = vst [vmem:[%s599 + $0xf8] sm:$0xff] %v5340
        %s5373 = sand.u32 %s377, 1
        %s5374 = scalar_lea.sflag [#allocation4], %s5373
        %s5375 = sand.u32 %s377, 1
        %s5376 = smul.addr %s5375, 256
        %s5377 = scalar_lea.vmem [#allocation13], %s5376
        // Predicated region
        $region105: #{tpu_custom_call.1} parent=79 // pred_check
          %p5378 = pneg %p387
        $region106: #{tpu_custom_call.1} parent=79 // pred_check_branch
          %5380 = sbr.rel (%p5378) target = $region108
        $region107: #{tpu_custom_call.1} parent=79 // pred_region
          %s5381 = smul.u32 32, %s40
          %s5383 = ssub.s32 4096, 4096
          %5384 = vsyncadd %s5374, %s5383
          %s5385 = smul.addr %s39, 32
          %s5386 = sadd.s32 %s5381, %s5385
          %s5387 = smul.addr %s5386, 128
          %s5388 = scalar_lea.hbm %s15, %s5387
          %s5389 = sshll.u32 %s5377, 4
          %s5390 = int_to_ptr.vmem [resolvable:$true] %s5389
          %5395 = dma.vmem_to_hbm [thread:$0]  %s5390, 4096, %s5388, %s5374, 128, 128, 8
        $region108: #{tpu_custom_call.1} parent=79 // pred_fallthru
          _
      $region80: #{tpu_custom_call.1} parent=5 // pred_fallthru
        _
      %p5396 = scmp.le.s32.totalorder 2, %s30
      // Predicated region
      $region109: #{tpu_custom_call.1} parent=5 // pred_check
        %p5397 = pneg %p5396
      $region110: #{tpu_custom_call.1} parent=5 // pred_check_branch
        %5399 = sbr.rel (%p5397) target = $region112
      $region111: #{tpu_custom_call.1} parent=5 // pred_region
        %s5400 = ssub.s32 %s30, 2
        // Predicated region
        $region113: #{tpu_custom_call.1} parent=111 // pred_check
          %p5401 = pneg %p393
        $region114: #{tpu_custom_call.1} parent=111 // pred_check_branch
          %5403 = sbr.rel (%p5401) target = $region116
        $region115: #{tpu_custom_call.1} parent=111 // pred_region
          %s5404 = sand.u32 %s378, 1
          %s5405 = scalar_lea.sflag [#allocation4], %s5404
          %s5406 = sand.u32 %s378, 1
          %s5407 = smul.addr %s5406, 256
          %s5408 = scalar_lea.vmem [#allocation13], %s5407
          %5409 = dma.done %s5405, 4096
        $region116: #{tpu_custom_call.1} parent=111 // pred_fallthru
          _
      $region112: #{tpu_custom_call.1} parent=5 // pred_fallthru
        _
    $region6: #{tpu_custom_call.1} parent=1 // loop_footer
      %s34 = sadd.s32 1, %s30
    $region7: #{tpu_custom_call.1} parent=1 // loop_footer_branch
      %29 = sbr.rel target = $region3
    $region8: #{tpu_custom_call.1} parent=1 // loop_exit
      _
    %5410 = vsyncpa [#allocation3], 1
    %s5411 = scalar_lea.sflag [#allocation3], 1
    %5412 = vsyncpa %s5411, 1
    %5413 = vsyncpa [#allocation6], 1
    %5414 = vsyncpa [#allocation9], 1
    %5415 = vsyncpa [#allocation12], 1
    %5416 = vsyncpa [#allocation4], 1
    %s5417 = scalar_lea.sflag [#allocation4], 1
    %5418 = vsyncpa %s5417, 1

</llo_original>
